<compile_context>
chip_gen: v7x
topology: tpu7x:2x2x1
jax: 0.10.0
libtpu: 0.0.40
codegen_flags: <defaults>
</compile_context>

<pallas_src>
import functools

import jax
import jax.numpy as jnp
from jax.experimental import pallas as pl
from jax.experimental.pallas import tpu as pltpu

BN_EPS = 1e-5
OUT_PAD = 8          # conv4 output channels (3) padded to 8 for sublane alignment


# --------------------------------------------------------------------------
# Fused kernel: conv1+bn1+relu -> conv2+bn2+relu -> conv3+bn3+relu -> conv4
# --------------------------------------------------------------------------
def _region_rec_kernel(x_ref, w1_ref, b1_ref, w2_ref, b2_ref,
                       w3_ref, b3_ref, w4_ref, o_ref):
    """One (batch, N-tile) block of the whole per-point MLP.

    x_ref : (Cin, TN)    f32    channels-major, lane-dense (batch dim squeezed)
    wK    : (CoutK, CinK) bf16  BN scale pre-folded into rows
    bK    : (CoutK, 1)   f32    folded BN shift
    o_ref : (8, TN)      f32    rows 0..2 are the real output channels
    """
    h = x_ref[...].astype(jnp.bfloat16)                               # cast on VPU
    h = jnp.dot(w1_ref[...], h, preferred_element_type=jnp.float32)   # (256, TN)
    h = jnp.maximum(h + b1_ref[...], 0.0).astype(jnp.bfloat16)        # dp1 = id (eval)
    h = jnp.dot(w2_ref[...], h, preferred_element_type=jnp.float32)   # (256, TN)
    h = jnp.maximum(h + b2_ref[...], 0.0).astype(jnp.bfloat16)        # dp2 = id (eval)
    h = jnp.dot(w3_ref[...], h, preferred_element_type=jnp.float32)   # (128, TN)
    h = jnp.maximum(h + b3_ref[...], 0.0).astype(jnp.bfloat16)
    y = jnp.dot(w4_ref[...], h, preferred_element_type=jnp.float32)   # (8, TN)
    o_ref[...] = y.astype(o_ref.dtype)


def _round_up(v, m):
    return (v + m - 1) // m * m


def region_reconstruction(x, params, *, tile_n=2048):
    """x: (B, Cin, N) float32 (PyTorch layout). Returns (B, N, 3) float32.

    tile_n must be a multiple of 256. On v7x, keep B * cdiv(N, tile_n) >= 2 so both
    TensorCores stay busy (trivially true for B >= 2).
    """
    B, Cin, N = x.shape
    assert tile_n % 256 == 0, "tile_n must be a multiple of 256"
    tn = min(tile_n, _round_up(N, 256))          # don't over-allocate tiny inputs
    grid = (B, pl.cdiv(N, tn))                   # partial last tile handled by Pallas

    w1, b1 = params["w1"], params["b1"]
    w2, b2 = params["w2"], params["b2"]
    w3, b3 = params["w3"], params["b3"]
    w4 = params["w4"]

    flops = 2 * B * N * (Cin * 256 + 256 * 256 + 256 * 128 + 128 * OUT_PAD)
    w_bytes = sum(int(p.size) * p.dtype.itemsize
                  for p in (w1, b1, w2, b2, w3, b3, w4))
    bytes_accessed = B * Cin * N * 4 + B * OUT_PAD * N * 4 + w_bytes

    const = lambda b, n: (0, 0)                  # weights/biases: resident, never re-DMA'd
    out = pl.pallas_call(
        _region_rec_kernel,
        out_shape=jax.ShapeDtypeStruct((B, OUT_PAD, N), jnp.float32),
        grid=grid,
        in_specs=[
            pl.BlockSpec((pl.Squeezed(), Cin, tn), lambda b, n: (b, 0, n)),
            pl.BlockSpec(w1.shape, const), pl.BlockSpec(b1.shape, const),
            pl.BlockSpec(w2.shape, const), pl.BlockSpec(b2.shape, const),
            pl.BlockSpec(w3.shape, const), pl.BlockSpec(b3.shape, const),
            pl.BlockSpec(w4.shape, const),
        ],
        out_specs=pl.BlockSpec((pl.Squeezed(), OUT_PAD, tn), lambda b, n: (b, 0, n)),
        compiler_params=pltpu.CompilerParams(
            dimension_semantics=("parallel", "parallel"),
            vmem_limit_bytes=32 * 1024 * 1024,
        ),
        cost_estimate=pl.CostEstimate(
            flops=flops, transcendentals=0, bytes_accessed=bytes_accessed),
    )(x, w1, b1, w2, b2, w3, b3, w4)

    out = out[:, :3, :]                          # drop the 5 channel-pad rows
    return jnp.transpose(out, (0, 2, 1))         # the module's .permute(0, 2, 1)


# --------------------------------------------------------------------------
# Deterministic synthetic parameters with inference-BN folding (plain JAX glue)
# --------------------------------------------------------------------------
def init_params(key, input_size):
    of1, of2, of3 = 256, 256, 128

    def conv_w(k, cin, cout):
        # PyTorch Conv1d weight (cout, cin, 1) -> stored as (cout, cin)
        return jax.random.normal(k, (cout, cin), jnp.float32) * (cin ** -0.5)

    def bn_stats(k, c):
        k1, k2, k3, k4 = jax.random.split(k, 4)
        gamma = 1.0 + 0.1 * jax.random.normal(k1, (c,), jnp.float32)
        beta = 0.05 * jax.random.normal(k2, (c,), jnp.float32)
        mean = 0.02 * jax.random.normal(k3, (c,), jnp.float32)
        var = 1.0 + 0.1 * jax.random.uniform(k4, (c,), jnp.float32)
        return gamma, beta, mean, var

    def fold(w, bn):
        gamma, beta, mean, var = bn
        scale = gamma * jax.lax.rsqrt(var + BN_EPS)
        w_f = (w * scale[:, None]).astype(jnp.bfloat16)                # scale -> W rows
        shift = ((beta - mean * scale).astype(jnp.float32))[:, None]   # (c, 1)
        return w_f, shift

    ks = jax.random.split(key, 7)
    w1, b1 = fold(conv_w(ks[0], input_size, of1), bn_stats(ks[1], of1))
    w2, b2 = fold(conv_w(ks[2], of1, of2), bn_stats(ks[3], of2))
    w3, b3 = fold(conv_w(ks[4], of2, of3), bn_stats(ks[5], of3))
    w4 = conv_w(ks[6], of3, 3)                                         # no BN, no bias
    w4_pad = jnp.zeros((OUT_PAD, of3), jnp.float32).at[:3].set(w4).astype(jnp.bfloat16)
    return {"w1": w1, "b1": b1, "w2": w2, "b2": b2,
            "w3": w3, "b3": b3, "w4": w4_pad}


def reference_forward(x, params):
    """Plain-JAX reference using the same folded bf16 weights (checks the kernel)."""
    h = x.astype(jnp.bfloat16)
    for w, b in [(params["w1"], params["b1"]),
                 (params["w2"], params["b2"]),
                 (params["w3"], params["b3"])]:
        z = jnp.einsum("oc,bcn->bon", w, h, preferred_element_type=jnp.float32)
        h = jnp.maximum(z + b[None], 0.0).astype(jnp.bfloat16)
    y = jnp.einsum("oc,bcn->bon", params["w4"][:3], h,
                   preferred_element_type=jnp.float32)
    return jnp.transpose(y, (0, 2, 1))


# --------------------------------------------------------------------------
if __name__ == "__main__":
    key = jax.random.PRNGKey(0)
    pkey, xkey = jax.random.split(key)

    # Small shapes: 2 point clouds, 128 input features, 384 points
    # (384 is deliberately NOT a tile multiple to exercise the partial-block path).
    B, Cin, N = 2, 128, 384
    params = init_params(pkey, input_size=Cin)
    x = jax.random.normal(xkey, (B, Cin, N), jnp.float32)

    fwd = jax.jit(functools.partial(region_reconstruction, tile_n=2048))
    out = fwd(x, params)
    jax.block_until_ready(out)

    ref = reference_forward(x, params)
    assert out.shape == (B, N, 3), out.shape
    assert bool(jnp.all(jnp.isfinite(out)))
    max_err = float(jnp.max(jnp.abs(out - ref)))
    assert max_err < 5e-2, f"max abs err {max_err}"
    print("KERNEL_OK")
</pallas_src>

<mosaic_0001>
module attributes {stable_mosaic.version = 11 : i64} {
  func.func @_region_rec_kernel(%arg0: i32, %arg1: i32, %arg2: memref<1x128x512xf32, #tpu.memory_space<vmem>>, %arg3: memref<256x128xbf16, #tpu.memory_space<vmem>>, %arg4: memref<256x1xf32, #tpu.memory_space<vmem>>, %arg5: memref<256x256xbf16, #tpu.memory_space<vmem>>, %arg6: memref<256x1xf32, #tpu.memory_space<vmem>>, %arg7: memref<128x256xbf16, #tpu.memory_space<vmem>>, %arg8: memref<128x1xf32, #tpu.memory_space<vmem>>, %arg9: memref<8x128xbf16, #tpu.memory_space<vmem>>, %arg10: memref<1x8x512xf32, #tpu.memory_space<vmem>>) attributes {dimension_semantics = [#tpu.dimension_semantics<parallel>, #tpu.dimension_semantics<parallel>], iteration_bounds = array<i64: 2, 1>, scalar_prefetch = 0 : i64, scratch_operands = 0 : i64, tpu.core_type = #tpu.core_type<tc>, window_params = [{transform_indices = @transform_0, window_bounds = array<i64: 1, 128, 512>}, {pipeline_mode = #tpu.pipeline_mode<synchronous>, transform_indices = @transform_1, window_bounds = array<i64: 256, 128>}, {pipeline_mode = #tpu.pipeline_mode<synchronous>, transform_indices = @transform_2, window_bounds = array<i64: 256, 1>}, {pipeline_mode = #tpu.pipeline_mode<synchronous>, transform_indices = @transform_3, window_bounds = array<i64: 256, 256>}, {pipeline_mode = #tpu.pipeline_mode<synchronous>, transform_indices = @transform_4, window_bounds = array<i64: 256, 1>}, {pipeline_mode = #tpu.pipeline_mode<synchronous>, transform_indices = @transform_5, window_bounds = array<i64: 128, 256>}, {pipeline_mode = #tpu.pipeline_mode<synchronous>, transform_indices = @transform_6, window_bounds = array<i64: 128, 1>}, {pipeline_mode = #tpu.pipeline_mode<synchronous>, transform_indices = @transform_7, window_bounds = array<i64: 8, 128>}, {transform_indices = @transform_8, window_bounds = array<i64: 1, 8, 512>}]} {
    %c0 = arith.constant 0 : index
    %c0_0 = arith.constant 0 : index
    %c0_1 = arith.constant 0 : index
    %0 = vector.load %arg2[%c0, %c0_0, %c0_1] : memref<1x128x512xf32, #tpu.memory_space<vmem>>, vector<1x128x512xf32>
    %1 = vector.shape_cast %0 : vector<1x128x512xf32> to vector<128x512xf32>
    %2 = arith.truncf %1 : vector<128x512xf32> to vector<128x512xbf16>
    %c0_2 = arith.constant 0 : index
    %c0_3 = arith.constant 0 : index
    %3 = vector.load %arg3[%c0_2, %c0_3] : memref<256x128xbf16, #tpu.memory_space<vmem>>, vector<256x128xbf16>
    %cst = arith.constant dense<0.000000e+00> : vector<256x512xf32>
    %4 = tpu.matmul %3, %2, %cst {dimension_numbers = #tpu.dot_dimension_numbers<[1], [0], [0], [1], [0, 0, 1, 1], [], []>} : vector<256x128xbf16>, vector<128x512xbf16>, vector<256x512xf32> -> vector<256x512xf32>
    %c0_4 = arith.constant 0 : index
    %c0_5 = arith.constant 0 : index
    %5 = vector.load %arg4[%c0_4, %c0_5] : memref<256x1xf32, #tpu.memory_space<vmem>>, vector<256x1xf32>
    %6 = vector.broadcast %5 : vector<256x1xf32> to vector<256x512xf32>
    %7 = arith.addf %4, %6 : vector<256x512xf32>
    %cst_6 = arith.constant 0.000000e+00 : f32
    %8 = vector.broadcast %cst_6 : f32 to vector<256x512xf32>
    %9 = arith.maximumf %7, %8 : vector<256x512xf32>
    %10 = arith.truncf %9 : vector<256x512xf32> to vector<256x512xbf16>
    %c0_7 = arith.constant 0 : index
    %c0_8 = arith.constant 0 : index
    %11 = vector.load %arg5[%c0_7, %c0_8] : memref<256x256xbf16, #tpu.memory_space<vmem>>, vector<256x256xbf16>
    %cst_9 = arith.constant dense<0.000000e+00> : vector<256x512xf32>
    %12 = tpu.matmul %11, %10, %cst_9 {dimension_numbers = #tpu.dot_dimension_numbers<[1], [0], [0], [1], [0, 0, 1, 1], [], []>} : vector<256x256xbf16>, vector<256x512xbf16>, vector<256x512xf32> -> vector<256x512xf32>
    %c0_10 = arith.constant 0 : index
    %c0_11 = arith.constant 0 : index
    %13 = vector.load %arg6[%c0_10, %c0_11] : memref<256x1xf32, #tpu.memory_space<vmem>>, vector<256x1xf32>
    %14 = vector.broadcast %13 : vector<256x1xf32> to vector<256x512xf32>
    %15 = arith.addf %12, %14 : vector<256x512xf32>
    %cst_12 = arith.constant 0.000000e+00 : f32
    %16 = vector.broadcast %cst_12 : f32 to vector<256x512xf32>
    %17 = arith.maximumf %15, %16 : vector<256x512xf32>
    %18 = arith.truncf %17 : vector<256x512xf32> to vector<256x512xbf16>
    %c0_13 = arith.constant 0 : index
    %c0_14 = arith.constant 0 : index
    %19 = vector.load %arg7[%c0_13, %c0_14] : memref<128x256xbf16, #tpu.memory_space<vmem>>, vector<128x256xbf16>
    %cst_15 = arith.constant dense<0.000000e+00> : vector<128x512xf32>
    %20 = tpu.matmul %19, %18, %cst_15 {dimension_numbers = #tpu.dot_dimension_numbers<[1], [0], [0], [1], [0, 0, 1, 1], [], []>} : vector<128x256xbf16>, vector<256x512xbf16>, vector<128x512xf32> -> vector<128x512xf32>
    %c0_16 = arith.constant 0 : index
    %c0_17 = arith.constant 0 : index
    %21 = vector.load %arg8[%c0_16, %c0_17] : memref<128x1xf32, #tpu.memory_space<vmem>>, vector<128x1xf32>
    %22 = vector.broadcast %21 : vector<128x1xf32> to vector<128x512xf32>
    %23 = arith.addf %20, %22 : vector<128x512xf32>
    %cst_18 = arith.constant 0.000000e+00 : f32
    %24 = vector.broadcast %cst_18 : f32 to vector<128x512xf32>
    %25 = arith.maximumf %23, %24 : vector<128x512xf32>
    %26 = arith.truncf %25 : vector<128x512xf32> to vector<128x512xbf16>
    %c0_19 = arith.constant 0 : index
    %c0_20 = arith.constant 0 : index
    %27 = vector.load %arg9[%c0_19, %c0_20] : memref<8x128xbf16, #tpu.memory_space<vmem>>, vector<8x128xbf16>
    %cst_21 = arith.constant dense<0.000000e+00> : vector<8x512xf32>
    %28 = tpu.matmul %27, %26, %cst_21 {dimension_numbers = #tpu.dot_dimension_numbers<[1], [0], [0], [1], [0, 0, 1, 1], [], []>} : vector<8x128xbf16>, vector<128x512xbf16>, vector<8x512xf32> -> vector<8x512xf32>
    %c0_22 = arith.constant 0 : index
    %c0_23 = arith.constant 0 : index
    %c0_24 = arith.constant 0 : index
    %29 = vector.load %arg10[%c0_22, %c0_23, %c0_24] : memref<1x8x512xf32, #tpu.memory_space<vmem>>, vector<1x8x512xf32>
    %30 = vector.shape_cast %29 : vector<1x8x512xf32> to vector<8x512xf32>
    %31 = vector.shape_cast %28 : vector<8x512xf32> to vector<1x8x512xf32>
    tpu.vector_store %arg10[%c0_22, %c0_23, %c0_24], %31 {strides = array<i32>} : memref<1x8x512xf32, #tpu.memory_space<vmem>>, vector<1x8x512xf32>,
    return
  }
  func.func @transform_0(%arg0: i32, %arg1: i32) -> (i32, i32, i32) {
    %c0_i32 = arith.constant 0 : i32
    %c0_i32_0 = arith.constant 0 : i32
    return %arg0, %c0_i32, %arg1 : i32, i32, i32
  }
  func.func @transform_1(%arg0: i32, %arg1: i32) -> (i32, i32) {
    %c0_i32 = arith.constant 0 : i32
    %c0_i32_0 = arith.constant 0 : i32
    %c0_i32_1 = arith.constant 0 : i32
    return %c0_i32, %c0_i32_0 : i32, i32
  }
  func.func @transform_2(%arg0: i32, %arg1: i32) -> (i32, i32) {
    %c0_i32 = arith.constant 0 : i32
    %c0_i32_0 = arith.constant 0 : i32
    %c0_i32_1 = arith.constant 0 : i32
    return %c0_i32, %c0_i32_0 : i32, i32
  }
  func.func @transform_3(%arg0: i32, %arg1: i32) -> (i32, i32) {
    %c0_i32 = arith.constant 0 : i32
    %c0_i32_0 = arith.constant 0 : i32
    %c0_i32_1 = arith.constant 0 : i32
    return %c0_i32, %c0_i32_0 : i32, i32
  }
  func.func @transform_4(%arg0: i32, %arg1: i32) -> (i32, i32) {
    %c0_i32 = arith.constant 0 : i32
    %c0_i32_0 = arith.constant 0 : i32
    %c0_i32_1 = arith.constant 0 : i32
    return %c0_i32, %c0_i32_0 : i32, i32
  }
  func.func @transform_5(%arg0: i32, %arg1: i32) -> (i32, i32) {
    %c0_i32 = arith.constant 0 : i32
    %c0_i32_0 = arith.constant 0 : i32
    %c0_i32_1 = arith.constant 0 : i32
    return %c0_i32, %c0_i32_0 : i32, i32
  }
  func.func @transform_6(%arg0: i32, %arg1: i32) -> (i32, i32) {
    %c0_i32 = arith.constant 0 : i32
    %c0_i32_0 = arith.constant 0 : i32
    %c0_i32_1 = arith.constant 0 : i32
    return %c0_i32, %c0_i32_0 : i32, i32
  }
  func.func @transform_7(%arg0: i32, %arg1: i32) -> (i32, i32) {
    %c0_i32 = arith.constant 0 : i32
    %c0_i32_0 = arith.constant 0 : i32
    %c0_i32_1 = arith.constant 0 : i32
    return %c0_i32, %c0_i32_0 : i32, i32
  }
  func.func @transform_8(%arg0: i32, %arg1: i32) -> (i32, i32, i32) {
    %c0_i32 = arith.constant 0 : i32
    %c0_i32_0 = arith.constant 0 : i32
    return %arg0, %c0_i32, %arg1 : i32, i32, i32
  }
}

</mosaic_0001>

<llo_original>
// kernel: region_reconstruction.1
$region0: #{region_reconstruction.1}
  #allocation0 [shape = 'u32[]', space=smem, size = 0x4, offset = 0x4, fixed_abs, tag = 'smem constant byte address 0x4 - core index']
  #allocation1 [shape = 'u32[144,128]{1,0:T(1,128)}', space=vmem, size = 0x12000, scoped, tag = 'internal scratch']
  %s0 = inlined_call_operand.hbm [shape: f32[2,128,384], index: 0, kind: input, shape index: {}]
  %s1 = inlined_call_operand.vmem [shape: bf16[256,128], index: 1, kind: input, shape index: {}]
  %s2 = inlined_call_operand.vmem [shape: f32[256,1], index: 2, kind: input, shape index: {}]
  %s3 = inlined_call_operand.vmem [shape: bf16[256,256], index: 3, kind: input, shape index: {}]
  %s4 = inlined_call_operand.vmem [shape: f32[256,1], index: 4, kind: input, shape index: {}]
  %s5 = inlined_call_operand.vmem [shape: bf16[128,256], index: 5, kind: input, shape index: {}]
  %s6 = inlined_call_operand.vmem [shape: f32[128,1], index: 6, kind: input, shape index: {}]
  %s7 = inlined_call_operand.vmem [shape: bf16[8,128], index: 7, kind: input, shape index: {}]
  %s8 = inlined_call_operand.vmem [shape: f32[2,8,384], index: 8, kind: output, shape index: {}]
  %s9 = sld [smem:[#allocation0]]
  $region131: #{region_reconstruction.1} parent=0
    _
  %s11 = ssub.s32 1, %s9
  %s12 = scalar_select 0, %s11, %s9
  $region1: #{region_reconstruction.1} parent=0
    #allocation2 [shape = 'u8[524288]{0}', space=vmem, size = 0x80000, scoped, tag = 'input window, operand 0']
    #allocation3 [shape = 's32[2]{0}', space=sflag, size = 0x8, scoped, tag = 'scoped memory for region_reconstruction.1']
    #allocation4 [shape = 'u8[32768]{0}', space=vmem, size = 0x8000, scoped, tag = 'output window, operand 0']
    %13 = vsyncpa [#allocation3], 0
    %s14 = scalar_lea.sflag [#allocation3], 1
    %15 = vsyncpa %s14, 0
    loop: start=0, step=1, limit=4
    $region2: #{region_reconstruction.1} parent=1 // loop_pre_header
      _
    $region3: #{region_reconstruction.1} parent=1 // loop_header
      %s17 = sphi 0, %s21
      %p18 = scmp.ge.s32.totalorder %s17, 4
      %s24 = sphi 0, %s36
      %s25 = sphi 0, %s32
      %s26 = sphi 0, %s24
      %s27 = sphi 0, %s25
      %s28 = sphi 0, %s26
      %s29 = sphi 0, %s27
      %s41 = sphi 0, %s43
      %s44 = sphi 0, %s41
      %s45 = sphi 0, %s44
      %s61 = sphi 0, %s45
      %s65 = sphi 0, %s65
      %s67 = sphi 0, %s65
      %s68 = sphi 0, %s67
      %s82 = sphi 0, %s68
      %s86 = sphi 0, %s86
      %s88 = sphi 0, %s86
      %s89 = sphi 0, %s88
      %s103 = sphi 0, %s89
      %s107 = sphi 0, %s107
      %s109 = sphi 0, %s107
      %s110 = sphi 0, %s109
      %s124 = sphi 0, %s110
      %s128 = sphi 0, %s128
      %s130 = sphi 0, %s128
      %s131 = sphi 0, %s130
      %s145 = sphi 0, %s131
      %s149 = sphi 0, %s149
      %s151 = sphi 0, %s149
      %s152 = sphi 0, %s151
      %s166 = sphi 0, %s152
      %s170 = sphi 0, %s170
      %s172 = sphi 0, %s170
      %s173 = sphi 0, %s172
      %s187 = sphi 0, %s173
      %s191 = sphi 0, %s191
      %s193 = sphi 0, %s191
      %s194 = sphi 0, %s193
      %s208 = sphi 0, %s194
      %s216 = sphi 0, %s218
      %s219 = sphi 0, %s216
      %s220 = sphi 0, %s219
      %s236 = sphi 0, %s220
    $region4: #{region_reconstruction.1} parent=1 // loop_header_branch
      %20 = sbr.rel (%p18) target = $region8
    $region5: #{region_reconstruction.1} parent=1 // loop_body
      %s22 = ssub.s32 %s17, 1
      %s23 = ssub.s32 %s17, 2
      %s30 = sadd.s32 1, %s25
      %p31 = scmp.ge.s32.totalorder %s30, 1
      %s32 = scalar_select %p31, 0, %s30
      %s33 = sadd.s32 1, %s24
      %s34 = scalar_select %p31, %s33, %s24
      %p35 = scmp.ge.s32.totalorder %s34, 2
      %s36 = scalar_select %p35, 0, %s34
      %s37 = ssub.s32 %s24, %s36
      %s38 = ssub.s32 %s25, %s32
      %s39 = sor.u32 %s37, %s38
      %p40 = scmp.eq.s32.totalorder %s39, 0
      %s42 = sadd.s32 %s41, 1
      %s43 = scalar_select %p40, %s41, %s42
      %p46 = pneg %p40
      %p47 = scmp.eq.s32.totalorder %s17, 1
      %p48 = por %p46, %p47
      %p49 = scmp.ne.s32.totalorder %s41, %s44
      %p50 = scmp.eq.s32.totalorder %s17, 0
      %p51 = por %p49, %p50
      %p52 = scmp.ne.s32.totalorder %s41, %s44
      %p53 = scmp.eq.s32.totalorder %s22, 1
      %p54 = por %p52, %p53
      %p55 = scmp.ne.s32.totalorder %s44, %s45
      %p56 = scmp.eq.s32.totalorder %s22, 0
      %p57 = por %p55, %p56
      %p58 = scmp.ne.s32.totalorder %s44, %s45
      %p59 = scmp.eq.s32.totalorder %s23, 1
      %p60 = por %p58, %p59
      %p62 = scmp.ne.s32.totalorder %s45, %s61
      %p63 = scmp.eq.s32.totalorder %s23, 0
      %p64 = por %p62, %p63
      %s66 = sadd.s32 %s65, 1
      %p69 = scmp.eq.s32.totalorder %s17, 1
      %p70 = scmp.ne.s32.totalorder %s65, %s67
      %p71 = scmp.eq.s32.totalorder %s17, 0
      %p72 = por %p70, %p71
      %p73 = scmp.ne.s32.totalorder %s65, %s67
      %p74 = scmp.eq.s32.totalorder %s22, 1
      %p75 = por %p73, %p74
      %p76 = scmp.ne.s32.totalorder %s67, %s68
      %p77 = scmp.eq.s32.totalorder %s22, 0
      %p78 = por %p76, %p77
      %p79 = scmp.ne.s32.totalorder %s67, %s68
      %p80 = scmp.eq.s32.totalorder %s23, 1
      %p81 = por %p79, %p80
      %p83 = scmp.ne.s32.totalorder %s68, %s82
      %p84 = scmp.eq.s32.totalorder %s23, 0
      %p85 = por %p83, %p84
      %s87 = sadd.s32 %s86, 1
      %p90 = scmp.eq.s32.totalorder %s17, 1
      %p91 = scmp.ne.s32.totalorder %s86, %s88
      %p92 = scmp.eq.s32.totalorder %s17, 0
      %p93 = por %p91, %p92
      %p94 = scmp.ne.s32.totalorder %s86, %s88
      %p95 = scmp.eq.s32.totalorder %s22, 1
      %p96 = por %p94, %p95
      %p97 = scmp.ne.s32.totalorder %s88, %s89
      %p98 = scmp.eq.s32.totalorder %s22, 0
      %p99 = por %p97, %p98
      %p100 = scmp.ne.s32.totalorder %s88, %s89
      %p101 = scmp.eq.s32.totalorder %s23, 1
      %p102 = por %p100, %p101
      %p104 = scmp.ne.s32.totalorder %s89, %s103
      %p105 = scmp.eq.s32.totalorder %s23, 0
      %p106 = por %p104, %p105
      %s108 = sadd.s32 %s107, 1
      %p111 = scmp.eq.s32.totalorder %s17, 1
      %p112 = scmp.ne.s32.totalorder %s107, %s109
      %p113 = scmp.eq.s32.totalorder %s17, 0
      %p114 = por %p112, %p113
      %p115 = scmp.ne.s32.totalorder %s107, %s109
      %p116 = scmp.eq.s32.totalorder %s22, 1
      %p117 = por %p115, %p116
      %p118 = scmp.ne.s32.totalorder %s109, %s110
      %p119 = scmp.eq.s32.totalorder %s22, 0
      %p120 = por %p118, %p119
      %p121 = scmp.ne.s32.totalorder %s109, %s110
      %p122 = scmp.eq.s32.totalorder %s23, 1
      %p123 = por %p121, %p122
      %p125 = scmp.ne.s32.totalorder %s110, %s124
      %p126 = scmp.eq.s32.totalorder %s23, 0
      %p127 = por %p125, %p126
      %s129 = sadd.s32 %s128, 1
      %p132 = scmp.eq.s32.totalorder %s17, 1
      %p133 = scmp.ne.s32.totalorder %s128, %s130
      %p134 = scmp.eq.s32.totalorder %s17, 0
      %p135 = por %p133, %p134
      %p136 = scmp.ne.s32.totalorder %s128, %s130
      %p137 = scmp.eq.s32.totalorder %s22, 1
      %p138 = por %p136, %p137
      %p139 = scmp.ne.s32.totalorder %s130, %s131
      %p140 = scmp.eq.s32.totalorder %s22, 0
      %p141 = por %p139, %p140
      %p142 = scmp.ne.s32.totalorder %s130, %s131
      %p143 = scmp.eq.s32.totalorder %s23, 1
      %p144 = por %p142, %p143
      %p146 = scmp.ne.s32.totalorder %s131, %s145
      %p147 = scmp.eq.s32.totalorder %s23, 0
      %p148 = por %p146, %p147
      %s150 = sadd.s32 %s149, 1
      %p153 = scmp.eq.s32.totalorder %s17, 1
      %p154 = scmp.ne.s32.totalorder %s149, %s151
      %p155 = scmp.eq.s32.totalorder %s17, 0
      %p156 = por %p154, %p155
      %p157 = scmp.ne.s32.totalorder %s149, %s151
      %p158 = scmp.eq.s32.totalorder %s22, 1
      %p159 = por %p157, %p158
      %p160 = scmp.ne.s32.totalorder %s151, %s152
      %p161 = scmp.eq.s32.totalorder %s22, 0
      %p162 = por %p160, %p161
      %p163 = scmp.ne.s32.totalorder %s151, %s152
      %p164 = scmp.eq.s32.totalorder %s23, 1
      %p165 = por %p163, %p164
      %p167 = scmp.ne.s32.totalorder %s152, %s166
      %p168 = scmp.eq.s32.totalorder %s23, 0
      %p169 = por %p167, %p168
      %s171 = sadd.s32 %s170, 1
      %p174 = scmp.eq.s32.totalorder %s17, 1
      %p175 = scmp.ne.s32.totalorder %s170, %s172
      %p176 = scmp.eq.s32.totalorder %s17, 0
      %p177 = por %p175, %p176
      %p178 = scmp.ne.s32.totalorder %s170, %s172
      %p179 = scmp.eq.s32.totalorder %s22, 1
      %p180 = por %p178, %p179
      %p181 = scmp.ne.s32.totalorder %s172, %s173
      %p182 = scmp.eq.s32.totalorder %s22, 0
      %p183 = por %p181, %p182
      %p184 = scmp.ne.s32.totalorder %s172, %s173
      %p185 = scmp.eq.s32.totalorder %s23, 1
      %p186 = por %p184, %p185
      %p188 = scmp.ne.s32.totalorder %s173, %s187
      %p189 = scmp.eq.s32.totalorder %s23, 0
      %p190 = por %p188, %p189
      %s192 = sadd.s32 %s191, 1
      %p195 = scmp.eq.s32.totalorder %s17, 1
      %p196 = scmp.ne.s32.totalorder %s191, %s193
      %p197 = scmp.eq.s32.totalorder %s17, 0
      %p198 = por %p196, %p197
      %p199 = scmp.ne.s32.totalorder %s191, %s193
      %p200 = scmp.eq.s32.totalorder %s22, 1
      %p201 = por %p199, %p200
      %p202 = scmp.ne.s32.totalorder %s193, %s194
      %p203 = scmp.eq.s32.totalorder %s22, 0
      %p204 = por %p202, %p203
      %p205 = scmp.ne.s32.totalorder %s193, %s194
      %p206 = scmp.eq.s32.totalorder %s23, 1
      %p207 = por %p205, %p206
      %p209 = scmp.ne.s32.totalorder %s194, %s208
      %p210 = scmp.eq.s32.totalorder %s23, 0
      %p211 = por %p209, %p210
      %s212 = ssub.s32 %s24, %s36
      %s213 = ssub.s32 %s25, %s32
      %s214 = sor.u32 %s212, %s213
      %p215 = scmp.eq.s32.totalorder %s214, 0
      %s217 = sadd.s32 %s216, 1
      %s218 = scalar_select %p215, %s216, %s217
      %p221 = pneg %p215
      %p222 = scmp.eq.s32.totalorder %s17, 1
      %p223 = por %p221, %p222
      %p224 = scmp.ne.s32.totalorder %s216, %s219
      %p225 = scmp.eq.s32.totalorder %s17, 0
      %p226 = por %p224, %p225
      %p227 = scmp.ne.s32.totalorder %s216, %s219
      %p228 = scmp.eq.s32.totalorder %s22, 1
      %p229 = por %p227, %p228
      %p230 = scmp.ne.s32.totalorder %s219, %s220
      %p231 = scmp.eq.s32.totalorder %s22, 0
      %p232 = por %p230, %p231
      %p233 = scmp.ne.s32.totalorder %s219, %s220
      %p234 = scmp.eq.s32.totalorder %s23, 1
      %p235 = por %p233, %p234
      %p237 = scmp.ne.s32.totalorder %s220, %s236
      %p238 = scmp.eq.s32.totalorder %s23, 0
      %p239 = por %p237, %p238
      %p240 = scmp.le.s32.totalorder 1, %s17
      %p241 = scmp.lt.s32.totalorder %s17, 3
      %p242 = pnand %p240, %p241
      %p243 = pneg %p242
      // Predicated region
      $region9: #{region_reconstruction.1} parent=5 // pred_check
        _
      $region10: #{region_reconstruction.1} parent=5 // pred_check_branch
        %245 = sbr.rel (%p242) target = $region12
      $region11: #{region_reconstruction.1} parent=5 // pred_region
        %s246 = ssub.s32 %s17, 1
        // Predicated region
        $region13: #{region_reconstruction.1} parent=11 // pred_check
          %p247 = pneg %p78
        $region14: #{region_reconstruction.1} parent=11 // pred_check_branch
          %249 = sbr.rel (%p247) target = $region16
        $region15: #{region_reconstruction.1} parent=11 // pred_region
          _
        $region16: #{region_reconstruction.1} parent=11 // pred_fallthru
          _
        // Predicated region
        $region17: #{region_reconstruction.1} parent=11 // pred_check
          %p250 = pneg %p99
        $region18: #{region_reconstruction.1} parent=11 // pred_check_branch
          %252 = sbr.rel (%p250) target = $region20
        $region19: #{region_reconstruction.1} parent=11 // pred_region
          _
        $region20: #{region_reconstruction.1} parent=11 // pred_fallthru
          _
        // Predicated region
        $region21: #{region_reconstruction.1} parent=11 // pred_check
          %p253 = pneg %p120
        $region22: #{region_reconstruction.1} parent=11 // pred_check_branch
          %255 = sbr.rel (%p253) target = $region24
        $region23: #{region_reconstruction.1} parent=11 // pred_region
          _
        $region24: #{region_reconstruction.1} parent=11 // pred_fallthru
          _
        // Predicated region
        $region25: #{region_reconstruction.1} parent=11 // pred_check
          %p256 = pneg %p141
        $region26: #{region_reconstruction.1} parent=11 // pred_check_branch
          %258 = sbr.rel (%p256) target = $region28
        $region27: #{region_reconstruction.1} parent=11 // pred_region
          _
        $region28: #{region_reconstruction.1} parent=11 // pred_fallthru
          _
        // Predicated region
        $region29: #{region_reconstruction.1} parent=11 // pred_check
          %p259 = pneg %p162
        $region30: #{region_reconstruction.1} parent=11 // pred_check_branch
          %261 = sbr.rel (%p259) target = $region32
        $region31: #{region_reconstruction.1} parent=11 // pred_region
          _
        $region32: #{region_reconstruction.1} parent=11 // pred_fallthru
          _
        // Predicated region
        $region33: #{region_reconstruction.1} parent=11 // pred_check
          %p262 = pneg %p183
        $region34: #{region_reconstruction.1} parent=11 // pred_check_branch
          %264 = sbr.rel (%p262) target = $region36
        $region35: #{region_reconstruction.1} parent=11 // pred_region
          _
        $region36: #{region_reconstruction.1} parent=11 // pred_fallthru
          _
        // Predicated region
        $region37: #{region_reconstruction.1} parent=11 // pred_check
          %p265 = pneg %p204
        $region38: #{region_reconstruction.1} parent=11 // pred_check_branch
          %267 = sbr.rel (%p265) target = $region40
        $region39: #{region_reconstruction.1} parent=11 // pred_region
          _
        $region40: #{region_reconstruction.1} parent=11 // pred_fallthru
          _
      $region12: #{region_reconstruction.1} parent=5 // pred_fallthru
        _
      %p268 = scmp.lt.s32.totalorder %s17, 2
      // Predicated region
      $region41: #{region_reconstruction.1} parent=5 // pred_check
        %p269 = pneg %p268
      $region42: #{region_reconstruction.1} parent=5 // pred_check_branch
        %271 = sbr.rel (%p269) target = $region44
      $region43: #{region_reconstruction.1} parent=5 // pred_region
        // Predicated region
        $region45: #{region_reconstruction.1} parent=43 // pred_check
          %p272 = pneg %p51
        $region46: #{region_reconstruction.1} parent=43 // pred_check_branch
          %274 = sbr.rel (%p272) target = $region48
        $region47: #{region_reconstruction.1} parent=43 // pred_region
          %s275 = sand.u32 %s41, 1
          %s276 = scalar_lea.sflag [#allocation3], %s275
          %s277 = sand.u32 %s41, 1
          %s278 = smul.addr %s277, 512
          %s279 = scalar_lea.vmem [#allocation2], %s278
          %s280 = smul.u32 4, %s25
          %s281 = ssub.s32 3, %s280
          %s282 = smul.u32 2048, %s281
          %s284 = ssub.s32 8192, %s282
          %285 = vsyncadd %s276, %s284
          %p286 = scmp.ne.s32.totalorder 0, %s282
          %s287 = smul.addr %s24, 48
          %s288 = sadd.s32 %s280, %s287
          %s289 = smul.addr %s288, 128
          %s290 = scalar_lea.hbm %s0, %s289
          %s291 = smul.u32 %s281, 8
          %s292 = smul.u32 %s291, 16
          %s293 = sshll.u32 %s279, 4
          %s294 = int_to_ptr.vmem [resolvable:$true] %s293
          %s295 = sshll.u32 %s292, 4
          %299 = dma.hbm_to_vmem [thread:$0]  (%p286), %s290, %s295, %s294, %s276, 384, 512, %s291
        $region48: #{region_reconstruction.1} parent=43 // pred_fallthru
          _
      $region44: #{region_reconstruction.1} parent=5 // pred_fallthru
        _
      %p300 = scmp.le.s32.totalorder 1, %s17
      %p301 = scmp.lt.s32.totalorder %s17, 3
      %p302 = pnand %p300, %p301
      %p303 = pneg %p302
      // Predicated region
      $region49: #{region_reconstruction.1} parent=5 // pred_check
        _
      $region50: #{region_reconstruction.1} parent=5 // pred_check_branch
        %305 = sbr.rel (%p302) target = $region52
      $region51: #{region_reconstruction.1} parent=5 // pred_region
        %s306 = ssub.s32 %s17, 1
        %s307 = sand.u32 %s44, 1
        %s308 = scalar_lea.sflag [#allocation3], %s307
        %s309 = sand.u32 %s44, 1
        %s310 = smul.addr %s309, 512
        %s311 = scalar_lea.vmem [#allocation2], %s310
        // Predicated region
        $region53: #{region_reconstruction.1} parent=51 // pred_check
          %p312 = pneg %p57
        $region54: #{region_reconstruction.1} parent=51 // pred_check_branch
          %314 = sbr.rel (%p312) target = $region56
        $region55: #{region_reconstruction.1} parent=51 // pred_region
          %315 = dma.done %s308, 8192
        $region56: #{region_reconstruction.1} parent=51 // pred_fallthru
          _
        %s316 = sand.u32 %s44, 1
        %s317 = scalar_lea.sflag [#allocation3], %s316
        %s318 = sand.u32 %s44, 1
        %s319 = smul.addr %s318, 512
        %s320 = scalar_lea.vmem [#allocation2], %s319
        %p321 = pneg %p57
        %p322 = pneg %p54
        %p323 = pneg %p78
        %p324 = pneg %p75
        %p325 = pneg %p99
        %p326 = pneg %p96
        %p327 = pneg %p120
        %p328 = pneg %p117
        %p329 = pneg %p141
        %p330 = pneg %p138
        %p331 = pneg %p162
        %p332 = pneg %p159
        %p333 = pneg %p183
        %p334 = pneg %p180
        %p335 = pneg %p204
        %p336 = pneg %p201
        %p337 = pneg %p232
        %p338 = pneg %p229
        %s339 = sand.u32 %s219, 1
        %s340 = sand.u32 %s219, 1
        %s341 = smul.addr %s340, 32
        %s342 = scalar_lea.vmem [#allocation4], %s341
        %s343 = smul.u32 4, %s27
        %s344 = ssub.s32 3, %s343
        %s345 = smul.u32 2048, %s344
        %s346 = smul.u32 4, %s27
        %s347 = ssub.s32 3, %s346
        %s348 = smul.u32 128, %s347
        %v350 = vld [vmem:[%s311] sm:$0xff]
        %v351 = vld [vmem:[%s311 + $0x8] sm:$0xff]
        %v352 = vld [vmem:[%s311 + $0x10] sm:$0xff]
        %v353 = vld [vmem:[%s311 + $0x18] sm:$0xff]
        %v354 = vld [vmem:[%s311 + $0x20] sm:$0xff]
        %v355 = vld [vmem:[%s311 + $0x28] sm:$0xff]
        %v356 = vld [vmem:[%s311 + $0x30] sm:$0xff]
        %v357 = vld [vmem:[%s311 + $0x38] sm:$0xff]
        %v358 = vld [vmem:[%s311 + $0x40] sm:$0xff]
        %v359 = vld [vmem:[%s311 + $0x48] sm:$0xff]
        %v360 = vld [vmem:[%s311 + $0x50] sm:$0xff]
        %v361 = vld [vmem:[%s311 + $0x58] sm:$0xff]
        %v362 = vld [vmem:[%s311 + $0x60] sm:$0xff]
        %v363 = vld [vmem:[%s311 + $0x68] sm:$0xff]
        %v364 = vld [vmem:[%s311 + $0x70] sm:$0xff]
        %v365 = vld [vmem:[%s311 + $0x78] sm:$0xff]
        %v366 = vld [vmem:[%s311 + $0x80] sm:$0xff]
        %v367 = vld [vmem:[%s311 + $0x88] sm:$0xff]
        %v368 = vld [vmem:[%s311 + $0x90] sm:$0xff]
        %v369 = vld [vmem:[%s311 + $0x98] sm:$0xff]
        %v370 = vld [vmem:[%s311 + $0xa0] sm:$0xff]
        %v371 = vld [vmem:[%s311 + $0xa8] sm:$0xff]
        %v372 = vld [vmem:[%s311 + $0xb0] sm:$0xff]
        %v373 = vld [vmem:[%s311 + $0xb8] sm:$0xff]
        %v374 = vld [vmem:[%s311 + $0xc0] sm:$0xff]
        %v375 = vld [vmem:[%s311 + $0xc8] sm:$0xff]
        %v376 = vld [vmem:[%s311 + $0xd0] sm:$0xff]
        %v377 = vld [vmem:[%s311 + $0xd8] sm:$0xff]
        %v378 = vld [vmem:[%s311 + $0xe0] sm:$0xff]
        %v379 = vld [vmem:[%s311 + $0xe8] sm:$0xff]
        %v380 = vld [vmem:[%s311 + $0xf0] sm:$0xff]
        %v381 = vld [vmem:[%s311 + $0xf8] sm:$0xff]
        %v382 = vld [vmem:[%s311 + $0x100] sm:$0xff]
        %v383 = vld [vmem:[%s311 + $0x108] sm:$0xff]
        %v384 = vld [vmem:[%s311 + $0x110] sm:$0xff]
        %v385 = vld [vmem:[%s311 + $0x118] sm:$0xff]
        %v386 = vld [vmem:[%s311 + $0x120] sm:$0xff]
        %v387 = vld [vmem:[%s311 + $0x128] sm:$0xff]
        %v388 = vld [vmem:[%s311 + $0x130] sm:$0xff]
        %v389 = vld [vmem:[%s311 + $0x138] sm:$0xff]
        %v390 = vld [vmem:[%s311 + $0x140] sm:$0xff]
        %v391 = vld [vmem:[%s311 + $0x148] sm:$0xff]
        %v392 = vld [vmem:[%s311 + $0x150] sm:$0xff]
        %v393 = vld [vmem:[%s311 + $0x158] sm:$0xff]
        %v394 = vld [vmem:[%s311 + $0x160] sm:$0xff]
        %v395 = vld [vmem:[%s311 + $0x168] sm:$0xff]
        %v396 = vld [vmem:[%s311 + $0x170] sm:$0xff]
        %v397 = vld [vmem:[%s311 + $0x178] sm:$0xff]
        %v398 = vld [vmem:[%s311 + $0x180] sm:$0xff]
        %v399 = vld [vmem:[%s311 + $0x188] sm:$0xff]
        %v400 = vld [vmem:[%s311 + $0x190] sm:$0xff]
        %v401 = vld [vmem:[%s311 + $0x198] sm:$0xff]
        %v402 = vld [vmem:[%s311 + $0x1a0] sm:$0xff]
        %v403 = vld [vmem:[%s311 + $0x1a8] sm:$0xff]
        %v404 = vld [vmem:[%s311 + $0x1b0] sm:$0xff]
        %v405 = vld [vmem:[%s311 + $0x1b8] sm:$0xff]
        %v406 = vld [vmem:[%s311 + $0x1c0] sm:$0xff]
        %v407 = vld [vmem:[%s311 + $0x1c8] sm:$0xff]
        %v408 = vld [vmem:[%s311 + $0x1d0] sm:$0xff]
        %v409 = vld [vmem:[%s311 + $0x1d8] sm:$0xff]
        %v410 = vld [vmem:[%s311 + $0x1e0] sm:$0xff]
        %v411 = vld [vmem:[%s311 + $0x1e8] sm:$0xff]
        %v412 = vld [vmem:[%s311 + $0x1f0] sm:$0xff]
        %v413 = vld [vmem:[%s311 + $0x1f8] sm:$0xff]
        %v414 = vpack.c.bf16 %v354, %v350
        %v415 = vpack.c.bf16 %v355, %v351
        %v416 = vpack.c.bf16 %v356, %v352
        %v417 = vpack.c.bf16 %v357, %v353
        %v418 = vpack.c.bf16 %v362, %v358
        %v419 = vpack.c.bf16 %v363, %v359
        %v420 = vpack.c.bf16 %v364, %v360
        %v421 = vpack.c.bf16 %v365, %v361
        %v422 = vpack.c.bf16 %v370, %v366
        %v423 = vpack.c.bf16 %v371, %v367
        %v424 = vpack.c.bf16 %v372, %v368
        %v425 = vpack.c.bf16 %v373, %v369
        %v426 = vpack.c.bf16 %v378, %v374
        %v427 = vpack.c.bf16 %v379, %v375
        %v428 = vpack.c.bf16 %v380, %v376
        %v429 = vpack.c.bf16 %v381, %v377
        %v430 = vpack.c.bf16 %v386, %v382
        %v431 = vpack.c.bf16 %v387, %v383
        %v432 = vpack.c.bf16 %v388, %v384
        %v433 = vpack.c.bf16 %v389, %v385
        %v434 = vpack.c.bf16 %v394, %v390
        %v435 = vpack.c.bf16 %v395, %v391
        %v436 = vpack.c.bf16 %v396, %v392
        %v437 = vpack.c.bf16 %v397, %v393
        %v438 = vpack.c.bf16 %v402, %v398
        %v439 = vpack.c.bf16 %v403, %v399
        %v440 = vpack.c.bf16 %v404, %v400
        %v441 = vpack.c.bf16 %v405, %v401
        %v442 = vpack.c.bf16 %v410, %v406
        %v443 = vpack.c.bf16 %v411, %v407
        %v444 = vpack.c.bf16 %v412, %v408
        %v445 = vpack.c.bf16 %v413, %v409
        %v446 = vld [vmem:[%s1] sm:$0xf]
        %v447 = vld [vmem:[%s1 + $0x4] sm:$0xf]
        %v448 = vld [vmem:[%s1 + $0x8] sm:$0xf]
        %v449 = vld [vmem:[%s1 + $0xc] sm:$0xf]
        %v450 = vld [vmem:[%s1 + $0x10] sm:$0xf]
        %v451 = vld [vmem:[%s1 + $0x14] sm:$0xf]
        %v452 = vld [vmem:[%s1 + $0x18] sm:$0xf]
        %v453 = vld [vmem:[%s1 + $0x1c] sm:$0xf]
        %v454 = vld [vmem:[%s1 + $0x20] sm:$0xf]
        %v455 = vld [vmem:[%s1 + $0x24] sm:$0xf]
        %v456 = vld [vmem:[%s1 + $0x28] sm:$0xf]
        %v457 = vld [vmem:[%s1 + $0x2c] sm:$0xf]
        %v458 = vld [vmem:[%s1 + $0x30] sm:$0xf]
        %v459 = vld [vmem:[%s1 + $0x34] sm:$0xf]
        %v460 = vld [vmem:[%s1 + $0x38] sm:$0xf]
        %v461 = vld [vmem:[%s1 + $0x3c] sm:$0xf]
        %v462 = vld [vmem:[%s1 + $0x40] sm:$0xf]
        %v463 = vld [vmem:[%s1 + $0x44] sm:$0xf]
        %v464 = vld [vmem:[%s1 + $0x48] sm:$0xf]
        %v465 = vld [vmem:[%s1 + $0x4c] sm:$0xf]
        %v466 = vld [vmem:[%s1 + $0x50] sm:$0xf]
        %v467 = vld [vmem:[%s1 + $0x54] sm:$0xf]
        %v468 = vld [vmem:[%s1 + $0x58] sm:$0xf]
        %v469 = vld [vmem:[%s1 + $0x5c] sm:$0xf]
        %v470 = vld [vmem:[%s1 + $0x60] sm:$0xf]
        %v471 = vld [vmem:[%s1 + $0x64] sm:$0xf]
        %v472 = vld [vmem:[%s1 + $0x68] sm:$0xf]
        %v473 = vld [vmem:[%s1 + $0x6c] sm:$0xf]
        %v474 = vld [vmem:[%s1 + $0x70] sm:$0xf]
        %v475 = vld [vmem:[%s1 + $0x74] sm:$0xf]
        %v476 = vld [vmem:[%s1 + $0x78] sm:$0xf]
        %v477 = vld [vmem:[%s1 + $0x7c] sm:$0xf]
        %v478 = vld [vmem:[%s2] sm:$0xff]
        %v479 = vld [vmem:[%s2 + $0x8] sm:$0xff]
        %v480 = vld [vmem:[%s2 + $0x10] sm:$0xff]
        %v481 = vld [vmem:[%s2 + $0x18] sm:$0xff]
        %v482 = vld [vmem:[%s2 + $0x20] sm:$0xff]
        %v483 = vld [vmem:[%s2 + $0x28] sm:$0xff]
        %v484 = vld [vmem:[%s2 + $0x30] sm:$0xff]
        %v485 = vld [vmem:[%s2 + $0x38] sm:$0xff]
        %v486 = vld [vmem:[%s2 + $0x40] sm:$0xff]
        %v487 = vld [vmem:[%s2 + $0x48] sm:$0xff]
        %v488 = vld [vmem:[%s2 + $0x50] sm:$0xff]
        %v489 = vld [vmem:[%s2 + $0x58] sm:$0xff]
        %v490 = vld [vmem:[%s2 + $0x60] sm:$0xff]
        %v491 = vld [vmem:[%s2 + $0x68] sm:$0xff]
        %v492 = vld [vmem:[%s2 + $0x70] sm:$0xff]
        %v493 = vld [vmem:[%s2 + $0x78] sm:$0xff]
        %v494 = vld [vmem:[%s2 + $0x80] sm:$0xff]
        %v495 = vld [vmem:[%s2 + $0x88] sm:$0xff]
        %v496 = vld [vmem:[%s2 + $0x90] sm:$0xff]
        %v497 = vld [vmem:[%s2 + $0x98] sm:$0xff]
        %v498 = vld [vmem:[%s2 + $0xa0] sm:$0xff]
        %v499 = vld [vmem:[%s2 + $0xa8] sm:$0xff]
        %v500 = vld [vmem:[%s2 + $0xb0] sm:$0xff]
        %v501 = vld [vmem:[%s2 + $0xb8] sm:$0xff]
        %v502 = vld [vmem:[%s2 + $0xc0] sm:$0xff]
        %v503 = vld [vmem:[%s2 + $0xc8] sm:$0xff]
        %v504 = vld [vmem:[%s2 + $0xd0] sm:$0xff]
        %v505 = vld [vmem:[%s2 + $0xd8] sm:$0xff]
        %v506 = vld [vmem:[%s2 + $0xe0] sm:$0xff]
        %v507 = vld [vmem:[%s2 + $0xe8] sm:$0xff]
        %v508 = vld [vmem:[%s2 + $0xf0] sm:$0xff]
        %v509 = vld [vmem:[%s2 + $0xf8] sm:$0xff]
        %511 = vset.pattern.permute.xlu0 0
        %512 = vperm.xlu0 %511, %v478
        %v513 = vpop.permute.xlu0 %512
        %516 = vset.pattern.permute.xlu0 0
        %517 = vperm.xlu0 %516, %v479
        %v518 = vpop.permute.xlu0 %517
        %521 = vset.pattern.permute.xlu0 0
        %522 = vperm.xlu0 %521, %v480
        %v523 = vpop.permute.xlu0 %522
        %526 = vset.pattern.permute.xlu0 0
        %527 = vperm.xlu0 %526, %v481
        %v528 = vpop.permute.xlu0 %527
        %531 = vset.pattern.permute.xlu0 0
        %532 = vperm.xlu0 %531, %v482
        %v533 = vpop.permute.xlu0 %532
        %536 = vset.pattern.permute.xlu0 0
        %537 = vperm.xlu0 %536, %v483
        %v538 = vpop.permute.xlu0 %537
        %541 = vset.pattern.permute.xlu0 0
        %542 = vperm.xlu0 %541, %v484
        %v543 = vpop.permute.xlu0 %542
        %546 = vset.pattern.permute.xlu0 0
        %547 = vperm.xlu0 %546, %v485
        %v548 = vpop.permute.xlu0 %547
        %551 = vset.pattern.permute.xlu0 0
        %552 = vperm.xlu0 %551, %v486
        %v553 = vpop.permute.xlu0 %552
        %556 = vset.pattern.permute.xlu0 0
        %557 = vperm.xlu0 %556, %v487
        %v558 = vpop.permute.xlu0 %557
        %561 = vset.pattern.permute.xlu0 0
        %562 = vperm.xlu0 %561, %v488
        %v563 = vpop.permute.xlu0 %562
        %566 = vset.pattern.permute.xlu0 0
        %567 = vperm.xlu0 %566, %v489
        %v568 = vpop.permute.xlu0 %567
        %571 = vset.pattern.permute.xlu0 0
        %572 = vperm.xlu0 %571, %v490
        %v573 = vpop.permute.xlu0 %572
        %576 = vset.pattern.permute.xlu0 0
        %577 = vperm.xlu0 %576, %v491
        %v578 = vpop.permute.xlu0 %577
        %581 = vset.pattern.permute.xlu0 0
        %582 = vperm.xlu0 %581, %v492
        %v583 = vpop.permute.xlu0 %582
        %586 = vset.pattern.permute.xlu0 0
        %587 = vperm.xlu0 %586, %v493
        %v588 = vpop.permute.xlu0 %587
        %591 = vset.pattern.permute.xlu0 0
        %592 = vperm.xlu0 %591, %v494
        %v593 = vpop.permute.xlu0 %592
        %596 = vset.pattern.permute.xlu0 0
        %597 = vperm.xlu0 %596, %v495
        %v598 = vpop.permute.xlu0 %597
        %601 = vset.pattern.permute.xlu0 0
        %602 = vperm.xlu0 %601, %v496
        %v603 = vpop.permute.xlu0 %602
        %606 = vset.pattern.permute.xlu0 0
        %607 = vperm.xlu0 %606, %v497
        %v608 = vpop.permute.xlu0 %607
        %611 = vset.pattern.permute.xlu0 0
        %612 = vperm.xlu0 %611, %v498
        %v613 = vpop.permute.xlu0 %612
        %616 = vset.pattern.permute.xlu0 0
        %617 = vperm.xlu0 %616, %v499
        %v618 = vpop.permute.xlu0 %617
        %621 = vset.pattern.permute.xlu0 0
        %622 = vperm.xlu0 %621, %v500
        %v623 = vpop.permute.xlu0 %622
        %626 = vset.pattern.permute.xlu0 0
        %627 = vperm.xlu0 %626, %v501
        %v628 = vpop.permute.xlu0 %627
        %631 = vset.pattern.permute.xlu0 0
        %632 = vperm.xlu0 %631, %v502
        %v633 = vpop.permute.xlu0 %632
        %636 = vset.pattern.permute.xlu0 0
        %637 = vperm.xlu0 %636, %v503
        %v638 = vpop.permute.xlu0 %637
        %641 = vset.pattern.permute.xlu0 0
        %642 = vperm.xlu0 %641, %v504
        %v643 = vpop.permute.xlu0 %642
        %646 = vset.pattern.permute.xlu0 0
        %647 = vperm.xlu0 %646, %v505
        %v648 = vpop.permute.xlu0 %647
        %651 = vset.pattern.permute.xlu0 0
        %652 = vperm.xlu0 %651, %v506
        %v653 = vpop.permute.xlu0 %652
        %656 = vset.pattern.permute.xlu0 0
        %657 = vperm.xlu0 %656, %v507
        %v658 = vpop.permute.xlu0 %657
        %661 = vset.pattern.permute.xlu0 0
        %662 = vperm.xlu0 %661, %v508
        %v663 = vpop.permute.xlu0 %662
        %666 = vset.pattern.permute.xlu0 0
        %667 = vperm.xlu0 %666, %v509
        %v668 = vpop.permute.xlu0 %667
        %v702 = vunpack.c.l.b16 %v446
        %v703 = vunpack.c.l.b16 %v447
        %v704 = vunpack.c.l.b16 %v448
        %v705 = vunpack.c.l.b16 %v449
        %v706 = vunpack.c.l.b16 %v450
        %v707 = vunpack.c.l.b16 %v451
        %v708 = vunpack.c.l.b16 %v452
        %v709 = vunpack.c.l.b16 %v453
        %v710 = vunpack.c.l.b16 %v454
        %v711 = vunpack.c.l.b16 %v455
        %v712 = vunpack.c.l.b16 %v456
        %v713 = vunpack.c.l.b16 %v457
        %v714 = vunpack.c.l.b16 %v458
        %v715 = vunpack.c.l.b16 %v459
        %v716 = vunpack.c.l.b16 %v460
        %v717 = vunpack.c.l.b16 %v461
        %v718 = vunpack.c.l.b16 %v462
        %v719 = vunpack.c.l.b16 %v463
        %v720 = vunpack.c.l.b16 %v464
        %v721 = vunpack.c.l.b16 %v465
        %v722 = vunpack.c.l.b16 %v466
        %v723 = vunpack.c.l.b16 %v467
        %v724 = vunpack.c.l.b16 %v468
        %v725 = vunpack.c.l.b16 %v469
        %v726 = vunpack.c.l.b16 %v470
        %v727 = vunpack.c.l.b16 %v471
        %v728 = vunpack.c.l.b16 %v472
        %v729 = vunpack.c.l.b16 %v473
        %v730 = vunpack.c.l.b16 %v474
        %v731 = vunpack.c.l.b16 %v475
        %v732 = vunpack.c.l.b16 %v476
        %v733 = vunpack.c.l.b16 %v477
        %v734 = vpack.c.b16 %v703, %v702
        %v735 = vpack.c.b16 %v705, %v704
        %v736 = vpack.c.b16 %v707, %v706
        %v737 = vpack.c.b16 %v709, %v708
        %v738 = vpack.c.b16 %v711, %v710
        %v739 = vpack.c.b16 %v713, %v712
        %v740 = vpack.c.b16 %v715, %v714
        %v741 = vpack.c.b16 %v717, %v716
        %v742 = vpack.c.b16 %v719, %v718
        %v743 = vpack.c.b16 %v721, %v720
        %v744 = vpack.c.b16 %v723, %v722
        %v745 = vpack.c.b16 %v725, %v724
        %v746 = vpack.c.b16 %v727, %v726
        %v747 = vpack.c.b16 %v729, %v728
        %v748 = vpack.c.b16 %v731, %v730
        %v749 = vpack.c.b16 %v733, %v732
        %766 = vmatprep.subr.bf16.mxu0 %v415
        %767 = vmatpush1.bf16.msra.mxu0 %v414
        %768 = vmatprep.subr.bf16.mxu0 %v419
        %769 = vmatpush1.bf16.msra.mxu0 %v418
        %770 = vmatprep.subr.bf16.mxu0 %v423
        %771 = vmatpush1.bf16.msra.mxu0 %v422
        %772 = vmatprep.subr.bf16.mxu0 %v427
        %773 = vmatpush1.bf16.msra.mxu0 %v426
        %774 = vmatprep.subr.bf16.mxu0 %v431
        %775 = vmatpush1.bf16.msra.mxu0 %v430
        %776 = vmatprep.subr.bf16.mxu0 %v435
        %777 = vmatpush1.bf16.msra.mxu0 %v434
        %778 = vmatprep.subr.bf16.mxu0 %v439
        %779 = vmatpush1.bf16.msra.mxu0 %v438
        %780 = vmatprep.subr.bf16.mxu0 %v443
        %781 = vmatpush1.bf16.msra.mxu0 %v442
        %782 = vmatprep.subr.bf16.mxu0 0
        %783 = vmatpush1.bf16.msra.mxu0 0
        %784 = vmatprep.subr.bf16.mxu0 0
        %785 = vmatpush1.bf16.msra.mxu0 0
        %786 = vmatprep.subr.bf16.mxu0 0
        %787 = vmatpush1.bf16.msra.mxu0 0
        %788 = vmatprep.subr.bf16.mxu0 0
        %789 = vmatpush1.bf16.msra.mxu0 0
        %790 = vmatprep.subr.bf16.mxu0 0
        %791 = vmatpush1.bf16.msra.mxu0 0
        %792 = vmatprep.subr.bf16.mxu0 0
        %793 = vmatpush1.bf16.msra.mxu0 0
        %794 = vmatprep.subr.bf16.mxu0 0
        %795 = vmatpush1.bf16.msra.mxu0 0
        %796 = vmatprep.subr.bf16.mxu0 0
        %797 = vmatpush1.bf16.msra.mxu0 0
        %798 = vmatprep.mubr.bf16.mxu0 0
        %799 = vmatmul.mubr.bf16.gmra.mrb[0].mxu0 %v734
        %v800 = vpop.f32.mrb[0].mxu0
        %v801 = vadd.f32 %v513, %v800
        %v802 = vpop.f32.mrb[0].mxu0
        %v803 = vadd.f32 %v513, %v802
        %v804 = vpop.f32.mrb[0].mxu0
        %v805 = vadd.f32 %v518, %v804
        %v806 = vpop.f32.mrb[0].mxu0
        %v807 = vadd.f32 %v518, %v806
        %808 = vmatprep.mubr.bf16.mxu0 0
        %809 = vmatmul.mubr.bf16.gmra.mrb[0].mxu0 %v735
        %v810 = vpop.f32.mrb[0].mxu0
        %v811 = vadd.f32 %v523, %v810
        %v812 = vpop.f32.mrb[0].mxu0
        %v813 = vadd.f32 %v523, %v812
        %v814 = vpop.f32.mrb[0].mxu0
        %v815 = vadd.f32 %v528, %v814
        %v816 = vpop.f32.mrb[0].mxu0
        %v817 = vadd.f32 %v528, %v816
        %818 = vmatprep.mubr.bf16.mxu0 0
        %819 = vmatmul.mubr.bf16.gmra.mrb[0].mxu0 %v736
        %v820 = vpop.f32.mrb[0].mxu0
        %v821 = vadd.f32 %v533, %v820
        %v822 = vpop.f32.mrb[0].mxu0
        %v823 = vadd.f32 %v533, %v822
        %v824 = vpop.f32.mrb[0].mxu0
        %v825 = vadd.f32 %v538, %v824
        %v826 = vpop.f32.mrb[0].mxu0
        %v827 = vadd.f32 %v538, %v826
        %828 = vmatprep.mubr.bf16.mxu0 0
        %829 = vmatmul.mubr.bf16.gmra.mrb[0].mxu0 %v737
        %v830 = vpop.f32.mrb[0].mxu0
        %v831 = vadd.f32 %v543, %v830
        %v832 = vpop.f32.mrb[0].mxu0
        %v833 = vadd.f32 %v543, %v832
        %v834 = vpop.f32.mrb[0].mxu0
        %v835 = vadd.f32 %v548, %v834
        %v836 = vpop.f32.mrb[0].mxu0
        %v837 = vadd.f32 %v548, %v836
        %838 = vmatprep.mubr.bf16.mxu0 0
        %839 = vmatmul.mubr.bf16.gmra.mrb[0].mxu0 %v738
        %v840 = vpop.f32.mrb[0].mxu0
        %v841 = vadd.f32 %v553, %v840
        %v842 = vpop.f32.mrb[0].mxu0
        %v843 = vadd.f32 %v553, %v842
        %v844 = vpop.f32.mrb[0].mxu0
        %v845 = vadd.f32 %v558, %v844
        %v846 = vpop.f32.mrb[0].mxu0
        %v847 = vadd.f32 %v558, %v846
        %848 = vmatprep.mubr.bf16.mxu0 0
        %849 = vmatmul.mubr.bf16.gmra.mrb[0].mxu0 %v739
        %v850 = vpop.f32.mrb[0].mxu0
        %v851 = vadd.f32 %v563, %v850
        %v852 = vpop.f32.mrb[0].mxu0
        %v853 = vadd.f32 %v563, %v852
        %v854 = vpop.f32.mrb[0].mxu0
        %v855 = vadd.f32 %v568, %v854
        %v856 = vpop.f32.mrb[0].mxu0
        %v857 = vadd.f32 %v568, %v856
        %858 = vmatprep.mubr.bf16.mxu0 0
        %859 = vmatmul.mubr.bf16.gmra.mrb[0].mxu0 %v740
        %v860 = vpop.f32.mrb[0].mxu0
        %v861 = vadd.f32 %v573, %v860
        %v862 = vpop.f32.mrb[0].mxu0
        %v863 = vadd.f32 %v573, %v862
        %v864 = vpop.f32.mrb[0].mxu0
        %v865 = vadd.f32 %v578, %v864
        %v866 = vpop.f32.mrb[0].mxu0
        %v867 = vadd.f32 %v578, %v866
        %868 = vmatprep.mubr.bf16.mxu0 0
        %869 = vmatmul.mubr.bf16.gmra.mrb[0].mxu0 %v741
        %v870 = vpop.f32.mrb[0].mxu0
        %v871 = vadd.f32 %v583, %v870
        %v872 = vpop.f32.mrb[0].mxu0
        %v873 = vadd.f32 %v583, %v872
        %v874 = vpop.f32.mrb[0].mxu0
        %v875 = vadd.f32 %v588, %v874
        %v876 = vpop.f32.mrb[0].mxu0
        %v877 = vadd.f32 %v588, %v876
        %878 = vmatprep.mubr.bf16.mxu0 0
        %879 = vmatmul.mubr.bf16.gmra.mrb[0].mxu0 %v742
        %v880 = vpop.f32.mrb[0].mxu0
        %v881 = vadd.f32 %v593, %v880
        %v882 = vpop.f32.mrb[0].mxu0
        %v883 = vadd.f32 %v593, %v882
        %v884 = vpop.f32.mrb[0].mxu0
        %v885 = vadd.f32 %v598, %v884
        %v886 = vpop.f32.mrb[0].mxu0
        %v887 = vadd.f32 %v598, %v886
        %888 = vmatprep.mubr.bf16.mxu0 0
        %889 = vmatmul.mubr.bf16.gmra.mrb[0].mxu0 %v743
        %v890 = vpop.f32.mrb[0].mxu0
        %v891 = vadd.f32 %v603, %v890
        %v892 = vpop.f32.mrb[0].mxu0
        %v893 = vadd.f32 %v603, %v892
        %v894 = vpop.f32.mrb[0].mxu0
        %v895 = vadd.f32 %v608, %v894
        %v896 = vpop.f32.mrb[0].mxu0
        %v897 = vadd.f32 %v608, %v896
        %898 = vmatprep.mubr.bf16.mxu0 0
        %899 = vmatmul.mubr.bf16.gmra.mrb[0].mxu0 %v744
        %v900 = vpop.f32.mrb[0].mxu0
        %v901 = vadd.f32 %v613, %v900
        %v902 = vpop.f32.mrb[0].mxu0
        %v903 = vadd.f32 %v613, %v902
        %v904 = vpop.f32.mrb[0].mxu0
        %v905 = vadd.f32 %v618, %v904
        %v906 = vpop.f32.mrb[0].mxu0
        %v907 = vadd.f32 %v618, %v906
        %908 = vmatprep.mubr.bf16.mxu0 0
        %909 = vmatmul.mubr.bf16.gmra.mrb[0].mxu0 %v745
        %v910 = vpop.f32.mrb[0].mxu0
        %v911 = vadd.f32 %v623, %v910
        %v912 = vpop.f32.mrb[0].mxu0
        %v913 = vadd.f32 %v623, %v912
        %v914 = vpop.f32.mrb[0].mxu0
        %v915 = vadd.f32 %v628, %v914
        %v916 = vpop.f32.mrb[0].mxu0
        %v917 = vadd.f32 %v628, %v916
        %918 = vmatprep.mubr.bf16.mxu0 0
        %919 = vmatmul.mubr.bf16.gmra.mrb[0].mxu0 %v746
        %v920 = vpop.f32.mrb[0].mxu0
        %v921 = vadd.f32 %v633, %v920
        %v922 = vpop.f32.mrb[0].mxu0
        %v923 = vadd.f32 %v633, %v922
        %v924 = vpop.f32.mrb[0].mxu0
        %v925 = vadd.f32 %v638, %v924
        %v926 = vpop.f32.mrb[0].mxu0
        %v927 = vadd.f32 %v638, %v926
        %928 = vmatprep.mubr.bf16.mxu0 0
        %929 = vmatmul.mubr.bf16.gmra.mrb[0].mxu0 %v747
        %v930 = vpop.f32.mrb[0].mxu0
        %v931 = vadd.f32 %v643, %v930
        %v932 = vpop.f32.mrb[0].mxu0
        %v933 = vadd.f32 %v643, %v932
        %v934 = vpop.f32.mrb[0].mxu0
        %v935 = vadd.f32 %v648, %v934
        %v936 = vpop.f32.mrb[0].mxu0
        %v937 = vadd.f32 %v648, %v936
        %938 = vmatprep.mubr.bf16.mxu0 0
        %939 = vmatmul.mubr.bf16.gmra.mrb[0].mxu0 %v748
        %v940 = vpop.f32.mrb[0].mxu0
        %v941 = vadd.f32 %v653, %v940
        %v942 = vpop.f32.mrb[0].mxu0
        %v943 = vadd.f32 %v653, %v942
        %v944 = vpop.f32.mrb[0].mxu0
        %v945 = vadd.f32 %v658, %v944
        %v946 = vpop.f32.mrb[0].mxu0
        %v947 = vadd.f32 %v658, %v946
        %948 = vmatprep.mubr.bf16.mxu0 0
        %949 = vmatmul.mubr.bf16.gmra.mrb[0].mxu0 %v749
        %v950 = vpop.f32.mrb[0].mxu0
        %v951 = vadd.f32 %v663, %v950
        %v952 = vpop.f32.mrb[0].mxu0
        %v953 = vadd.f32 %v663, %v952
        %v954 = vpop.f32.mrb[0].mxu0
        %v955 = vadd.f32 %v668, %v954
        %v956 = vpop.f32.mrb[0].mxu0
        %v957 = vadd.f32 %v668, %v956
        %958 = vdwg.mxu0
        %959 = vmatprep.subr.bf16.mxu0 %v417
        %960 = vmatpush1.bf16.msra.mxu0 %v416
        %961 = vmatprep.subr.bf16.mxu0 %v421
        %962 = vmatpush1.bf16.msra.mxu0 %v420
        %963 = vmatprep.subr.bf16.mxu0 %v425
        %964 = vmatpush1.bf16.msra.mxu0 %v424
        %965 = vmatprep.subr.bf16.mxu0 %v429
        %966 = vmatpush1.bf16.msra.mxu0 %v428
        %967 = vmatprep.subr.bf16.mxu0 %v433
        %968 = vmatpush1.bf16.msra.mxu0 %v432
        %969 = vmatprep.subr.bf16.mxu0 %v437
        %970 = vmatpush1.bf16.msra.mxu0 %v436
        %971 = vmatprep.subr.bf16.mxu0 %v441
        %972 = vmatpush1.bf16.msra.mxu0 %v440
        %973 = vmatprep.subr.bf16.mxu0 %v445
        %974 = vmatpush1.bf16.msra.mxu0 %v444
        %975 = vmatprep.subr.bf16.mxu0 0
        %976 = vmatpush1.bf16.msra.mxu0 0
        %977 = vmatprep.subr.bf16.mxu0 0
        %978 = vmatpush1.bf16.msra.mxu0 0
        %979 = vmatprep.subr.bf16.mxu0 0
        %980 = vmatpush1.bf16.msra.mxu0 0
        %981 = vmatprep.subr.bf16.mxu0 0
        %982 = vmatpush1.bf16.msra.mxu0 0
        %983 = vmatprep.subr.bf16.mxu0 0
        %984 = vmatpush1.bf16.msra.mxu0 0
        %985 = vmatprep.subr.bf16.mxu0 0
        %986 = vmatpush1.bf16.msra.mxu0 0
        %987 = vmatprep.subr.bf16.mxu0 0
        %988 = vmatpush1.bf16.msra.mxu0 0
        %989 = vmatprep.subr.bf16.mxu0 0
        %990 = vmatpush1.bf16.msra.mxu0 0
        %991 = vmatprep.mubr.bf16.mxu0 0
        %992 = vmatmul.mubr.bf16.gmra.mrb[0].mxu0 %v734
        %v993 = vpop.f32.mrb[0].mxu0
        %v994 = vadd.f32 %v513, %v993
        %v995 = vpop.f32.mrb[0].mxu0
        %v996 = vadd.f32 %v513, %v995
        %v997 = vpop.f32.mrb[0].mxu0
        %v998 = vadd.f32 %v518, %v997
        %v999 = vpop.f32.mrb[0].mxu0
        %v1000 = vadd.f32 %v518, %v999
        %1001 = vmatprep.mubr.bf16.mxu0 0
        %1002 = vmatmul.mubr.bf16.gmra.mrb[0].mxu0 %v735
        %v1003 = vpop.f32.mrb[0].mxu0
        %v1004 = vadd.f32 %v523, %v1003
        %v1005 = vpop.f32.mrb[0].mxu0
        %v1006 = vadd.f32 %v523, %v1005
        %v1007 = vpop.f32.mrb[0].mxu0
        %v1008 = vadd.f32 %v528, %v1007
        %v1009 = vpop.f32.mrb[0].mxu0
        %v1010 = vadd.f32 %v528, %v1009
        %1011 = vmatprep.mubr.bf16.mxu0 0
        %1012 = vmatmul.mubr.bf16.gmra.mrb[0].mxu0 %v736
        %v1013 = vpop.f32.mrb[0].mxu0
        %v1014 = vadd.f32 %v533, %v1013
        %v1015 = vpop.f32.mrb[0].mxu0
        %v1016 = vadd.f32 %v533, %v1015
        %v1017 = vpop.f32.mrb[0].mxu0
        %v1018 = vadd.f32 %v538, %v1017
        %v1019 = vpop.f32.mrb[0].mxu0
        %v1020 = vadd.f32 %v538, %v1019
        %1021 = vmatprep.mubr.bf16.mxu0 0
        %1022 = vmatmul.mubr.bf16.gmra.mrb[0].mxu0 %v737
        %v1023 = vpop.f32.mrb[0].mxu0
        %v1024 = vadd.f32 %v543, %v1023
        %v1025 = vpop.f32.mrb[0].mxu0
        %v1026 = vadd.f32 %v543, %v1025
        %v1027 = vpop.f32.mrb[0].mxu0
        %v1028 = vadd.f32 %v548, %v1027
        %v1029 = vpop.f32.mrb[0].mxu0
        %v1030 = vadd.f32 %v548, %v1029
        %1031 = vmatprep.mubr.bf16.mxu0 0
        %1032 = vmatmul.mubr.bf16.gmra.mrb[0].mxu0 %v738
        %v1033 = vpop.f32.mrb[0].mxu0
        %v1034 = vadd.f32 %v553, %v1033
        %v1035 = vpop.f32.mrb[0].mxu0
        %v1036 = vadd.f32 %v553, %v1035
        %v1037 = vpop.f32.mrb[0].mxu0
        %v1038 = vadd.f32 %v558, %v1037
        %v1039 = vpop.f32.mrb[0].mxu0
        %v1040 = vadd.f32 %v558, %v1039
        %1041 = vmatprep.mubr.bf16.mxu0 0
        %1042 = vmatmul.mubr.bf16.gmra.mrb[0].mxu0 %v739
        %v1043 = vpop.f32.mrb[0].mxu0
        %v1044 = vadd.f32 %v563, %v1043
        %v1045 = vpop.f32.mrb[0].mxu0
        %v1046 = vadd.f32 %v563, %v1045
        %v1047 = vpop.f32.mrb[0].mxu0
        %v1048 = vadd.f32 %v568, %v1047
        %v1049 = vpop.f32.mrb[0].mxu0
        %v1050 = vadd.f32 %v568, %v1049
        %1051 = vmatprep.mubr.bf16.mxu0 0
        %1052 = vmatmul.mubr.bf16.gmra.mrb[0].mxu0 %v740
        %v1053 = vpop.f32.mrb[0].mxu0
        %v1054 = vadd.f32 %v573, %v1053
        %v1055 = vpop.f32.mrb[0].mxu0
        %v1056 = vadd.f32 %v573, %v1055
        %v1057 = vpop.f32.mrb[0].mxu0
        %v1058 = vadd.f32 %v578, %v1057
        %v1059 = vpop.f32.mrb[0].mxu0
        %v1060 = vadd.f32 %v578, %v1059
        %1061 = vmatprep.mubr.bf16.mxu0 0
        %1062 = vmatmul.mubr.bf16.gmra.mrb[0].mxu0 %v741
        %v1063 = vpop.f32.mrb[0].mxu0
        %v1064 = vadd.f32 %v583, %v1063
        %v1065 = vpop.f32.mrb[0].mxu0
        %v1066 = vadd.f32 %v583, %v1065
        %v1067 = vpop.f32.mrb[0].mxu0
        %v1068 = vadd.f32 %v588, %v1067
        %v1069 = vpop.f32.mrb[0].mxu0
        %v1070 = vadd.f32 %v588, %v1069
        %1071 = vmatprep.mubr.bf16.mxu0 0
        %1072 = vmatmul.mubr.bf16.gmra.mrb[0].mxu0 %v742
        %v1073 = vpop.f32.mrb[0].mxu0
        %v1074 = vadd.f32 %v593, %v1073
        %v1075 = vpop.f32.mrb[0].mxu0
        %v1076 = vadd.f32 %v593, %v1075
        %v1077 = vpop.f32.mrb[0].mxu0
        %v1078 = vadd.f32 %v598, %v1077
        %v1079 = vpop.f32.mrb[0].mxu0
        %v1080 = vadd.f32 %v598, %v1079
        %1081 = vmatprep.mubr.bf16.mxu0 0
        %1082 = vmatmul.mubr.bf16.gmra.mrb[0].mxu0 %v743
        %v1083 = vpop.f32.mrb[0].mxu0
        %v1084 = vadd.f32 %v603, %v1083
        %v1085 = vpop.f32.mrb[0].mxu0
        %v1086 = vadd.f32 %v603, %v1085
        %v1087 = vpop.f32.mrb[0].mxu0
        %v1088 = vadd.f32 %v608, %v1087
        %v1089 = vpop.f32.mrb[0].mxu0
        %v1090 = vadd.f32 %v608, %v1089
        %1091 = vmatprep.mubr.bf16.mxu0 0
        %1092 = vmatmul.mubr.bf16.gmra.mrb[0].mxu0 %v744
        %v1093 = vpop.f32.mrb[0].mxu0
        %v1094 = vadd.f32 %v613, %v1093
        %v1095 = vpop.f32.mrb[0].mxu0
        %v1096 = vadd.f32 %v613, %v1095
        %v1097 = vpop.f32.mrb[0].mxu0
        %v1098 = vadd.f32 %v618, %v1097
        %v1099 = vpop.f32.mrb[0].mxu0
        %v1100 = vadd.f32 %v618, %v1099
        %1101 = vmatprep.mubr.bf16.mxu0 0
        %1102 = vmatmul.mubr.bf16.gmra.mrb[0].mxu0 %v745
        %v1103 = vpop.f32.mrb[0].mxu0
        %v1104 = vadd.f32 %v623, %v1103
        %v1105 = vpop.f32.mrb[0].mxu0
        %v1106 = vadd.f32 %v623, %v1105
        %v1107 = vpop.f32.mrb[0].mxu0
        %v1108 = vadd.f32 %v628, %v1107
        %v1109 = vpop.f32.mrb[0].mxu0
        %v1110 = vadd.f32 %v628, %v1109
        %1111 = vmatprep.mubr.bf16.mxu0 0
        %1112 = vmatmul.mubr.bf16.gmra.mrb[0].mxu0 %v746
        %v1113 = vpop.f32.mrb[0].mxu0
        %v1114 = vadd.f32 %v633, %v1113
        %v1115 = vpop.f32.mrb[0].mxu0
        %v1116 = vadd.f32 %v633, %v1115
        %v1117 = vpop.f32.mrb[0].mxu0
        %v1118 = vadd.f32 %v638, %v1117
        %v1119 = vpop.f32.mrb[0].mxu0
        %v1120 = vadd.f32 %v638, %v1119
        %1121 = vmatprep.mubr.bf16.mxu0 0
        %1122 = vmatmul.mubr.bf16.gmra.mrb[0].mxu0 %v747
        %v1123 = vpop.f32.mrb[0].mxu0
        %v1124 = vadd.f32 %v643, %v1123
        %v1125 = vpop.f32.mrb[0].mxu0
        %v1126 = vadd.f32 %v643, %v1125
        %v1127 = vpop.f32.mrb[0].mxu0
        %v1128 = vadd.f32 %v648, %v1127
        %v1129 = vpop.f32.mrb[0].mxu0
        %v1130 = vadd.f32 %v648, %v1129
        %1131 = vmatprep.mubr.bf16.mxu0 0
        %1132 = vmatmul.mubr.bf16.gmra.mrb[0].mxu0 %v748
        %v1133 = vpop.f32.mrb[0].mxu0
        %v1134 = vadd.f32 %v653, %v1133
        %v1135 = vpop.f32.mrb[0].mxu0
        %v1136 = vadd.f32 %v653, %v1135
        %v1137 = vpop.f32.mrb[0].mxu0
        %v1138 = vadd.f32 %v658, %v1137
        %v1139 = vpop.f32.mrb[0].mxu0
        %v1140 = vadd.f32 %v658, %v1139
        %1141 = vmatprep.mubr.bf16.mxu0 0
        %1142 = vmatmul.mubr.bf16.gmra.mrb[0].mxu0 %v749
        %v1143 = vpop.f32.mrb[0].mxu0
        %v1144 = vadd.f32 %v663, %v1143
        %v1145 = vpop.f32.mrb[0].mxu0
        %v1146 = vadd.f32 %v663, %v1145
        %v1147 = vpop.f32.mrb[0].mxu0
        %v1148 = vadd.f32 %v668, %v1147
        %v1149 = vpop.f32.mrb[0].mxu0
        %v1150 = vadd.f32 %v668, %v1149
        %1151 = vdwg.mxu0
        %v1152 = vmax.f32 %v801, 0.0
        %v1153 = vmax.f32 %v803, 0.0
        %v1154 = vmax.f32 %v994, 0.0
        %v1155 = vmax.f32 %v996, 0.0
        %v1156 = vmax.f32 %v805, 0.0
        %v1157 = vmax.f32 %v807, 0.0
        %v1158 = vmax.f32 %v998, 0.0
        %v1159 = vmax.f32 %v1000, 0.0
        %v1160 = vmax.f32 %v811, 0.0
        %v1161 = vmax.f32 %v813, 0.0
        %v1162 = vmax.f32 %v1004, 0.0
        %v1163 = vmax.f32 %v1006, 0.0
        %v1164 = vmax.f32 %v815, 0.0
        %v1165 = vmax.f32 %v817, 0.0
        %v1166 = vmax.f32 %v1008, 0.0
        %v1167 = vmax.f32 %v1010, 0.0
        %v1168 = vmax.f32 %v821, 0.0
        %v1169 = vmax.f32 %v823, 0.0
        %v1170 = vmax.f32 %v1014, 0.0
        %v1171 = vmax.f32 %v1016, 0.0
        %v1172 = vmax.f32 %v825, 0.0
        %v1173 = vmax.f32 %v827, 0.0
        %v1174 = vmax.f32 %v1018, 0.0
        %v1175 = vmax.f32 %v1020, 0.0
        %v1176 = vmax.f32 %v831, 0.0
        %v1177 = vmax.f32 %v833, 0.0
        %v1178 = vmax.f32 %v1024, 0.0
        %v1179 = vmax.f32 %v1026, 0.0
        %v1180 = vmax.f32 %v835, 0.0
        %v1181 = vmax.f32 %v837, 0.0
        %v1182 = vmax.f32 %v1028, 0.0
        %v1183 = vmax.f32 %v1030, 0.0
        %v1184 = vmax.f32 %v841, 0.0
        %v1185 = vmax.f32 %v843, 0.0
        %v1186 = vmax.f32 %v1034, 0.0
        %v1187 = vmax.f32 %v1036, 0.0
        %v1188 = vmax.f32 %v845, 0.0
        %v1189 = vmax.f32 %v847, 0.0
        %v1190 = vmax.f32 %v1038, 0.0
        %v1191 = vmax.f32 %v1040, 0.0
        %v1192 = vmax.f32 %v851, 0.0
        %v1193 = vmax.f32 %v853, 0.0
        %v1194 = vmax.f32 %v1044, 0.0
        %v1195 = vmax.f32 %v1046, 0.0
        %v1196 = vmax.f32 %v855, 0.0
        %v1197 = vmax.f32 %v857, 0.0
        %v1198 = vmax.f32 %v1048, 0.0
        %v1199 = vmax.f32 %v1050, 0.0
        %v1200 = vmax.f32 %v861, 0.0
        %v1201 = vmax.f32 %v863, 0.0
        %v1202 = vmax.f32 %v1054, 0.0
        %v1203 = vmax.f32 %v1056, 0.0
        %v1204 = vmax.f32 %v865, 0.0
        %v1205 = vmax.f32 %v867, 0.0
        %v1206 = vmax.f32 %v1058, 0.0
        %v1207 = vmax.f32 %v1060, 0.0
        %v1208 = vmax.f32 %v871, 0.0
        %v1209 = vmax.f32 %v873, 0.0
        %v1210 = vmax.f32 %v1064, 0.0
        %v1211 = vmax.f32 %v1066, 0.0
        %v1212 = vmax.f32 %v875, 0.0
        %v1213 = vmax.f32 %v877, 0.0
        %v1214 = vmax.f32 %v1068, 0.0
        %v1215 = vmax.f32 %v1070, 0.0
        %v1216 = vmax.f32 %v881, 0.0
        %v1217 = vmax.f32 %v883, 0.0
        %v1218 = vmax.f32 %v1074, 0.0
        %v1219 = vmax.f32 %v1076, 0.0
        %v1220 = vmax.f32 %v885, 0.0
        %v1221 = vmax.f32 %v887, 0.0
        %v1222 = vmax.f32 %v1078, 0.0
        %v1223 = vmax.f32 %v1080, 0.0
        %v1224 = vmax.f32 %v891, 0.0
        %v1225 = vmax.f32 %v893, 0.0
        %v1226 = vmax.f32 %v1084, 0.0
        %v1227 = vmax.f32 %v1086, 0.0
        %v1228 = vmax.f32 %v895, 0.0
        %v1229 = vmax.f32 %v897, 0.0
        %v1230 = vmax.f32 %v1088, 0.0
        %v1231 = vmax.f32 %v1090, 0.0
        %v1232 = vmax.f32 %v901, 0.0
        %v1233 = vmax.f32 %v903, 0.0
        %v1234 = vmax.f32 %v1094, 0.0
        %v1235 = vmax.f32 %v1096, 0.0
        %v1236 = vmax.f32 %v905, 0.0
        %v1237 = vmax.f32 %v907, 0.0
        %v1238 = vmax.f32 %v1098, 0.0
        %v1239 = vmax.f32 %v1100, 0.0
        %v1240 = vmax.f32 %v911, 0.0
        %v1241 = vmax.f32 %v913, 0.0
        %v1242 = vmax.f32 %v1104, 0.0
        %v1243 = vmax.f32 %v1106, 0.0
        %v1244 = vmax.f32 %v915, 0.0
        %v1245 = vmax.f32 %v917, 0.0
        %v1246 = vmax.f32 %v1108, 0.0
        %v1247 = vmax.f32 %v1110, 0.0
        %v1248 = vmax.f32 %v921, 0.0
        %v1249 = vmax.f32 %v923, 0.0
        %v1250 = vmax.f32 %v1114, 0.0
        %v1251 = vmax.f32 %v1116, 0.0
        %v1252 = vmax.f32 %v925, 0.0
        %v1253 = vmax.f32 %v927, 0.0
        %v1254 = vmax.f32 %v1118, 0.0
        %v1255 = vmax.f32 %v1120, 0.0
        %v1256 = vmax.f32 %v931, 0.0
        %v1257 = vmax.f32 %v933, 0.0
        %v1258 = vmax.f32 %v1124, 0.0
        %v1259 = vmax.f32 %v1126, 0.0
        %v1260 = vmax.f32 %v935, 0.0
        %v1261 = vmax.f32 %v937, 0.0
        %v1262 = vmax.f32 %v1128, 0.0
        %v1263 = vmax.f32 %v1130, 0.0
        %v1264 = vmax.f32 %v941, 0.0
        %v1265 = vmax.f32 %v943, 0.0
        %v1266 = vmax.f32 %v1134, 0.0
        %v1267 = vmax.f32 %v1136, 0.0
        %v1268 = vmax.f32 %v945, 0.0
        %v1269 = vmax.f32 %v947, 0.0
        %v1270 = vmax.f32 %v1138, 0.0
        %v1271 = vmax.f32 %v1140, 0.0
        %v1272 = vmax.f32 %v951, 0.0
        %v1273 = vmax.f32 %v953, 0.0
        %v1274 = vmax.f32 %v1144, 0.0
        %v1275 = vmax.f32 %v1146, 0.0
        %v1276 = vmax.f32 %v955, 0.0
        %v1277 = vmax.f32 %v957, 0.0
        %v1278 = vmax.f32 %v1148, 0.0
        %v1279 = vmax.f32 %v1150, 0.0
        %v1280 = vpack.c.bf16 %v1156, %v1152
        %v1281 = vpack.c.bf16 %v1157, %v1153
        %v1282 = vpack.c.bf16 %v1158, %v1154
        %v1283 = vpack.c.bf16 %v1159, %v1155
        %v1284 = vpack.c.bf16 %v1164, %v1160
        %v1285 = vpack.c.bf16 %v1165, %v1161
        %v1286 = vpack.c.bf16 %v1166, %v1162
        %v1287 = vpack.c.bf16 %v1167, %v1163
        %v1288 = vpack.c.bf16 %v1172, %v1168
        %v1289 = vpack.c.bf16 %v1173, %v1169
        %v1290 = vpack.c.bf16 %v1174, %v1170
        %v1291 = vpack.c.bf16 %v1175, %v1171
        %v1292 = vpack.c.bf16 %v1180, %v1176
        %v1293 = vpack.c.bf16 %v1181, %v1177
        %v1294 = vpack.c.bf16 %v1182, %v1178
        %v1295 = vpack.c.bf16 %v1183, %v1179
        %v1296 = vpack.c.bf16 %v1188, %v1184
        %v1297 = vpack.c.bf16 %v1189, %v1185
        %v1298 = vpack.c.bf16 %v1190, %v1186
        %v1299 = vpack.c.bf16 %v1191, %v1187
        %v1300 = vpack.c.bf16 %v1196, %v1192
        %v1301 = vpack.c.bf16 %v1197, %v1193
        %v1302 = vpack.c.bf16 %v1198, %v1194
        %v1303 = vpack.c.bf16 %v1199, %v1195
        %v1304 = vpack.c.bf16 %v1204, %v1200
        %v1305 = vpack.c.bf16 %v1205, %v1201
        %v1306 = vpack.c.bf16 %v1206, %v1202
        %v1307 = vpack.c.bf16 %v1207, %v1203
        %v1308 = vpack.c.bf16 %v1212, %v1208
        %v1309 = vpack.c.bf16 %v1213, %v1209
        %v1310 = vpack.c.bf16 %v1214, %v1210
        %v1311 = vpack.c.bf16 %v1215, %v1211
        %v1312 = vpack.c.bf16 %v1220, %v1216
        %v1313 = vpack.c.bf16 %v1221, %v1217
        %v1314 = vpack.c.bf16 %v1222, %v1218
        %v1315 = vpack.c.bf16 %v1223, %v1219
        %v1316 = vpack.c.bf16 %v1228, %v1224
        %v1317 = vpack.c.bf16 %v1229, %v1225
        %v1318 = vpack.c.bf16 %v1230, %v1226
        %v1319 = vpack.c.bf16 %v1231, %v1227
        %v1320 = vpack.c.bf16 %v1236, %v1232
        %v1321 = vpack.c.bf16 %v1237, %v1233
        %v1322 = vpack.c.bf16 %v1238, %v1234
        %v1323 = vpack.c.bf16 %v1239, %v1235
        %v1324 = vpack.c.bf16 %v1244, %v1240
        %v1325 = vpack.c.bf16 %v1245, %v1241
        %v1326 = vpack.c.bf16 %v1246, %v1242
        %v1327 = vpack.c.bf16 %v1247, %v1243
        %v1328 = vpack.c.bf16 %v1252, %v1248
        %v1329 = vpack.c.bf16 %v1253, %v1249
        %v1330 = vpack.c.bf16 %v1254, %v1250
        %v1331 = vpack.c.bf16 %v1255, %v1251
        %v1332 = vpack.c.bf16 %v1260, %v1256
        %v1333 = vpack.c.bf16 %v1261, %v1257
        %v1334 = vpack.c.bf16 %v1262, %v1258
        %v1335 = vpack.c.bf16 %v1263, %v1259
        %v1336 = vpack.c.bf16 %v1268, %v1264
        %v1337 = vpack.c.bf16 %v1269, %v1265
        %v1338 = vpack.c.bf16 %v1270, %v1266
        %v1339 = vpack.c.bf16 %v1271, %v1267
        %v1340 = vpack.c.bf16 %v1276, %v1272
        %v1341 = vpack.c.bf16 %v1277, %v1273
        %v1342 = vpack.c.bf16 %v1278, %v1274
        %v1343 = vpack.c.bf16 %v1279, %v1275
        %v1344 = vld [vmem:[%s3] sm:$0xff]
        %v1345 = vld [vmem:[%s3 + $0x8] sm:$0xff]
        %v1346 = vld [vmem:[%s3 + $0x10] sm:$0xff]
        %v1347 = vld [vmem:[%s3 + $0x18] sm:$0xff]
        %v1348 = vld [vmem:[%s3 + $0x20] sm:$0xff]
        %v1349 = vld [vmem:[%s3 + $0x28] sm:$0xff]
        %v1350 = vld [vmem:[%s3 + $0x30] sm:$0xff]
        %v1351 = vld [vmem:[%s3 + $0x38] sm:$0xff]
        %v1352 = vld [vmem:[%s3 + $0x40] sm:$0xff]
        %v1353 = vld [vmem:[%s3 + $0x48] sm:$0xff]
        %v1354 = vld [vmem:[%s3 + $0x50] sm:$0xff]
        %v1355 = vld [vmem:[%s3 + $0x58] sm:$0xff]
        %v1356 = vld [vmem:[%s3 + $0x60] sm:$0xff]
        %v1357 = vld [vmem:[%s3 + $0x68] sm:$0xff]
        %v1358 = vld [vmem:[%s3 + $0x70] sm:$0xff]
        %v1359 = vld [vmem:[%s3 + $0x78] sm:$0xff]
        %v1360 = vld [vmem:[%s3 + $0x80] sm:$0xff]
        %v1361 = vld [vmem:[%s3 + $0x88] sm:$0xff]
        %v1362 = vld [vmem:[%s3 + $0x90] sm:$0xff]
        %v1363 = vld [vmem:[%s3 + $0x98] sm:$0xff]
        %v1364 = vld [vmem:[%s3 + $0xa0] sm:$0xff]
        %v1365 = vld [vmem:[%s3 + $0xa8] sm:$0xff]
        %v1366 = vld [vmem:[%s3 + $0xb0] sm:$0xff]
        %v1367 = vld [vmem:[%s3 + $0xb8] sm:$0xff]
        %v1368 = vld [vmem:[%s3 + $0xc0] sm:$0xff]
        %v1369 = vld [vmem:[%s3 + $0xc8] sm:$0xff]
        %v1370 = vld [vmem:[%s3 + $0xd0] sm:$0xff]
        %v1371 = vld [vmem:[%s3 + $0xd8] sm:$0xff]
        %v1372 = vld [vmem:[%s3 + $0xe0] sm:$0xff]
        %v1373 = vld [vmem:[%s3 + $0xe8] sm:$0xff]
        %v1374 = vld [vmem:[%s3 + $0xf0] sm:$0xff]
        %v1375 = vld [vmem:[%s3 + $0xf8] sm:$0xff]
        %v1376 = vld [vmem:[%s4] sm:$0xff]
        %v1377 = vld [vmem:[%s4 + $0x8] sm:$0xff]
        %v1378 = vld [vmem:[%s4 + $0x10] sm:$0xff]
        %v1379 = vld [vmem:[%s4 + $0x18] sm:$0xff]
        %v1380 = vld [vmem:[%s4 + $0x20] sm:$0xff]
        %v1381 = vld [vmem:[%s4 + $0x28] sm:$0xff]
        %v1382 = vld [vmem:[%s4 + $0x30] sm:$0xff]
        %v1383 = vld [vmem:[%s4 + $0x38] sm:$0xff]
        %v1384 = vld [vmem:[%s4 + $0x40] sm:$0xff]
        %v1385 = vld [vmem:[%s4 + $0x48] sm:$0xff]
        %v1386 = vld [vmem:[%s4 + $0x50] sm:$0xff]
        %v1387 = vld [vmem:[%s4 + $0x58] sm:$0xff]
        %v1388 = vld [vmem:[%s4 + $0x60] sm:$0xff]
        %v1389 = vld [vmem:[%s4 + $0x68] sm:$0xff]
        %v1390 = vld [vmem:[%s4 + $0x70] sm:$0xff]
        %v1391 = vld [vmem:[%s4 + $0x78] sm:$0xff]
        %v1392 = vld [vmem:[%s4 + $0x80] sm:$0xff]
        %v1393 = vld [vmem:[%s4 + $0x88] sm:$0xff]
        %v1394 = vld [vmem:[%s4 + $0x90] sm:$0xff]
        %v1395 = vld [vmem:[%s4 + $0x98] sm:$0xff]
        %v1396 = vld [vmem:[%s4 + $0xa0] sm:$0xff]
        %v1397 = vld [vmem:[%s4 + $0xa8] sm:$0xff]
        %v1398 = vld [vmem:[%s4 + $0xb0] sm:$0xff]
        %v1399 = vld [vmem:[%s4 + $0xb8] sm:$0xff]
        %v1400 = vld [vmem:[%s4 + $0xc0] sm:$0xff]
        %v1401 = vld [vmem:[%s4 + $0xc8] sm:$0xff]
        %v1402 = vld [vmem:[%s4 + $0xd0] sm:$0xff]
        %v1403 = vld [vmem:[%s4 + $0xd8] sm:$0xff]
        %v1404 = vld [vmem:[%s4 + $0xe0] sm:$0xff]
        %v1405 = vld [vmem:[%s4 + $0xe8] sm:$0xff]
        %v1406 = vld [vmem:[%s4 + $0xf0] sm:$0xff]
        %v1407 = vld [vmem:[%s4 + $0xf8] sm:$0xff]
        %1409 = vset.pattern.permute.xlu0 0
        %1410 = vperm.xlu0 %1409, %v1376
        %v1411 = vpop.permute.xlu0 %1410
        %1414 = vset.pattern.permute.xlu0 0
        %1415 = vperm.xlu0 %1414, %v1377
        %v1416 = vpop.permute.xlu0 %1415
        %1419 = vset.pattern.permute.xlu0 0
        %1420 = vperm.xlu0 %1419, %v1378
        %v1421 = vpop.permute.xlu0 %1420
        %1424 = vset.pattern.permute.xlu0 0
        %1425 = vperm.xlu0 %1424, %v1379
        %v1426 = vpop.permute.xlu0 %1425
        %1429 = vset.pattern.permute.xlu0 0
        %1430 = vperm.xlu0 %1429, %v1380
        %v1431 = vpop.permute.xlu0 %1430
        %1434 = vset.pattern.permute.xlu0 0
        %1435 = vperm.xlu0 %1434, %v1381
        %v1436 = vpop.permute.xlu0 %1435
        %1439 = vset.pattern.permute.xlu0 0
        %1440 = vperm.xlu0 %1439, %v1382
        %v1441 = vpop.permute.xlu0 %1440
        %1444 = vset.pattern.permute.xlu0 0
        %1445 = vperm.xlu0 %1444, %v1383
        %v1446 = vpop.permute.xlu0 %1445
        %1449 = vset.pattern.permute.xlu0 0
        %1450 = vperm.xlu0 %1449, %v1384
        %v1451 = vpop.permute.xlu0 %1450
        %1454 = vset.pattern.permute.xlu0 0
        %1455 = vperm.xlu0 %1454, %v1385
        %v1456 = vpop.permute.xlu0 %1455
        %1459 = vset.pattern.permute.xlu0 0
        %1460 = vperm.xlu0 %1459, %v1386
        %v1461 = vpop.permute.xlu0 %1460
        %1464 = vset.pattern.permute.xlu0 0
        %1465 = vperm.xlu0 %1464, %v1387
        %v1466 = vpop.permute.xlu0 %1465
        %1469 = vset.pattern.permute.xlu0 0
        %1470 = vperm.xlu0 %1469, %v1388
        %v1471 = vpop.permute.xlu0 %1470
        %1474 = vset.pattern.permute.xlu0 0
        %1475 = vperm.xlu0 %1474, %v1389
        %v1476 = vpop.permute.xlu0 %1475
        %1479 = vset.pattern.permute.xlu0 0
        %1480 = vperm.xlu0 %1479, %v1390
        %v1481 = vpop.permute.xlu0 %1480
        %1484 = vset.pattern.permute.xlu0 0
        %1485 = vperm.xlu0 %1484, %v1391
        %v1486 = vpop.permute.xlu0 %1485
        %1489 = vset.pattern.permute.xlu0 0
        %1490 = vperm.xlu0 %1489, %v1392
        %v1491 = vpop.permute.xlu0 %1490
        %1494 = vset.pattern.permute.xlu0 0
        %1495 = vperm.xlu0 %1494, %v1393
        %v1496 = vpop.permute.xlu0 %1495
        %1499 = vset.pattern.permute.xlu0 0
        %1500 = vperm.xlu0 %1499, %v1394
        %v1501 = vpop.permute.xlu0 %1500
        %1504 = vset.pattern.permute.xlu0 0
        %1505 = vperm.xlu0 %1504, %v1395
        %v1506 = vpop.permute.xlu0 %1505
        %1509 = vset.pattern.permute.xlu0 0
        %1510 = vperm.xlu0 %1509, %v1396
        %v1511 = vpop.permute.xlu0 %1510
        %1514 = vset.pattern.permute.xlu0 0
        %1515 = vperm.xlu0 %1514, %v1397
        %v1516 = vpop.permute.xlu0 %1515
        %1519 = vset.pattern.permute.xlu0 0
        %1520 = vperm.xlu0 %1519, %v1398
        %v1521 = vpop.permute.xlu0 %1520
        %1524 = vset.pattern.permute.xlu0 0
        %1525 = vperm.xlu0 %1524, %v1399
        %v1526 = vpop.permute.xlu0 %1525
        %1529 = vset.pattern.permute.xlu0 0
        %1530 = vperm.xlu0 %1529, %v1400
        %v1531 = vpop.permute.xlu0 %1530
        %1534 = vset.pattern.permute.xlu0 0
        %1535 = vperm.xlu0 %1534, %v1401
        %v1536 = vpop.permute.xlu0 %1535
        %1539 = vset.pattern.permute.xlu0 0
        %1540 = vperm.xlu0 %1539, %v1402
        %v1541 = vpop.permute.xlu0 %1540
        %1544 = vset.pattern.permute.xlu0 0
        %1545 = vperm.xlu0 %1544, %v1403
        %v1546 = vpop.permute.xlu0 %1545
        %1549 = vset.pattern.permute.xlu0 0
        %1550 = vperm.xlu0 %1549, %v1404
        %v1551 = vpop.permute.xlu0 %1550
        %1554 = vset.pattern.permute.xlu0 0
        %1555 = vperm.xlu0 %1554, %v1405
        %v1556 = vpop.permute.xlu0 %1555
        %1559 = vset.pattern.permute.xlu0 0
        %1560 = vperm.xlu0 %1559, %v1406
        %v1561 = vpop.permute.xlu0 %1560
        %1564 = vset.pattern.permute.xlu0 0
        %1565 = vperm.xlu0 %1564, %v1407
        %v1566 = vpop.permute.xlu0 %1565
        %v1600 = vunpack.c.l.b16 %v1344
        %v1601 = vunpack.c.h.b16 %v1344
        %v1602 = vunpack.c.l.b16 %v1345
        %v1603 = vunpack.c.h.b16 %v1345
        %v1604 = vunpack.c.l.b16 %v1346
        %v1605 = vunpack.c.h.b16 %v1346
        %v1606 = vunpack.c.l.b16 %v1347
        %v1607 = vunpack.c.h.b16 %v1347
        %v1608 = vunpack.c.l.b16 %v1348
        %v1609 = vunpack.c.h.b16 %v1348
        %v1610 = vunpack.c.l.b16 %v1349
        %v1611 = vunpack.c.h.b16 %v1349
        %v1612 = vunpack.c.l.b16 %v1350
        %v1613 = vunpack.c.h.b16 %v1350
        %v1614 = vunpack.c.l.b16 %v1351
        %v1615 = vunpack.c.h.b16 %v1351
        %v1616 = vunpack.c.l.b16 %v1352
        %v1617 = vunpack.c.h.b16 %v1352
        %v1618 = vunpack.c.l.b16 %v1353
        %v1619 = vunpack.c.h.b16 %v1353
        %v1620 = vunpack.c.l.b16 %v1354
        %v1621 = vunpack.c.h.b16 %v1354
        %v1622 = vunpack.c.l.b16 %v1355
        %v1623 = vunpack.c.h.b16 %v1355
        %v1624 = vunpack.c.l.b16 %v1356
        %v1625 = vunpack.c.h.b16 %v1356
        %v1626 = vunpack.c.l.b16 %v1357
        %v1627 = vunpack.c.h.b16 %v1357
        %v1628 = vunpack.c.l.b16 %v1358
        %v1629 = vunpack.c.h.b16 %v1358
        %v1630 = vunpack.c.l.b16 %v1359
        %v1631 = vunpack.c.h.b16 %v1359
        %v1632 = vunpack.c.l.b16 %v1360
        %v1633 = vunpack.c.h.b16 %v1360
        %v1634 = vunpack.c.l.b16 %v1361
        %v1635 = vunpack.c.h.b16 %v1361
        %v1636 = vunpack.c.l.b16 %v1362
        %v1637 = vunpack.c.h.b16 %v1362
        %v1638 = vunpack.c.l.b16 %v1363
        %v1639 = vunpack.c.h.b16 %v1363
        %v1640 = vunpack.c.l.b16 %v1364
        %v1641 = vunpack.c.h.b16 %v1364
        %v1642 = vunpack.c.l.b16 %v1365
        %v1643 = vunpack.c.h.b16 %v1365
        %v1644 = vunpack.c.l.b16 %v1366
        %v1645 = vunpack.c.h.b16 %v1366
        %v1646 = vunpack.c.l.b16 %v1367
        %v1647 = vunpack.c.h.b16 %v1367
        %v1648 = vunpack.c.l.b16 %v1368
        %v1649 = vunpack.c.h.b16 %v1368
        %v1650 = vunpack.c.l.b16 %v1369
        %v1651 = vunpack.c.h.b16 %v1369
        %v1652 = vunpack.c.l.b16 %v1370
        %v1653 = vunpack.c.h.b16 %v1370
        %v1654 = vunpack.c.l.b16 %v1371
        %v1655 = vunpack.c.h.b16 %v1371
        %v1656 = vunpack.c.l.b16 %v1372
        %v1657 = vunpack.c.h.b16 %v1372
        %v1658 = vunpack.c.l.b16 %v1373
        %v1659 = vunpack.c.h.b16 %v1373
        %v1660 = vunpack.c.l.b16 %v1374
        %v1661 = vunpack.c.h.b16 %v1374
        %v1662 = vunpack.c.l.b16 %v1375
        %v1663 = vunpack.c.h.b16 %v1375
        %v1664 = vpack.c.b16 %v1602, %v1600
        %v1665 = vpack.c.b16 %v1603, %v1601
        %v1666 = vpack.c.b16 %v1606, %v1604
        %v1667 = vpack.c.b16 %v1607, %v1605
        %v1668 = vpack.c.b16 %v1610, %v1608
        %v1669 = vpack.c.b16 %v1611, %v1609
        %v1670 = vpack.c.b16 %v1614, %v1612
        %v1671 = vpack.c.b16 %v1615, %v1613
        %v1672 = vpack.c.b16 %v1618, %v1616
        %v1673 = vpack.c.b16 %v1619, %v1617
        %v1674 = vpack.c.b16 %v1622, %v1620
        %v1675 = vpack.c.b16 %v1623, %v1621
        %v1676 = vpack.c.b16 %v1626, %v1624
        %v1677 = vpack.c.b16 %v1627, %v1625
        %v1678 = vpack.c.b16 %v1630, %v1628
        %v1679 = vpack.c.b16 %v1631, %v1629
        %v1680 = vpack.c.b16 %v1634, %v1632
        %v1681 = vpack.c.b16 %v1635, %v1633
        %v1682 = vpack.c.b16 %v1638, %v1636
        %v1683 = vpack.c.b16 %v1639, %v1637
        %v1684 = vpack.c.b16 %v1642, %v1640
        %v1685 = vpack.c.b16 %v1643, %v1641
        %v1686 = vpack.c.b16 %v1646, %v1644
        %v1687 = vpack.c.b16 %v1647, %v1645
        %v1688 = vpack.c.b16 %v1650, %v1648
        %v1689 = vpack.c.b16 %v1651, %v1649
        %v1690 = vpack.c.b16 %v1654, %v1652
        %v1691 = vpack.c.b16 %v1655, %v1653
        %v1692 = vpack.c.b16 %v1658, %v1656
        %v1693 = vpack.c.b16 %v1659, %v1657
        %v1694 = vpack.c.b16 %v1662, %v1660
        %v1695 = vpack.c.b16 %v1663, %v1661
        %1728 = vmatprep.subr.bf16.mxu0 %v1281
        %1729 = vmatpush1.bf16.msra.mxu0 %v1280
        %1730 = vmatprep.subr.bf16.mxu0 %v1285
        %1731 = vmatpush1.bf16.msra.mxu0 %v1284
        %1732 = vmatprep.subr.bf16.mxu0 %v1289
        %1733 = vmatpush1.bf16.msra.mxu0 %v1288
        %1734 = vmatprep.subr.bf16.mxu0 %v1293
        %1735 = vmatpush1.bf16.msra.mxu0 %v1292
        %1736 = vmatprep.subr.bf16.mxu0 %v1297
        %1737 = vmatpush1.bf16.msra.mxu0 %v1296
        %1738 = vmatprep.subr.bf16.mxu0 %v1301
        %1739 = vmatpush1.bf16.msra.mxu0 %v1300
        %1740 = vmatprep.subr.bf16.mxu0 %v1305
        %1741 = vmatpush1.bf16.msra.mxu0 %v1304
        %1742 = vmatprep.subr.bf16.mxu0 %v1309
        %1743 = vmatpush1.bf16.msra.mxu0 %v1308
        %1744 = vmatprep.subr.bf16.mxu0 %v1313
        %1745 = vmatpush1.bf16.msra.mxu0 %v1312
        %1746 = vmatprep.subr.bf16.mxu0 %v1317
        %1747 = vmatpush1.bf16.msra.mxu0 %v1316
        %1748 = vmatprep.subr.bf16.mxu0 %v1321
        %1749 = vmatpush1.bf16.msra.mxu0 %v1320
        %1750 = vmatprep.subr.bf16.mxu0 %v1325
        %1751 = vmatpush1.bf16.msra.mxu0 %v1324
        %1752 = vmatprep.subr.bf16.mxu0 %v1329
        %1753 = vmatpush1.bf16.msra.mxu0 %v1328
        %1754 = vmatprep.subr.bf16.mxu0 %v1333
        %1755 = vmatpush1.bf16.msra.mxu0 %v1332
        %1756 = vmatprep.subr.bf16.mxu0 %v1337
        %1757 = vmatpush1.bf16.msra.mxu0 %v1336
        %1758 = vmatprep.subr.bf16.mxu0 %v1341
        %1759 = vmatpush1.bf16.msra.mxu0 %v1340
        %1760 = vmatprep.mubr.bf16.mxu0 %v1665
        %1761 = vmatmul.mubr.bf16.gmra.mrb[0].mxu0 %v1664
        %v1762 = vpop.f32.mrb[0].mxu0
        %v1763 = vadd.f32 %v1411, %v1762
        %v1764 = vpop.f32.mrb[0].mxu0
        %v1765 = vadd.f32 %v1411, %v1764
        %v1766 = vpop.f32.mrb[0].mxu0
        %v1767 = vadd.f32 %v1416, %v1766
        %v1768 = vpop.f32.mrb[0].mxu0
        %v1769 = vadd.f32 %v1416, %v1768
        %1770 = vmatprep.mubr.bf16.mxu0 %v1667
        %1771 = vmatmul.mubr.bf16.gmra.mrb[0].mxu0 %v1666
        %v1772 = vpop.f32.mrb[0].mxu0
        %v1773 = vadd.f32 %v1421, %v1772
        %v1774 = vpop.f32.mrb[0].mxu0
        %v1775 = vadd.f32 %v1421, %v1774
        %v1776 = vpop.f32.mrb[0].mxu0
        %v1777 = vadd.f32 %v1426, %v1776
        %v1778 = vpop.f32.mrb[0].mxu0
        %v1779 = vadd.f32 %v1426, %v1778
        %1780 = vmatprep.mubr.bf16.mxu0 %v1669
        %1781 = vmatmul.mubr.bf16.gmra.mrb[0].mxu0 %v1668
        %v1782 = vpop.f32.mrb[0].mxu0
        %v1783 = vadd.f32 %v1431, %v1782
        %v1784 = vpop.f32.mrb[0].mxu0
        %v1785 = vadd.f32 %v1431, %v1784
        %v1786 = vpop.f32.mrb[0].mxu0
        %v1787 = vadd.f32 %v1436, %v1786
        %v1788 = vpop.f32.mrb[0].mxu0
        %v1789 = vadd.f32 %v1436, %v1788
        %1790 = vmatprep.mubr.bf16.mxu0 %v1671
        %1791 = vmatmul.mubr.bf16.gmra.mrb[0].mxu0 %v1670
        %v1792 = vpop.f32.mrb[0].mxu0
        %v1793 = vadd.f32 %v1441, %v1792
        %v1794 = vpop.f32.mrb[0].mxu0
        %v1795 = vadd.f32 %v1441, %v1794
        %v1796 = vpop.f32.mrb[0].mxu0
        %v1797 = vadd.f32 %v1446, %v1796
        %v1798 = vpop.f32.mrb[0].mxu0
        %v1799 = vadd.f32 %v1446, %v1798
        %1800 = vmatprep.mubr.bf16.mxu0 %v1673
        %1801 = vmatmul.mubr.bf16.gmra.mrb[0].mxu0 %v1672
        %v1802 = vpop.f32.mrb[0].mxu0
        %v1803 = vadd.f32 %v1451, %v1802
        %v1804 = vpop.f32.mrb[0].mxu0
        %v1805 = vadd.f32 %v1451, %v1804
        %v1806 = vpop.f32.mrb[0].mxu0
        %v1807 = vadd.f32 %v1456, %v1806
        %v1808 = vpop.f32.mrb[0].mxu0
        %v1809 = vadd.f32 %v1456, %v1808
        %1810 = vmatprep.mubr.bf16.mxu0 %v1675
        %1811 = vmatmul.mubr.bf16.gmra.mrb[0].mxu0 %v1674
        %v1812 = vpop.f32.mrb[0].mxu0
        %v1813 = vadd.f32 %v1461, %v1812
        %v1814 = vpop.f32.mrb[0].mxu0
        %v1815 = vadd.f32 %v1461, %v1814
        %v1816 = vpop.f32.mrb[0].mxu0
        %v1817 = vadd.f32 %v1466, %v1816
        %v1818 = vpop.f32.mrb[0].mxu0
        %v1819 = vadd.f32 %v1466, %v1818
        %1820 = vmatprep.mubr.bf16.mxu0 %v1677
        %1821 = vmatmul.mubr.bf16.gmra.mrb[0].mxu0 %v1676
        %v1822 = vpop.f32.mrb[0].mxu0
        %v1823 = vadd.f32 %v1471, %v1822
        %v1824 = vpop.f32.mrb[0].mxu0
        %v1825 = vadd.f32 %v1471, %v1824
        %v1826 = vpop.f32.mrb[0].mxu0
        %v1827 = vadd.f32 %v1476, %v1826
        %v1828 = vpop.f32.mrb[0].mxu0
        %v1829 = vadd.f32 %v1476, %v1828
        %1830 = vmatprep.mubr.bf16.mxu0 %v1679
        %1831 = vmatmul.mubr.bf16.gmra.mrb[0].mxu0 %v1678
        %v1832 = vpop.f32.mrb[0].mxu0
        %v1833 = vadd.f32 %v1481, %v1832
        %v1834 = vpop.f32.mrb[0].mxu0
        %v1835 = vadd.f32 %v1481, %v1834
        %v1836 = vpop.f32.mrb[0].mxu0
        %v1837 = vadd.f32 %v1486, %v1836
        %v1838 = vpop.f32.mrb[0].mxu0
        %v1839 = vadd.f32 %v1486, %v1838
        %1840 = vmatprep.mubr.bf16.mxu0 %v1681
        %1841 = vmatmul.mubr.bf16.gmra.mrb[0].mxu0 %v1680
        %v1842 = vpop.f32.mrb[0].mxu0
        %v1843 = vadd.f32 %v1491, %v1842
        %v1844 = vpop.f32.mrb[0].mxu0
        %v1845 = vadd.f32 %v1491, %v1844
        %v1846 = vpop.f32.mrb[0].mxu0
        %v1847 = vadd.f32 %v1496, %v1846
        %v1848 = vpop.f32.mrb[0].mxu0
        %v1849 = vadd.f32 %v1496, %v1848
        %1850 = vmatprep.mubr.bf16.mxu0 %v1683
        %1851 = vmatmul.mubr.bf16.gmra.mrb[0].mxu0 %v1682
        %v1852 = vpop.f32.mrb[0].mxu0
        %v1853 = vadd.f32 %v1501, %v1852
        %v1854 = vpop.f32.mrb[0].mxu0
        %v1855 = vadd.f32 %v1501, %v1854
        %v1856 = vpop.f32.mrb[0].mxu0
        %v1857 = vadd.f32 %v1506, %v1856
        %v1858 = vpop.f32.mrb[0].mxu0
        %v1859 = vadd.f32 %v1506, %v1858
        %1860 = vmatprep.mubr.bf16.mxu0 %v1685
        %1861 = vmatmul.mubr.bf16.gmra.mrb[0].mxu0 %v1684
        %v1862 = vpop.f32.mrb[0].mxu0
        %v1863 = vadd.f32 %v1511, %v1862
        %v1864 = vpop.f32.mrb[0].mxu0
        %v1865 = vadd.f32 %v1511, %v1864
        %v1866 = vpop.f32.mrb[0].mxu0
        %v1867 = vadd.f32 %v1516, %v1866
        %v1868 = vpop.f32.mrb[0].mxu0
        %v1869 = vadd.f32 %v1516, %v1868
        %1870 = vmatprep.mubr.bf16.mxu0 %v1687
        %1871 = vmatmul.mubr.bf16.gmra.mrb[0].mxu0 %v1686
        %v1872 = vpop.f32.mrb[0].mxu0
        %v1873 = vadd.f32 %v1521, %v1872
        %v1874 = vpop.f32.mrb[0].mxu0
        %v1875 = vadd.f32 %v1521, %v1874
        %v1876 = vpop.f32.mrb[0].mxu0
        %v1877 = vadd.f32 %v1526, %v1876
        %v1878 = vpop.f32.mrb[0].mxu0
        %v1879 = vadd.f32 %v1526, %v1878
        %1880 = vmatprep.mubr.bf16.mxu0 %v1689
        %1881 = vmatmul.mubr.bf16.gmra.mrb[0].mxu0 %v1688
        %v1882 = vpop.f32.mrb[0].mxu0
        %v1883 = vadd.f32 %v1531, %v1882
        %v1884 = vpop.f32.mrb[0].mxu0
        %v1885 = vadd.f32 %v1531, %v1884
        %v1886 = vpop.f32.mrb[0].mxu0
        %v1887 = vadd.f32 %v1536, %v1886
        %v1888 = vpop.f32.mrb[0].mxu0
        %v1889 = vadd.f32 %v1536, %v1888
        %1890 = vmatprep.mubr.bf16.mxu0 %v1691
        %1891 = vmatmul.mubr.bf16.gmra.mrb[0].mxu0 %v1690
        %v1892 = vpop.f32.mrb[0].mxu0
        %v1893 = vadd.f32 %v1541, %v1892
        %v1894 = vpop.f32.mrb[0].mxu0
        %v1895 = vadd.f32 %v1541, %v1894
        %v1896 = vpop.f32.mrb[0].mxu0
        %v1897 = vadd.f32 %v1546, %v1896
        %v1898 = vpop.f32.mrb[0].mxu0
        %v1899 = vadd.f32 %v1546, %v1898
        %1900 = vmatprep.mubr.bf16.mxu0 %v1693
        %1901 = vmatmul.mubr.bf16.gmra.mrb[0].mxu0 %v1692
        %v1902 = vpop.f32.mrb[0].mxu0
        %v1903 = vadd.f32 %v1551, %v1902
        %v1904 = vpop.f32.mrb[0].mxu0
        %v1905 = vadd.f32 %v1551, %v1904
        %v1906 = vpop.f32.mrb[0].mxu0
        %v1907 = vadd.f32 %v1556, %v1906
        %v1908 = vpop.f32.mrb[0].mxu0
        %v1909 = vadd.f32 %v1556, %v1908
        %1910 = vmatprep.mubr.bf16.mxu0 %v1695
        %1911 = vmatmul.mubr.bf16.gmra.mrb[0].mxu0 %v1694
        %v1912 = vpop.f32.mrb[0].mxu0
        %v1913 = vadd.f32 %v1561, %v1912
        %v1914 = vpop.f32.mrb[0].mxu0
        %v1915 = vadd.f32 %v1561, %v1914
        %v1916 = vpop.f32.mrb[0].mxu0
        %v1917 = vadd.f32 %v1566, %v1916
        %v1918 = vpop.f32.mrb[0].mxu0
        %v1919 = vadd.f32 %v1566, %v1918
        %1920 = vdwg.mxu0
        %1921 = vmatprep.subr.bf16.mxu0 %v1283
        %1922 = vmatpush1.bf16.msra.mxu0 %v1282
        %1923 = vmatprep.subr.bf16.mxu0 %v1287
        %1924 = vmatpush1.bf16.msra.mxu0 %v1286
        %1925 = vmatprep.subr.bf16.mxu0 %v1291
        %1926 = vmatpush1.bf16.msra.mxu0 %v1290
        %1927 = vmatprep.subr.bf16.mxu0 %v1295
        %1928 = vmatpush1.bf16.msra.mxu0 %v1294
        %1929 = vmatprep.subr.bf16.mxu0 %v1299
        %1930 = vmatpush1.bf16.msra.mxu0 %v1298
        %1931 = vmatprep.subr.bf16.mxu0 %v1303
        %1932 = vmatpush1.bf16.msra.mxu0 %v1302
        %1933 = vmatprep.subr.bf16.mxu0 %v1307
        %1934 = vmatpush1.bf16.msra.mxu0 %v1306
        %1935 = vmatprep.subr.bf16.mxu0 %v1311
        %1936 = vmatpush1.bf16.msra.mxu0 %v1310
        %1937 = vmatprep.subr.bf16.mxu0 %v1315
        %1938 = vmatpush1.bf16.msra.mxu0 %v1314
        %1939 = vmatprep.subr.bf16.mxu0 %v1319
        %1940 = vmatpush1.bf16.msra.mxu0 %v1318
        %1941 = vmatprep.subr.bf16.mxu0 %v1323
        %1942 = vmatpush1.bf16.msra.mxu0 %v1322
        %1943 = vmatprep.subr.bf16.mxu0 %v1327
        %1944 = vmatpush1.bf16.msra.mxu0 %v1326
        %1945 = vmatprep.subr.bf16.mxu0 %v1331
        %1946 = vmatpush1.bf16.msra.mxu0 %v1330
        %1947 = vmatprep.subr.bf16.mxu0 %v1335
        %1948 = vmatpush1.bf16.msra.mxu0 %v1334
        %1949 = vmatprep.subr.bf16.mxu0 %v1339
        %1950 = vmatpush1.bf16.msra.mxu0 %v1338
        %1951 = vmatprep.subr.bf16.mxu0 %v1343
        %1952 = vmatpush1.bf16.msra.mxu0 %v1342
        %1953 = vmatprep.mubr.bf16.mxu0 %v1665
        %1954 = vmatmul.mubr.bf16.gmra.mrb[0].mxu0 %v1664
        %v1955 = vpop.f32.mrb[0].mxu0
        %v1956 = vadd.f32 %v1411, %v1955
        %v1957 = vpop.f32.mrb[0].mxu0
        %v1958 = vadd.f32 %v1411, %v1957
        %v1959 = vpop.f32.mrb[0].mxu0
        %v1960 = vadd.f32 %v1416, %v1959
        %v1961 = vpop.f32.mrb[0].mxu0
        %v1962 = vadd.f32 %v1416, %v1961
        %1963 = vmatprep.mubr.bf16.mxu0 %v1667
        %1964 = vmatmul.mubr.bf16.gmra.mrb[0].mxu0 %v1666
        %v1965 = vpop.f32.mrb[0].mxu0
        %v1966 = vadd.f32 %v1421, %v1965
        %v1967 = vpop.f32.mrb[0].mxu0
        %v1968 = vadd.f32 %v1421, %v1967
        %v1969 = vpop.f32.mrb[0].mxu0
        %v1970 = vadd.f32 %v1426, %v1969
        %v1971 = vpop.f32.mrb[0].mxu0
        %v1972 = vadd.f32 %v1426, %v1971
        %1973 = vmatprep.mubr.bf16.mxu0 %v1669
        %1974 = vmatmul.mubr.bf16.gmra.mrb[0].mxu0 %v1668
        %v1975 = vpop.f32.mrb[0].mxu0
        %v1976 = vadd.f32 %v1431, %v1975
        %v1977 = vpop.f32.mrb[0].mxu0
        %v1978 = vadd.f32 %v1431, %v1977
        %v1979 = vpop.f32.mrb[0].mxu0
        %v1980 = vadd.f32 %v1436, %v1979
        %v1981 = vpop.f32.mrb[0].mxu0
        %v1982 = vadd.f32 %v1436, %v1981
        %1983 = vmatprep.mubr.bf16.mxu0 %v1671
        %1984 = vmatmul.mubr.bf16.gmra.mrb[0].mxu0 %v1670
        %v1985 = vpop.f32.mrb[0].mxu0
        %v1986 = vadd.f32 %v1441, %v1985
        %v1987 = vpop.f32.mrb[0].mxu0
        %v1988 = vadd.f32 %v1441, %v1987
        %v1989 = vpop.f32.mrb[0].mxu0
        %v1990 = vadd.f32 %v1446, %v1989
        %v1991 = vpop.f32.mrb[0].mxu0
        %v1992 = vadd.f32 %v1446, %v1991
        %1993 = vmatprep.mubr.bf16.mxu0 %v1673
        %1994 = vmatmul.mubr.bf16.gmra.mrb[0].mxu0 %v1672
        %v1995 = vpop.f32.mrb[0].mxu0
        %v1996 = vadd.f32 %v1451, %v1995
        %v1997 = vpop.f32.mrb[0].mxu0
        %v1998 = vadd.f32 %v1451, %v1997
        %v1999 = vpop.f32.mrb[0].mxu0
        %v2000 = vadd.f32 %v1456, %v1999
        %v2001 = vpop.f32.mrb[0].mxu0
        %v2002 = vadd.f32 %v1456, %v2001
        %2003 = vmatprep.mubr.bf16.mxu0 %v1675
        %2004 = vmatmul.mubr.bf16.gmra.mrb[0].mxu0 %v1674
        %v2005 = vpop.f32.mrb[0].mxu0
        %v2006 = vadd.f32 %v1461, %v2005
        %v2007 = vpop.f32.mrb[0].mxu0
        %v2008 = vadd.f32 %v1461, %v2007
        %v2009 = vpop.f32.mrb[0].mxu0
        %v2010 = vadd.f32 %v1466, %v2009
        %v2011 = vpop.f32.mrb[0].mxu0
        %v2012 = vadd.f32 %v1466, %v2011
        %2013 = vmatprep.mubr.bf16.mxu0 %v1677
        %2014 = vmatmul.mubr.bf16.gmra.mrb[0].mxu0 %v1676
        %v2015 = vpop.f32.mrb[0].mxu0
        %v2016 = vadd.f32 %v1471, %v2015
        %v2017 = vpop.f32.mrb[0].mxu0
        %v2018 = vadd.f32 %v1471, %v2017
        %v2019 = vpop.f32.mrb[0].mxu0
        %v2020 = vadd.f32 %v1476, %v2019
        %v2021 = vpop.f32.mrb[0].mxu0
        %v2022 = vadd.f32 %v1476, %v2021
        %2023 = vmatprep.mubr.bf16.mxu0 %v1679
        %2024 = vmatmul.mubr.bf16.gmra.mrb[0].mxu0 %v1678
        %v2025 = vpop.f32.mrb[0].mxu0
        %v2026 = vadd.f32 %v1481, %v2025
        %v2027 = vpop.f32.mrb[0].mxu0
        %v2028 = vadd.f32 %v1481, %v2027
        %v2029 = vpop.f32.mrb[0].mxu0
        %v2030 = vadd.f32 %v1486, %v2029
        %v2031 = vpop.f32.mrb[0].mxu0
        %v2032 = vadd.f32 %v1486, %v2031
        %2033 = vmatprep.mubr.bf16.mxu0 %v1681
        %2034 = vmatmul.mubr.bf16.gmra.mrb[0].mxu0 %v1680
        %v2035 = vpop.f32.mrb[0].mxu0
        %v2036 = vadd.f32 %v1491, %v2035
        %v2037 = vpop.f32.mrb[0].mxu0
        %v2038 = vadd.f32 %v1491, %v2037
        %v2039 = vpop.f32.mrb[0].mxu0
        %v2040 = vadd.f32 %v1496, %v2039
        %v2041 = vpop.f32.mrb[0].mxu0
        %v2042 = vadd.f32 %v1496, %v2041
        %2043 = vmatprep.mubr.bf16.mxu0 %v1683
        %2044 = vmatmul.mubr.bf16.gmra.mrb[0].mxu0 %v1682
        %v2045 = vpop.f32.mrb[0].mxu0
        %v2046 = vadd.f32 %v1501, %v2045
        %v2047 = vpop.f32.mrb[0].mxu0
        %v2048 = vadd.f32 %v1501, %v2047
        %v2049 = vpop.f32.mrb[0].mxu0
        %v2050 = vadd.f32 %v1506, %v2049
        %v2051 = vpop.f32.mrb[0].mxu0
        %v2052 = vadd.f32 %v1506, %v2051
        %2053 = vmatprep.mubr.bf16.mxu0 %v1685
        %2054 = vmatmul.mubr.bf16.gmra.mrb[0].mxu0 %v1684
        %v2055 = vpop.f32.mrb[0].mxu0
        %v2056 = vadd.f32 %v1511, %v2055
        %v2057 = vpop.f32.mrb[0].mxu0
        %v2058 = vadd.f32 %v1511, %v2057
        %v2059 = vpop.f32.mrb[0].mxu0
        %v2060 = vadd.f32 %v1516, %v2059
        %v2061 = vpop.f32.mrb[0].mxu0
        %v2062 = vadd.f32 %v1516, %v2061
        %2063 = vmatprep.mubr.bf16.mxu0 %v1687
        %2064 = vmatmul.mubr.bf16.gmra.mrb[0].mxu0 %v1686
        %v2065 = vpop.f32.mrb[0].mxu0
        %v2066 = vadd.f32 %v1521, %v2065
        %v2067 = vpop.f32.mrb[0].mxu0
        %v2068 = vadd.f32 %v1521, %v2067
        %v2069 = vpop.f32.mrb[0].mxu0
        %v2070 = vadd.f32 %v1526, %v2069
        %v2071 = vpop.f32.mrb[0].mxu0
        %v2072 = vadd.f32 %v1526, %v2071
        %2073 = vmatprep.mubr.bf16.mxu0 %v1689
        %2074 = vmatmul.mubr.bf16.gmra.mrb[0].mxu0 %v1688
        %v2075 = vpop.f32.mrb[0].mxu0
        %v2076 = vadd.f32 %v1531, %v2075
        %v2077 = vpop.f32.mrb[0].mxu0
        %v2078 = vadd.f32 %v1531, %v2077
        %v2079 = vpop.f32.mrb[0].mxu0
        %v2080 = vadd.f32 %v1536, %v2079
        %v2081 = vpop.f32.mrb[0].mxu0
        %v2082 = vadd.f32 %v1536, %v2081
        %2083 = vmatprep.mubr.bf16.mxu0 %v1691
        %2084 = vmatmul.mubr.bf16.gmra.mrb[0].mxu0 %v1690
        %v2085 = vpop.f32.mrb[0].mxu0
        %v2086 = vadd.f32 %v1541, %v2085
        %v2087 = vpop.f32.mrb[0].mxu0
        %v2088 = vadd.f32 %v1541, %v2087
        %v2089 = vpop.f32.mrb[0].mxu0
        %v2090 = vadd.f32 %v1546, %v2089
        %v2091 = vpop.f32.mrb[0].mxu0
        %v2092 = vadd.f32 %v1546, %v2091
        %2093 = vmatprep.mubr.bf16.mxu0 %v1693
        %2094 = vmatmul.mubr.bf16.gmra.mrb[0].mxu0 %v1692
        %v2095 = vpop.f32.mrb[0].mxu0
        %v2096 = vadd.f32 %v1551, %v2095
        %v2097 = vpop.f32.mrb[0].mxu0
        %v2098 = vadd.f32 %v1551, %v2097
        %v2099 = vpop.f32.mrb[0].mxu0
        %v2100 = vadd.f32 %v1556, %v2099
        %v2101 = vpop.f32.mrb[0].mxu0
        %v2102 = vadd.f32 %v1556, %v2101
        %2103 = vmatprep.mubr.bf16.mxu0 %v1695
        %2104 = vmatmul.mubr.bf16.gmra.mrb[0].mxu0 %v1694
        %v2105 = vpop.f32.mrb[0].mxu0
        %v2106 = vadd.f32 %v1561, %v2105
        %v2107 = vpop.f32.mrb[0].mxu0
        %v2108 = vadd.f32 %v1561, %v2107
        %v2109 = vpop.f32.mrb[0].mxu0
        %v2110 = vadd.f32 %v1566, %v2109
        %v2111 = vpop.f32.mrb[0].mxu0
        %v2112 = vadd.f32 %v1566, %v2111
        %2113 = vdwg.mxu0
        %v2114 = vmax.f32 %v1763, 0.0
        %v2115 = vmax.f32 %v1765, 0.0
        %v2116 = vmax.f32 %v1956, 0.0
        %v2117 = vmax.f32 %v1958, 0.0
        %v2118 = vmax.f32 %v1767, 0.0
        %v2119 = vmax.f32 %v1769, 0.0
        %v2120 = vmax.f32 %v1960, 0.0
        %v2121 = vmax.f32 %v1962, 0.0
        %v2122 = vmax.f32 %v1773, 0.0
        %v2123 = vmax.f32 %v1775, 0.0
        %v2124 = vmax.f32 %v1966, 0.0
        %v2125 = vmax.f32 %v1968, 0.0
        %v2126 = vmax.f32 %v1777, 0.0
        %v2127 = vmax.f32 %v1779, 0.0
        %v2128 = vmax.f32 %v1970, 0.0
        %v2129 = vmax.f32 %v1972, 0.0
        %v2130 = vmax.f32 %v1783, 0.0
        %v2131 = vmax.f32 %v1785, 0.0
        %v2132 = vmax.f32 %v1976, 0.0
        %v2133 = vmax.f32 %v1978, 0.0
        %v2134 = vmax.f32 %v1787, 0.0
        %v2135 = vmax.f32 %v1789, 0.0
        %v2136 = vmax.f32 %v1980, 0.0
        %v2137 = vmax.f32 %v1982, 0.0
        %v2138 = vmax.f32 %v1793, 0.0
        %v2139 = vmax.f32 %v1795, 0.0
        %v2140 = vmax.f32 %v1986, 0.0
        %v2141 = vmax.f32 %v1988, 0.0
        %v2142 = vmax.f32 %v1797, 0.0
        %v2143 = vmax.f32 %v1799, 0.0
        %v2144 = vmax.f32 %v1990, 0.0
        %v2145 = vmax.f32 %v1992, 0.0
        %v2146 = vmax.f32 %v1803, 0.0
        %v2147 = vmax.f32 %v1805, 0.0
        %v2148 = vmax.f32 %v1996, 0.0
        %v2149 = vmax.f32 %v1998, 0.0
        %v2150 = vmax.f32 %v1807, 0.0
        %v2151 = vmax.f32 %v1809, 0.0
        %v2152 = vmax.f32 %v2000, 0.0
        %v2153 = vmax.f32 %v2002, 0.0
        %v2154 = vmax.f32 %v1813, 0.0
        %v2155 = vmax.f32 %v1815, 0.0
        %v2156 = vmax.f32 %v2006, 0.0
        %v2157 = vmax.f32 %v2008, 0.0
        %v2158 = vmax.f32 %v1817, 0.0
        %v2159 = vmax.f32 %v1819, 0.0
        %v2160 = vmax.f32 %v2010, 0.0
        %v2161 = vmax.f32 %v2012, 0.0
        %v2162 = vmax.f32 %v1823, 0.0
        %v2163 = vmax.f32 %v1825, 0.0
        %v2164 = vmax.f32 %v2016, 0.0
        %v2165 = vmax.f32 %v2018, 0.0
        %v2166 = vmax.f32 %v1827, 0.0
        %v2167 = vmax.f32 %v1829, 0.0
        %v2168 = vmax.f32 %v2020, 0.0
        %v2169 = vmax.f32 %v2022, 0.0
        %v2170 = vmax.f32 %v1833, 0.0
        %v2171 = vmax.f32 %v1835, 0.0
        %v2172 = vmax.f32 %v2026, 0.0
        %v2173 = vmax.f32 %v2028, 0.0
        %v2174 = vmax.f32 %v1837, 0.0
        %v2175 = vmax.f32 %v1839, 0.0
        %v2176 = vmax.f32 %v2030, 0.0
        %v2177 = vmax.f32 %v2032, 0.0
        %v2178 = vmax.f32 %v1843, 0.0
        %v2179 = vmax.f32 %v1845, 0.0
        %v2180 = vmax.f32 %v2036, 0.0
        %v2181 = vmax.f32 %v2038, 0.0
        %v2182 = vmax.f32 %v1847, 0.0
        %v2183 = vmax.f32 %v1849, 0.0
        %v2184 = vmax.f32 %v2040, 0.0
        %v2185 = vmax.f32 %v2042, 0.0
        %v2186 = vmax.f32 %v1853, 0.0
        %v2187 = vmax.f32 %v1855, 0.0
        %v2188 = vmax.f32 %v2046, 0.0
        %v2189 = vmax.f32 %v2048, 0.0
        %v2190 = vmax.f32 %v1857, 0.0
        %v2191 = vmax.f32 %v1859, 0.0
        %v2192 = vmax.f32 %v2050, 0.0
        %v2193 = vmax.f32 %v2052, 0.0
        %v2194 = vmax.f32 %v1863, 0.0
        %v2195 = vmax.f32 %v1865, 0.0
        %v2196 = vmax.f32 %v2056, 0.0
        %v2197 = vmax.f32 %v2058, 0.0
        %v2198 = vmax.f32 %v1867, 0.0
        %v2199 = vmax.f32 %v1869, 0.0
        %v2200 = vmax.f32 %v2060, 0.0
        %v2201 = vmax.f32 %v2062, 0.0
        %v2202 = vmax.f32 %v1873, 0.0
        %v2203 = vmax.f32 %v1875, 0.0
        %v2204 = vmax.f32 %v2066, 0.0
        %v2205 = vmax.f32 %v2068, 0.0
        %v2206 = vmax.f32 %v1877, 0.0
        %v2207 = vmax.f32 %v1879, 0.0
        %v2208 = vmax.f32 %v2070, 0.0
        %v2209 = vmax.f32 %v2072, 0.0
        %v2210 = vmax.f32 %v1883, 0.0
        %v2211 = vmax.f32 %v1885, 0.0
        %v2212 = vmax.f32 %v2076, 0.0
        %v2213 = vmax.f32 %v2078, 0.0
        %v2214 = vmax.f32 %v1887, 0.0
        %v2215 = vmax.f32 %v1889, 0.0
        %v2216 = vmax.f32 %v2080, 0.0
        %v2217 = vmax.f32 %v2082, 0.0
        %v2218 = vmax.f32 %v1893, 0.0
        %v2219 = vmax.f32 %v1895, 0.0
        %v2220 = vmax.f32 %v2086, 0.0
        %v2221 = vmax.f32 %v2088, 0.0
        %v2222 = vmax.f32 %v1897, 0.0
        %v2223 = vmax.f32 %v1899, 0.0
        %v2224 = vmax.f32 %v2090, 0.0
        %v2225 = vmax.f32 %v2092, 0.0
        %v2226 = vmax.f32 %v1903, 0.0
        %v2227 = vmax.f32 %v1905, 0.0
        %v2228 = vmax.f32 %v2096, 0.0
        %v2229 = vmax.f32 %v2098, 0.0
        %v2230 = vmax.f32 %v1907, 0.0
        %v2231 = vmax.f32 %v1909, 0.0
        %v2232 = vmax.f32 %v2100, 0.0
        %v2233 = vmax.f32 %v2102, 0.0
        %v2234 = vmax.f32 %v1913, 0.0
        %v2235 = vmax.f32 %v1915, 0.0
        %v2236 = vmax.f32 %v2106, 0.0
        %v2237 = vmax.f32 %v2108, 0.0
        %v2238 = vmax.f32 %v1917, 0.0
        %v2239 = vmax.f32 %v1919, 0.0
        %v2240 = vmax.f32 %v2110, 0.0
        %v2241 = vmax.f32 %v2112, 0.0
        %v2242 = vpack.c.bf16 %v2118, %v2114
        %v2243 = vpack.c.bf16 %v2119, %v2115
        %v2244 = vpack.c.bf16 %v2120, %v2116
        %v2245 = vpack.c.bf16 %v2121, %v2117
        %v2246 = vpack.c.bf16 %v2126, %v2122
        %v2247 = vpack.c.bf16 %v2127, %v2123
        %v2248 = vpack.c.bf16 %v2128, %v2124
        %v2249 = vpack.c.bf16 %v2129, %v2125
        %v2250 = vpack.c.bf16 %v2134, %v2130
        %v2251 = vpack.c.bf16 %v2135, %v2131
        %v2252 = vpack.c.bf16 %v2136, %v2132
        %v2253 = vpack.c.bf16 %v2137, %v2133
        %v2254 = vpack.c.bf16 %v2142, %v2138
        %v2255 = vpack.c.bf16 %v2143, %v2139
        %v2256 = vpack.c.bf16 %v2144, %v2140
        %v2257 = vpack.c.bf16 %v2145, %v2141
        %v2258 = vpack.c.bf16 %v2150, %v2146
        %v2259 = vpack.c.bf16 %v2151, %v2147
        %v2260 = vpack.c.bf16 %v2152, %v2148
        %v2261 = vpack.c.bf16 %v2153, %v2149
        %v2262 = vpack.c.bf16 %v2158, %v2154
        %v2263 = vpack.c.bf16 %v2159, %v2155
        %v2264 = vpack.c.bf16 %v2160, %v2156
        %v2265 = vpack.c.bf16 %v2161, %v2157
        %v2266 = vpack.c.bf16 %v2166, %v2162
        %v2267 = vpack.c.bf16 %v2167, %v2163
        %v2268 = vpack.c.bf16 %v2168, %v2164
        %v2269 = vpack.c.bf16 %v2169, %v2165
        %v2270 = vpack.c.bf16 %v2174, %v2170
        %v2271 = vpack.c.bf16 %v2175, %v2171
        %v2272 = vpack.c.bf16 %v2176, %v2172
        %v2273 = vpack.c.bf16 %v2177, %v2173
        %v2274 = vpack.c.bf16 %v2182, %v2178
        %v2275 = vpack.c.bf16 %v2183, %v2179
        %v2276 = vpack.c.bf16 %v2184, %v2180
        %v2277 = vpack.c.bf16 %v2185, %v2181
        %v2278 = vpack.c.bf16 %v2190, %v2186
        %v2279 = vpack.c.bf16 %v2191, %v2187
        %v2280 = vpack.c.bf16 %v2192, %v2188
        %v2281 = vpack.c.bf16 %v2193, %v2189
        %v2282 = vpack.c.bf16 %v2198, %v2194
        %v2283 = vpack.c.bf16 %v2199, %v2195
        %v2284 = vpack.c.bf16 %v2200, %v2196
        %v2285 = vpack.c.bf16 %v2201, %v2197
        %v2286 = vpack.c.bf16 %v2206, %v2202
        %v2287 = vpack.c.bf16 %v2207, %v2203
        %v2288 = vpack.c.bf16 %v2208, %v2204
        %v2289 = vpack.c.bf16 %v2209, %v2205
        %v2290 = vpack.c.bf16 %v2214, %v2210
        %v2291 = vpack.c.bf16 %v2215, %v2211
        %v2292 = vpack.c.bf16 %v2216, %v2212
        %v2293 = vpack.c.bf16 %v2217, %v2213
        %v2294 = vpack.c.bf16 %v2222, %v2218
        %v2295 = vpack.c.bf16 %v2223, %v2219
        %v2296 = vpack.c.bf16 %v2224, %v2220
        %v2297 = vpack.c.bf16 %v2225, %v2221
        %v2298 = vpack.c.bf16 %v2230, %v2226
        %v2299 = vpack.c.bf16 %v2231, %v2227
        %v2300 = vpack.c.bf16 %v2232, %v2228
        %v2301 = vpack.c.bf16 %v2233, %v2229
        %v2302 = vpack.c.bf16 %v2238, %v2234
        %v2303 = vpack.c.bf16 %v2239, %v2235
        %v2304 = vpack.c.bf16 %v2240, %v2236
        %v2305 = vpack.c.bf16 %v2241, %v2237
        %v2306 = vld [vmem:[%s5] sm:$0xff]
        %v2307 = vld [vmem:[%s5 + $0x8] sm:$0xff]
        %v2308 = vld [vmem:[%s5 + $0x10] sm:$0xff]
        %v2309 = vld [vmem:[%s5 + $0x18] sm:$0xff]
        %v2310 = vld [vmem:[%s5 + $0x20] sm:$0xff]
        %v2311 = vld [vmem:[%s5 + $0x28] sm:$0xff]
        %v2312 = vld [vmem:[%s5 + $0x30] sm:$0xff]
        %v2313 = vld [vmem:[%s5 + $0x38] sm:$0xff]
        %v2314 = vld [vmem:[%s5 + $0x40] sm:$0xff]
        %v2315 = vld [vmem:[%s5 + $0x48] sm:$0xff]
        %v2316 = vld [vmem:[%s5 + $0x50] sm:$0xff]
        %v2317 = vld [vmem:[%s5 + $0x58] sm:$0xff]
        %v2318 = vld [vmem:[%s5 + $0x60] sm:$0xff]
        %v2319 = vld [vmem:[%s5 + $0x68] sm:$0xff]
        %v2320 = vld [vmem:[%s5 + $0x70] sm:$0xff]
        %v2321 = vld [vmem:[%s5 + $0x78] sm:$0xff]
        %v2322 = vld [vmem:[%s6] sm:$0xff]
        %v2323 = vld [vmem:[%s6 + $0x8] sm:$0xff]
        %v2324 = vld [vmem:[%s6 + $0x10] sm:$0xff]
        %v2325 = vld [vmem:[%s6 + $0x18] sm:$0xff]
        %v2326 = vld [vmem:[%s6 + $0x20] sm:$0xff]
        %v2327 = vld [vmem:[%s6 + $0x28] sm:$0xff]
        %v2328 = vld [vmem:[%s6 + $0x30] sm:$0xff]
        %v2329 = vld [vmem:[%s6 + $0x38] sm:$0xff]
        %v2330 = vld [vmem:[%s6 + $0x40] sm:$0xff]
        %v2331 = vld [vmem:[%s6 + $0x48] sm:$0xff]
        %v2332 = vld [vmem:[%s6 + $0x50] sm:$0xff]
        %v2333 = vld [vmem:[%s6 + $0x58] sm:$0xff]
        %v2334 = vld [vmem:[%s6 + $0x60] sm:$0xff]
        %v2335 = vld [vmem:[%s6 + $0x68] sm:$0xff]
        %v2336 = vld [vmem:[%s6 + $0x70] sm:$0xff]
        %v2337 = vld [vmem:[%s6 + $0x78] sm:$0xff]
        %2339 = vset.pattern.permute.xlu0 0
        %2340 = vperm.xlu0 %2339, %v2322
        %v2341 = vpop.permute.xlu0 %2340
        %2344 = vset.pattern.permute.xlu0 0
        %2345 = vperm.xlu0 %2344, %v2323
        %v2346 = vpop.permute.xlu0 %2345
        %2349 = vset.pattern.permute.xlu0 0
        %2350 = vperm.xlu0 %2349, %v2324
        %v2351 = vpop.permute.xlu0 %2350
        %2354 = vset.pattern.permute.xlu0 0
        %2355 = vperm.xlu0 %2354, %v2325
        %v2356 = vpop.permute.xlu0 %2355
        %2359 = vset.pattern.permute.xlu0 0
        %2360 = vperm.xlu0 %2359, %v2326
        %v2361 = vpop.permute.xlu0 %2360
        %2364 = vset.pattern.permute.xlu0 0
        %2365 = vperm.xlu0 %2364, %v2327
        %v2366 = vpop.permute.xlu0 %2365
        %2369 = vset.pattern.permute.xlu0 0
        %2370 = vperm.xlu0 %2369, %v2328
        %v2371 = vpop.permute.xlu0 %2370
        %2374 = vset.pattern.permute.xlu0 0
        %2375 = vperm.xlu0 %2374, %v2329
        %v2376 = vpop.permute.xlu0 %2375
        %2379 = vset.pattern.permute.xlu0 0
        %2380 = vperm.xlu0 %2379, %v2330
        %v2381 = vpop.permute.xlu0 %2380
        %2384 = vset.pattern.permute.xlu0 0
        %2385 = vperm.xlu0 %2384, %v2331
        %v2386 = vpop.permute.xlu0 %2385
        %2389 = vset.pattern.permute.xlu0 0
        %2390 = vperm.xlu0 %2389, %v2332
        %v2391 = vpop.permute.xlu0 %2390
        %2394 = vset.pattern.permute.xlu0 0
        %2395 = vperm.xlu0 %2394, %v2333
        %v2396 = vpop.permute.xlu0 %2395
        %2399 = vset.pattern.permute.xlu0 0
        %2400 = vperm.xlu0 %2399, %v2334
        %v2401 = vpop.permute.xlu0 %2400
        %2404 = vset.pattern.permute.xlu0 0
        %2405 = vperm.xlu0 %2404, %v2335
        %v2406 = vpop.permute.xlu0 %2405
        %2409 = vset.pattern.permute.xlu0 0
        %2410 = vperm.xlu0 %2409, %v2336
        %v2411 = vpop.permute.xlu0 %2410
        %2414 = vset.pattern.permute.xlu0 0
        %2415 = vperm.xlu0 %2414, %v2337
        %v2416 = vpop.permute.xlu0 %2415
        %v2434 = vunpack.c.l.b16 %v2306
        %v2435 = vunpack.c.h.b16 %v2306
        %v2436 = vunpack.c.l.b16 %v2307
        %v2437 = vunpack.c.h.b16 %v2307
        %v2438 = vunpack.c.l.b16 %v2308
        %v2439 = vunpack.c.h.b16 %v2308
        %v2440 = vunpack.c.l.b16 %v2309
        %v2441 = vunpack.c.h.b16 %v2309
        %v2442 = vunpack.c.l.b16 %v2310
        %v2443 = vunpack.c.h.b16 %v2310
        %v2444 = vunpack.c.l.b16 %v2311
        %v2445 = vunpack.c.h.b16 %v2311
        %v2446 = vunpack.c.l.b16 %v2312
        %v2447 = vunpack.c.h.b16 %v2312
        %v2448 = vunpack.c.l.b16 %v2313
        %v2449 = vunpack.c.h.b16 %v2313
        %v2450 = vunpack.c.l.b16 %v2314
        %v2451 = vunpack.c.h.b16 %v2314
        %v2452 = vunpack.c.l.b16 %v2315
        %v2453 = vunpack.c.h.b16 %v2315
        %v2454 = vunpack.c.l.b16 %v2316
        %v2455 = vunpack.c.h.b16 %v2316
        %v2456 = vunpack.c.l.b16 %v2317
        %v2457 = vunpack.c.h.b16 %v2317
        %v2458 = vunpack.c.l.b16 %v2318
        %v2459 = vunpack.c.h.b16 %v2318
        %v2460 = vunpack.c.l.b16 %v2319
        %v2461 = vunpack.c.h.b16 %v2319
        %v2462 = vunpack.c.l.b16 %v2320
        %v2463 = vunpack.c.h.b16 %v2320
        %v2464 = vunpack.c.l.b16 %v2321
        %v2465 = vunpack.c.h.b16 %v2321
        %v2466 = vpack.c.b16 %v2436, %v2434
        %v2467 = vpack.c.b16 %v2437, %v2435
        %v2468 = vpack.c.b16 %v2440, %v2438
        %v2469 = vpack.c.b16 %v2441, %v2439
        %v2470 = vpack.c.b16 %v2444, %v2442
        %v2471 = vpack.c.b16 %v2445, %v2443
        %v2472 = vpack.c.b16 %v2448, %v2446
        %v2473 = vpack.c.b16 %v2449, %v2447
        %v2474 = vpack.c.b16 %v2452, %v2450
        %v2475 = vpack.c.b16 %v2453, %v2451
        %v2476 = vpack.c.b16 %v2456, %v2454
        %v2477 = vpack.c.b16 %v2457, %v2455
        %v2478 = vpack.c.b16 %v2460, %v2458
        %v2479 = vpack.c.b16 %v2461, %v2459
        %v2480 = vpack.c.b16 %v2464, %v2462
        %v2481 = vpack.c.b16 %v2465, %v2463
        %2498 = vmatprep.subr.bf16.mxu0 %v2243
        %2499 = vmatpush1.bf16.msra.mxu0 %v2242
        %2500 = vmatprep.subr.bf16.mxu0 %v2247
        %2501 = vmatpush1.bf16.msra.mxu0 %v2246
        %2502 = vmatprep.subr.bf16.mxu0 %v2251
        %2503 = vmatpush1.bf16.msra.mxu0 %v2250
        %2504 = vmatprep.subr.bf16.mxu0 %v2255
        %2505 = vmatpush1.bf16.msra.mxu0 %v2254
        %2506 = vmatprep.subr.bf16.mxu0 %v2259
        %2507 = vmatpush1.bf16.msra.mxu0 %v2258
        %2508 = vmatprep.subr.bf16.mxu0 %v2263
        %2509 = vmatpush1.bf16.msra.mxu0 %v2262
        %2510 = vmatprep.subr.bf16.mxu0 %v2267
        %2511 = vmatpush1.bf16.msra.mxu0 %v2266
        %2512 = vmatprep.subr.bf16.mxu0 %v2271
        %2513 = vmatpush1.bf16.msra.mxu0 %v2270
        %2514 = vmatprep.subr.bf16.mxu0 %v2275
        %2515 = vmatpush1.bf16.msra.mxu0 %v2274
        %2516 = vmatprep.subr.bf16.mxu0 %v2279
        %2517 = vmatpush1.bf16.msra.mxu0 %v2278
        %2518 = vmatprep.subr.bf16.mxu0 %v2283
        %2519 = vmatpush1.bf16.msra.mxu0 %v2282
        %2520 = vmatprep.subr.bf16.mxu0 %v2287
        %2521 = vmatpush1.bf16.msra.mxu0 %v2286
        %2522 = vmatprep.subr.bf16.mxu0 %v2291
        %2523 = vmatpush1.bf16.msra.mxu0 %v2290
        %2524 = vmatprep.subr.bf16.mxu0 %v2295
        %2525 = vmatpush1.bf16.msra.mxu0 %v2294
        %2526 = vmatprep.subr.bf16.mxu0 %v2299
        %2527 = vmatpush1.bf16.msra.mxu0 %v2298
        %2528 = vmatprep.subr.bf16.mxu0 %v2303
        %2529 = vmatpush1.bf16.msra.mxu0 %v2302
        %2530 = vmatprep.mubr.bf16.mxu0 %v2467
        %2531 = vmatmul.mubr.bf16.gmra.mrb[0].mxu0 %v2466
        %v2532 = vpop.f32.mrb[0].mxu0
        %v2533 = vadd.f32 %v2341, %v2532
        %v2534 = vpop.f32.mrb[0].mxu0
        %v2535 = vadd.f32 %v2341, %v2534
        %v2536 = vpop.f32.mrb[0].mxu0
        %v2537 = vadd.f32 %v2346, %v2536
        %v2538 = vpop.f32.mrb[0].mxu0
        %v2539 = vadd.f32 %v2346, %v2538
        %2540 = vmatprep.mubr.bf16.mxu0 %v2469
        %2541 = vmatmul.mubr.bf16.gmra.mrb[0].mxu0 %v2468
        %v2542 = vpop.f32.mrb[0].mxu0
        %v2543 = vadd.f32 %v2351, %v2542
        %v2544 = vpop.f32.mrb[0].mxu0
        %v2545 = vadd.f32 %v2351, %v2544
        %v2546 = vpop.f32.mrb[0].mxu0
        %v2547 = vadd.f32 %v2356, %v2546
        %v2548 = vpop.f32.mrb[0].mxu0
        %v2549 = vadd.f32 %v2356, %v2548
        %2550 = vmatprep.mubr.bf16.mxu0 %v2471
        %2551 = vmatmul.mubr.bf16.gmra.mrb[0].mxu0 %v2470
        %v2552 = vpop.f32.mrb[0].mxu0
        %v2553 = vadd.f32 %v2361, %v2552
        %v2554 = vpop.f32.mrb[0].mxu0
        %v2555 = vadd.f32 %v2361, %v2554
        %v2556 = vpop.f32.mrb[0].mxu0
        %v2557 = vadd.f32 %v2366, %v2556
        %v2558 = vpop.f32.mrb[0].mxu0
        %v2559 = vadd.f32 %v2366, %v2558
        %2560 = vmatprep.mubr.bf16.mxu0 %v2473
        %2561 = vmatmul.mubr.bf16.gmra.mrb[0].mxu0 %v2472
        %v2562 = vpop.f32.mrb[0].mxu0
        %v2563 = vadd.f32 %v2371, %v2562
        %v2564 = vpop.f32.mrb[0].mxu0
        %v2565 = vadd.f32 %v2371, %v2564
        %v2566 = vpop.f32.mrb[0].mxu0
        %v2567 = vadd.f32 %v2376, %v2566
        %v2568 = vpop.f32.mrb[0].mxu0
        %v2569 = vadd.f32 %v2376, %v2568
        %2570 = vmatprep.mubr.bf16.mxu0 %v2475
        %2571 = vmatmul.mubr.bf16.gmra.mrb[0].mxu0 %v2474
        %v2572 = vpop.f32.mrb[0].mxu0
        %v2573 = vadd.f32 %v2381, %v2572
        %v2574 = vpop.f32.mrb[0].mxu0
        %v2575 = vadd.f32 %v2381, %v2574
        %v2576 = vpop.f32.mrb[0].mxu0
        %v2577 = vadd.f32 %v2386, %v2576
        %v2578 = vpop.f32.mrb[0].mxu0
        %v2579 = vadd.f32 %v2386, %v2578
        %2580 = vmatprep.mubr.bf16.mxu0 %v2477
        %2581 = vmatmul.mubr.bf16.gmra.mrb[0].mxu0 %v2476
        %v2582 = vpop.f32.mrb[0].mxu0
        %v2583 = vadd.f32 %v2391, %v2582
        %v2584 = vpop.f32.mrb[0].mxu0
        %v2585 = vadd.f32 %v2391, %v2584
        %v2586 = vpop.f32.mrb[0].mxu0
        %v2587 = vadd.f32 %v2396, %v2586
        %v2588 = vpop.f32.mrb[0].mxu0
        %v2589 = vadd.f32 %v2396, %v2588
        %2590 = vmatprep.mubr.bf16.mxu0 %v2479
        %2591 = vmatmul.mubr.bf16.gmra.mrb[0].mxu0 %v2478
        %v2592 = vpop.f32.mrb[0].mxu0
        %v2593 = vadd.f32 %v2401, %v2592
        %v2594 = vpop.f32.mrb[0].mxu0
        %v2595 = vadd.f32 %v2401, %v2594
        %v2596 = vpop.f32.mrb[0].mxu0
        %v2597 = vadd.f32 %v2406, %v2596
        %v2598 = vpop.f32.mrb[0].mxu0
        %v2599 = vadd.f32 %v2406, %v2598
        %2600 = vmatprep.mubr.bf16.mxu0 %v2481
        %2601 = vmatmul.mubr.bf16.gmra.mrb[0].mxu0 %v2480
        %v2602 = vpop.f32.mrb[0].mxu0
        %v2603 = vadd.f32 %v2411, %v2602
        %v2604 = vpop.f32.mrb[0].mxu0
        %v2605 = vadd.f32 %v2411, %v2604
        %v2606 = vpop.f32.mrb[0].mxu0
        %v2607 = vadd.f32 %v2416, %v2606
        %v2608 = vpop.f32.mrb[0].mxu0
        %v2609 = vadd.f32 %v2416, %v2608
        %2610 = vdwg.mxu0
        %2611 = vmatprep.subr.bf16.mxu0 %v2245
        %2612 = vmatpush1.bf16.msra.mxu0 %v2244
        %2613 = vmatprep.subr.bf16.mxu0 %v2249
        %2614 = vmatpush1.bf16.msra.mxu0 %v2248
        %2615 = vmatprep.subr.bf16.mxu0 %v2253
        %2616 = vmatpush1.bf16.msra.mxu0 %v2252
        %2617 = vmatprep.subr.bf16.mxu0 %v2257
        %2618 = vmatpush1.bf16.msra.mxu0 %v2256
        %2619 = vmatprep.subr.bf16.mxu0 %v2261
        %2620 = vmatpush1.bf16.msra.mxu0 %v2260
        %2621 = vmatprep.subr.bf16.mxu0 %v2265
        %2622 = vmatpush1.bf16.msra.mxu0 %v2264
        %2623 = vmatprep.subr.bf16.mxu0 %v2269
        %2624 = vmatpush1.bf16.msra.mxu0 %v2268
        %2625 = vmatprep.subr.bf16.mxu0 %v2273
        %2626 = vmatpush1.bf16.msra.mxu0 %v2272
        %2627 = vmatprep.subr.bf16.mxu0 %v2277
        %2628 = vmatpush1.bf16.msra.mxu0 %v2276
        %2629 = vmatprep.subr.bf16.mxu0 %v2281
        %2630 = vmatpush1.bf16.msra.mxu0 %v2280
        %2631 = vmatprep.subr.bf16.mxu0 %v2285
        %2632 = vmatpush1.bf16.msra.mxu0 %v2284
        %2633 = vmatprep.subr.bf16.mxu0 %v2289
        %2634 = vmatpush1.bf16.msra.mxu0 %v2288
        %2635 = vmatprep.subr.bf16.mxu0 %v2293
        %2636 = vmatpush1.bf16.msra.mxu0 %v2292
        %2637 = vmatprep.subr.bf16.mxu0 %v2297
        %2638 = vmatpush1.bf16.msra.mxu0 %v2296
        %2639 = vmatprep.subr.bf16.mxu0 %v2301
        %2640 = vmatpush1.bf16.msra.mxu0 %v2300
        %2641 = vmatprep.subr.bf16.mxu0 %v2305
        %2642 = vmatpush1.bf16.msra.mxu0 %v2304
        %2643 = vmatprep.mubr.bf16.mxu0 %v2467
        %2644 = vmatmul.mubr.bf16.gmra.mrb[0].mxu0 %v2466
        %v2645 = vpop.f32.mrb[0].mxu0
        %v2646 = vadd.f32 %v2341, %v2645
        %v2647 = vpop.f32.mrb[0].mxu0
        %v2648 = vadd.f32 %v2341, %v2647
        %v2649 = vpop.f32.mrb[0].mxu0
        %v2650 = vadd.f32 %v2346, %v2649
        %v2651 = vpop.f32.mrb[0].mxu0
        %v2652 = vadd.f32 %v2346, %v2651
        %2653 = vmatprep.mubr.bf16.mxu0 %v2469
        %2654 = vmatmul.mubr.bf16.gmra.mrb[0].mxu0 %v2468
        %v2655 = vpop.f32.mrb[0].mxu0
        %v2656 = vadd.f32 %v2351, %v2655
        %v2657 = vpop.f32.mrb[0].mxu0
        %v2658 = vadd.f32 %v2351, %v2657
        %v2659 = vpop.f32.mrb[0].mxu0
        %v2660 = vadd.f32 %v2356, %v2659
        %v2661 = vpop.f32.mrb[0].mxu0
        %v2662 = vadd.f32 %v2356, %v2661
        %2663 = vmatprep.mubr.bf16.mxu0 %v2471
        %2664 = vmatmul.mubr.bf16.gmra.mrb[0].mxu0 %v2470
        %v2665 = vpop.f32.mrb[0].mxu0
        %v2666 = vadd.f32 %v2361, %v2665
        %v2667 = vpop.f32.mrb[0].mxu0
        %v2668 = vadd.f32 %v2361, %v2667
        %v2669 = vpop.f32.mrb[0].mxu0
        %v2670 = vadd.f32 %v2366, %v2669
        %v2671 = vpop.f32.mrb[0].mxu0
        %v2672 = vadd.f32 %v2366, %v2671
        %2673 = vmatprep.mubr.bf16.mxu0 %v2473
        %2674 = vmatmul.mubr.bf16.gmra.mrb[0].mxu0 %v2472
        %v2675 = vpop.f32.mrb[0].mxu0
        %v2676 = vadd.f32 %v2371, %v2675
        %v2677 = vpop.f32.mrb[0].mxu0
        %v2678 = vadd.f32 %v2371, %v2677
        %v2679 = vpop.f32.mrb[0].mxu0
        %v2680 = vadd.f32 %v2376, %v2679
        %v2681 = vpop.f32.mrb[0].mxu0
        %v2682 = vadd.f32 %v2376, %v2681
        %2683 = vmatprep.mubr.bf16.mxu0 %v2475
        %2684 = vmatmul.mubr.bf16.gmra.mrb[0].mxu0 %v2474
        %v2685 = vpop.f32.mrb[0].mxu0
        %v2686 = vadd.f32 %v2381, %v2685
        %v2687 = vpop.f32.mrb[0].mxu0
        %v2688 = vadd.f32 %v2381, %v2687
        %v2689 = vpop.f32.mrb[0].mxu0
        %v2690 = vadd.f32 %v2386, %v2689
        %v2691 = vpop.f32.mrb[0].mxu0
        %v2692 = vadd.f32 %v2386, %v2691
        %2693 = vmatprep.mubr.bf16.mxu0 %v2477
        %2694 = vmatmul.mubr.bf16.gmra.mrb[0].mxu0 %v2476
        %v2695 = vpop.f32.mrb[0].mxu0
        %v2696 = vadd.f32 %v2391, %v2695
        %v2697 = vpop.f32.mrb[0].mxu0
        %v2698 = vadd.f32 %v2391, %v2697
        %v2699 = vpop.f32.mrb[0].mxu0
        %v2700 = vadd.f32 %v2396, %v2699
        %v2701 = vpop.f32.mrb[0].mxu0
        %v2702 = vadd.f32 %v2396, %v2701
        %2703 = vmatprep.mubr.bf16.mxu0 %v2479
        %2704 = vmatmul.mubr.bf16.gmra.mrb[0].mxu0 %v2478
        %v2705 = vpop.f32.mrb[0].mxu0
        %v2706 = vadd.f32 %v2401, %v2705
        %v2707 = vpop.f32.mrb[0].mxu0
        %v2708 = vadd.f32 %v2401, %v2707
        %v2709 = vpop.f32.mrb[0].mxu0
        %v2710 = vadd.f32 %v2406, %v2709
        %v2711 = vpop.f32.mrb[0].mxu0
        %v2712 = vadd.f32 %v2406, %v2711
        %2713 = vmatprep.mubr.bf16.mxu0 %v2481
        %2714 = vmatmul.mubr.bf16.gmra.mrb[0].mxu0 %v2480
        %v2715 = vpop.f32.mrb[0].mxu0
        %v2716 = vadd.f32 %v2411, %v2715
        %v2717 = vpop.f32.mrb[0].mxu0
        %v2718 = vadd.f32 %v2411, %v2717
        %v2719 = vpop.f32.mrb[0].mxu0
        %v2720 = vadd.f32 %v2416, %v2719
        %v2721 = vpop.f32.mrb[0].mxu0
        %v2722 = vadd.f32 %v2416, %v2721
        %2723 = vdwg.mxu0
        %v2724 = vmax.f32 %v2533, 0.0
        %v2725 = vmax.f32 %v2535, 0.0
        %v2726 = vmax.f32 %v2646, 0.0
        %v2727 = vmax.f32 %v2648, 0.0
        %v2728 = vmax.f32 %v2537, 0.0
        %v2729 = vmax.f32 %v2539, 0.0
        %v2730 = vmax.f32 %v2650, 0.0
        %v2731 = vmax.f32 %v2652, 0.0
        %v2732 = vmax.f32 %v2543, 0.0
        %v2733 = vmax.f32 %v2545, 0.0
        %v2734 = vmax.f32 %v2656, 0.0
        %v2735 = vmax.f32 %v2658, 0.0
        %v2736 = vmax.f32 %v2547, 0.0
        %v2737 = vmax.f32 %v2549, 0.0
        %v2738 = vmax.f32 %v2660, 0.0
        %v2739 = vmax.f32 %v2662, 0.0
        %v2740 = vmax.f32 %v2553, 0.0
        %v2741 = vmax.f32 %v2555, 0.0
        %v2742 = vmax.f32 %v2666, 0.0
        %v2743 = vmax.f32 %v2668, 0.0
        %v2744 = vmax.f32 %v2557, 0.0
        %v2745 = vmax.f32 %v2559, 0.0
        %v2746 = vmax.f32 %v2670, 0.0
        %v2747 = vmax.f32 %v2672, 0.0
        %v2748 = vmax.f32 %v2563, 0.0
        %v2749 = vmax.f32 %v2565, 0.0
        %v2750 = vmax.f32 %v2676, 0.0
        %v2751 = vmax.f32 %v2678, 0.0
        %v2752 = vmax.f32 %v2567, 0.0
        %v2753 = vmax.f32 %v2569, 0.0
        %v2754 = vmax.f32 %v2680, 0.0
        %v2755 = vmax.f32 %v2682, 0.0
        %v2756 = vmax.f32 %v2573, 0.0
        %v2757 = vmax.f32 %v2575, 0.0
        %v2758 = vmax.f32 %v2686, 0.0
        %v2759 = vmax.f32 %v2688, 0.0
        %v2760 = vmax.f32 %v2577, 0.0
        %v2761 = vmax.f32 %v2579, 0.0
        %v2762 = vmax.f32 %v2690, 0.0
        %v2763 = vmax.f32 %v2692, 0.0
        %v2764 = vmax.f32 %v2583, 0.0
        %v2765 = vmax.f32 %v2585, 0.0
        %v2766 = vmax.f32 %v2696, 0.0
        %v2767 = vmax.f32 %v2698, 0.0
        %v2768 = vmax.f32 %v2587, 0.0
        %v2769 = vmax.f32 %v2589, 0.0
        %v2770 = vmax.f32 %v2700, 0.0
        %v2771 = vmax.f32 %v2702, 0.0
        %v2772 = vmax.f32 %v2593, 0.0
        %v2773 = vmax.f32 %v2595, 0.0
        %v2774 = vmax.f32 %v2706, 0.0
        %v2775 = vmax.f32 %v2708, 0.0
        %v2776 = vmax.f32 %v2597, 0.0
        %v2777 = vmax.f32 %v2599, 0.0
        %v2778 = vmax.f32 %v2710, 0.0
        %v2779 = vmax.f32 %v2712, 0.0
        %v2780 = vmax.f32 %v2603, 0.0
        %v2781 = vmax.f32 %v2605, 0.0
        %v2782 = vmax.f32 %v2716, 0.0
        %v2783 = vmax.f32 %v2718, 0.0
        %v2784 = vmax.f32 %v2607, 0.0
        %v2785 = vmax.f32 %v2609, 0.0
        %v2786 = vmax.f32 %v2720, 0.0
        %v2787 = vmax.f32 %v2722, 0.0
        %v2788 = vpack.c.bf16 %v2728, %v2724
        %v2789 = vpack.c.bf16 %v2729, %v2725
        %v2790 = vpack.c.bf16 %v2730, %v2726
        %v2791 = vpack.c.bf16 %v2731, %v2727
        %v2792 = vpack.c.bf16 %v2736, %v2732
        %v2793 = vpack.c.bf16 %v2737, %v2733
        %v2794 = vpack.c.bf16 %v2738, %v2734
        %v2795 = vpack.c.bf16 %v2739, %v2735
        %v2796 = vpack.c.bf16 %v2744, %v2740
        %v2797 = vpack.c.bf16 %v2745, %v2741
        %v2798 = vpack.c.bf16 %v2746, %v2742
        %v2799 = vpack.c.bf16 %v2747, %v2743
        %v2800 = vpack.c.bf16 %v2752, %v2748
        %v2801 = vpack.c.bf16 %v2753, %v2749
        %v2802 = vpack.c.bf16 %v2754, %v2750
        %v2803 = vpack.c.bf16 %v2755, %v2751
        %v2804 = vpack.c.bf16 %v2760, %v2756
        %v2805 = vpack.c.bf16 %v2761, %v2757
        %v2806 = vpack.c.bf16 %v2762, %v2758
        %v2807 = vpack.c.bf16 %v2763, %v2759
        %v2808 = vpack.c.bf16 %v2768, %v2764
        %v2809 = vpack.c.bf16 %v2769, %v2765
        %v2810 = vpack.c.bf16 %v2770, %v2766
        %v2811 = vpack.c.bf16 %v2771, %v2767
        %v2812 = vpack.c.bf16 %v2776, %v2772
        %v2813 = vpack.c.bf16 %v2777, %v2773
        %v2814 = vpack.c.bf16 %v2778, %v2774
        %v2815 = vpack.c.bf16 %v2779, %v2775
        %v2816 = vpack.c.bf16 %v2784, %v2780
        %v2817 = vpack.c.bf16 %v2785, %v2781
        %v2818 = vpack.c.bf16 %v2786, %v2782
        %v2819 = vpack.c.bf16 %v2787, %v2783
        %v2820 = vld [vmem:[%s7] sm:$0xf]
        %2821 = vmatprep.subr.bf16.mxu0 %v2789
        %2822 = vmatpush1.bf16.msra.mxu0 %v2788
        %2823 = vmatprep.subr.bf16.mxu0 %v2793
        %2824 = vmatpush1.bf16.msra.mxu0 %v2792
        %2825 = vmatprep.subr.bf16.mxu0 %v2797
        %2826 = vmatpush1.bf16.msra.mxu0 %v2796
        %2827 = vmatprep.subr.bf16.mxu0 %v2801
        %2828 = vmatpush1.bf16.msra.mxu0 %v2800
        %2829 = vmatprep.subr.bf16.mxu0 %v2805
        %2830 = vmatpush1.bf16.msra.mxu0 %v2804
        %2831 = vmatprep.subr.bf16.mxu0 %v2809
        %2832 = vmatpush1.bf16.msra.mxu0 %v2808
        %2833 = vmatprep.subr.bf16.mxu0 %v2813
        %2834 = vmatpush1.bf16.msra.mxu0 %v2812
        %2835 = vmatprep.subr.bf16.mxu0 %v2817
        %2836 = vmatpush1.bf16.msra.mxu0 %v2816
        %2837 = vmatprep.subr.bf16.mxu0 0
        %2838 = vmatpush1.bf16.msra.mxu0 0
        %2839 = vmatprep.subr.bf16.mxu0 0
        %2840 = vmatpush1.bf16.msra.mxu0 0
        %2841 = vmatprep.subr.bf16.mxu0 0
        %2842 = vmatpush1.bf16.msra.mxu0 0
        %2843 = vmatprep.subr.bf16.mxu0 0
        %2844 = vmatpush1.bf16.msra.mxu0 0
        %2845 = vmatprep.subr.bf16.mxu0 0
        %2846 = vmatpush1.bf16.msra.mxu0 0
        %2847 = vmatprep.subr.bf16.mxu0 0
        %2848 = vmatpush1.bf16.msra.mxu0 0
        %2849 = vmatprep.subr.bf16.mxu0 0
        %2850 = vmatpush1.bf16.msra.mxu0 0
        %2851 = vmatprep.subr.bf16.mxu0 0
        %2852 = vmatpush1.bf16.msra.mxu0 0
        %2853 = vmatprep.mubr.bf16.mxu0 0
        %2854 = vmatmul.mubr.bf16.gmra.mrb[0].mxu0 %v2820
        %v2855 = vpop.f32.mrb[0].mxu0
        %v2856 = vadd.f32 0.0, %v2855
        %v2857 = vpop.f32.mrb[0].mxu0
        %v2858 = vadd.f32 0.0, %v2857
        %v2859 = vpop.f32.mrb[0].mxu0
        %v2860 = vpop.f32.mrb[0].mxu0
        %2861 = vdwg.mxu0
        %2862 = vmatprep.subr.bf16.mxu0 %v2791
        %2863 = vmatpush1.bf16.msra.mxu0 %v2790
        %2864 = vmatprep.subr.bf16.mxu0 %v2795
        %2865 = vmatpush1.bf16.msra.mxu0 %v2794
        %2866 = vmatprep.subr.bf16.mxu0 %v2799
        %2867 = vmatpush1.bf16.msra.mxu0 %v2798
        %2868 = vmatprep.subr.bf16.mxu0 %v2803
        %2869 = vmatpush1.bf16.msra.mxu0 %v2802
        %2870 = vmatprep.subr.bf16.mxu0 %v2807
        %2871 = vmatpush1.bf16.msra.mxu0 %v2806
        %2872 = vmatprep.subr.bf16.mxu0 %v2811
        %2873 = vmatpush1.bf16.msra.mxu0 %v2810
        %2874 = vmatprep.subr.bf16.mxu0 %v2815
        %2875 = vmatpush1.bf16.msra.mxu0 %v2814
        %2876 = vmatprep.subr.bf16.mxu0 %v2819
        %2877 = vmatpush1.bf16.msra.mxu0 %v2818
        %2878 = vmatprep.subr.bf16.mxu0 0
        %2879 = vmatpush1.bf16.msra.mxu0 0
        %2880 = vmatprep.subr.bf16.mxu0 0
        %2881 = vmatpush1.bf16.msra.mxu0 0
        %2882 = vmatprep.subr.bf16.mxu0 0
        %2883 = vmatpush1.bf16.msra.mxu0 0
        %2884 = vmatprep.subr.bf16.mxu0 0
        %2885 = vmatpush1.bf16.msra.mxu0 0
        %2886 = vmatprep.subr.bf16.mxu0 0
        %2887 = vmatpush1.bf16.msra.mxu0 0
        %2888 = vmatprep.subr.bf16.mxu0 0
        %2889 = vmatpush1.bf16.msra.mxu0 0
        %2890 = vmatprep.subr.bf16.mxu0 0
        %2891 = vmatpush1.bf16.msra.mxu0 0
        %2892 = vmatprep.subr.bf16.mxu0 0
        %2893 = vmatpush1.bf16.msra.mxu0 0
        %2894 = vmatprep.mubr.bf16.mxu0 0
        %2895 = vmatmul.mubr.bf16.gmra.mrb[0].mxu0 %v2820
        %v2896 = vpop.f32.mrb[0].mxu0
        %v2897 = vadd.f32 0.0, %v2896
        %v2898 = vpop.f32.mrb[0].mxu0
        %v2899 = vadd.f32 0.0, %v2898
        %v2900 = vpop.f32.mrb[0].mxu0
        %v2901 = vpop.f32.mrb[0].mxu0
        %2902 = vdwg.mxu0
        %2903 = vst [vmem:[%s342] sm:$0xff] %v2856
        %2904 = vst [vmem:[%s342 + $0x8] sm:$0xff] %v2858
        %2905 = vst [vmem:[%s342 + $0x10] sm:$0xff] %v2897
        %2906 = vst [vmem:[%s342 + $0x18] sm:$0xff] %v2899
        %s2907 = sand.u32 %s219, 1
        %s2908 = sand.u32 %s219, 1
        %s2909 = smul.addr %s2908, 32
        %s2910 = scalar_lea.vmem [#allocation4], %s2909
        // Predicated region
        $region57: #{region_reconstruction.1} parent=51 // pred_check
          %p2911 = pneg %p229
        $region58: #{region_reconstruction.1} parent=51 // pred_check_branch
          %2913 = sbr.rel (%p2911) target = $region60
        $region59: #{region_reconstruction.1} parent=51 // pred_region
          %s2914 = smul.u32 4, %s27
          %s2915 = ssub.s32 3, %s2914
          %s2916 = smul.u32 128, %s2915
          %p2917 = scmp.ne.s32.totalorder 0, %s2916
          %s2918 = smul.addr %s26, 3
          %s2919 = sadd.s32 %s2914, %s2918
          %s2920 = smul.addr %s2919, 8
          %s2921 = scalar_lea.vmem %s8, %s2920
          %s2922 = smul.u32 %s2915, 8
          // Predicated region
          $region61: #{region_reconstruction.1} parent=59 // pred_check
            %p2923 = pneg %p2917
          $region62: #{region_reconstruction.1} parent=59 // pred_check_branch
            %2925 = sbr.rel (%p2923) target = $region64
          $region63: #{region_reconstruction.1} parent=59 // pred_region
            %p2926 = scmp.lt.u32.totalorder %s2922, 8
            %p2927 = pneg %p2926
            // Predicated region
            $region65: #{region_reconstruction.1} parent=63 // pred_check
              _
            $region66: #{region_reconstruction.1} parent=63 // pred_check_branch
              %2929 = sbr.rel (%p2926) target = $region68
            $region67: #{region_reconstruction.1} parent=63 // pred_region
              %s2944 = sand.u32 %s2922, 7
              %p2945 = scmp.eq.s32.totalorder %s2944, 0
              // Predicated region
              $region80: #{region_reconstruction.1} parent=67 // pred_check
                %p2946 = pneg %p2945
              $region81: #{region_reconstruction.1} parent=67 // pred_check_branch
                %2948 = sbr.rel (%p2946) target = $region83
              $region82: #{region_reconstruction.1} parent=67 // pred_region
                %s2949 = sshrl.u32 %s2922, 3
                %s2950 = sshrl.u32 %s2949, 6
                // While loop
                $region84: #{region_reconstruction.1} parent=82 // loop_pre_header
                  _
                $region85: #{region_reconstruction.1} parent=82 // loop_header
                  %s2954 = sphi 0, %s2956
                  %p2955 = scmp.ge.s32.totalorder %s2954, %s2950
                  %s2959 = sphi 0, %s3092
                  %s2960 = sphi %s2910, %s3095
                  %s2961 = sphi %s2921, %s3096
                $region86: #{region_reconstruction.1} parent=82 // loop_header_branch
                  %2958 = sbr.rel (%p2955) target = $region90
                $region87: #{region_reconstruction.1} parent=82 // loop_body
                  %v2962 = vld [vmem:[%s2960] sm:$0xff]
                  %2963 = vst [vmem:[%s2961] sm:$0xff] %v2962
                  %v2964 = vld [vmem:[%s2960 + $0x8] sm:$0xff]
                  %2965 = vst [vmem:[%s2961 + $0x8] sm:$0xff] %v2964
                  %v2966 = vld [vmem:[%s2960 + $0x10] sm:$0xff]
                  %2967 = vst [vmem:[%s2961 + $0x10] sm:$0xff] %v2966
                  %v2968 = vld [vmem:[%s2960 + $0x18] sm:$0xff]
                  %2969 = vst [vmem:[%s2961 + $0x18] sm:$0xff] %v2968
                  %v2970 = vld [vmem:[%s2960 + $0x20] sm:$0xff]
                  %2971 = vst [vmem:[%s2961 + $0x20] sm:$0xff] %v2970
                  %v2972 = vld [vmem:[%s2960 + $0x28] sm:$0xff]
                  %2973 = vst [vmem:[%s2961 + $0x28] sm:$0xff] %v2972
                  %v2974 = vld [vmem:[%s2960 + $0x30] sm:$0xff]
                  %2975 = vst [vmem:[%s2961 + $0x30] sm:$0xff] %v2974
                  %v2976 = vld [vmem:[%s2960 + $0x38] sm:$0xff]
                  %2977 = vst [vmem:[%s2961 + $0x38] sm:$0xff] %v2976
                  %v2978 = vld [vmem:[%s2960 + $0x40] sm:$0xff]
                  %2979 = vst [vmem:[%s2961 + $0x40] sm:$0xff] %v2978
                  %v2980 = vld [vmem:[%s2960 + $0x48] sm:$0xff]
                  %2981 = vst [vmem:[%s2961 + $0x48] sm:$0xff] %v2980
                  %v2982 = vld [vmem:[%s2960 + $0x50] sm:$0xff]
                  %2983 = vst [vmem:[%s2961 + $0x50] sm:$0xff] %v2982
                  %v2984 = vld [vmem:[%s2960 + $0x58] sm:$0xff]
                  %2985 = vst [vmem:[%s2961 + $0x58] sm:$0xff] %v2984
                  %v2986 = vld [vmem:[%s2960 + $0x60] sm:$0xff]
                  %2987 = vst [vmem:[%s2961 + $0x60] sm:$0xff] %v2986
                  %v2988 = vld [vmem:[%s2960 + $0x68] sm:$0xff]
                  %2989 = vst [vmem:[%s2961 + $0x68] sm:$0xff] %v2988
                  %v2990 = vld [vmem:[%s2960 + $0x70] sm:$0xff]
                  %2991 = vst [vmem:[%s2961 + $0x70] sm:$0xff] %v2990
                  %v2992 = vld [vmem:[%s2960 + $0x78] sm:$0xff]
                  %2993 = vst [vmem:[%s2961 + $0x78] sm:$0xff] %v2992
                  %v2994 = vld [vmem:[%s2960 + $0x80] sm:$0xff]
                  %2995 = vst [vmem:[%s2961 + $0x80] sm:$0xff] %v2994
                  %v2996 = vld [vmem:[%s2960 + $0x88] sm:$0xff]
                  %2997 = vst [vmem:[%s2961 + $0x88] sm:$0xff] %v2996
                  %v2998 = vld [vmem:[%s2960 + $0x90] sm:$0xff]
                  %2999 = vst [vmem:[%s2961 + $0x90] sm:$0xff] %v2998
                  %v3000 = vld [vmem:[%s2960 + $0x98] sm:$0xff]
                  %3001 = vst [vmem:[%s2961 + $0x98] sm:$0xff] %v3000
                  %v3002 = vld [vmem:[%s2960 + $0xa0] sm:$0xff]
                  %3003 = vst [vmem:[%s2961 + $0xa0] sm:$0xff] %v3002
                  %v3004 = vld [vmem:[%s2960 + $0xa8] sm:$0xff]
                  %3005 = vst [vmem:[%s2961 + $0xa8] sm:$0xff] %v3004
                  %v3006 = vld [vmem:[%s2960 + $0xb0] sm:$0xff]
                  %3007 = vst [vmem:[%s2961 + $0xb0] sm:$0xff] %v3006
                  %v3008 = vld [vmem:[%s2960 + $0xb8] sm:$0xff]
                  %3009 = vst [vmem:[%s2961 + $0xb8] sm:$0xff] %v3008
                  %v3010 = vld [vmem:[%s2960 + $0xc0] sm:$0xff]
                  %3011 = vst [vmem:[%s2961 + $0xc0] sm:$0xff] %v3010
                  %v3012 = vld [vmem:[%s2960 + $0xc8] sm:$0xff]
                  %3013 = vst [vmem:[%s2961 + $0xc8] sm:$0xff] %v3012
                  %v3014 = vld [vmem:[%s2960 + $0xd0] sm:$0xff]
                  %3015 = vst [vmem:[%s2961 + $0xd0] sm:$0xff] %v3014
                  %v3016 = vld [vmem:[%s2960 + $0xd8] sm:$0xff]
                  %3017 = vst [vmem:[%s2961 + $0xd8] sm:$0xff] %v3016
                  %v3018 = vld [vmem:[%s2960 + $0xe0] sm:$0xff]
                  %3019 = vst [vmem:[%s2961 + $0xe0] sm:$0xff] %v3018
                  %v3020 = vld [vmem:[%s2960 + $0xe8] sm:$0xff]
                  %3021 = vst [vmem:[%s2961 + $0xe8] sm:$0xff] %v3020
                  %v3022 = vld [vmem:[%s2960 + $0xf0] sm:$0xff]
                  %3023 = vst [vmem:[%s2961 + $0xf0] sm:$0xff] %v3022
                  %v3024 = vld [vmem:[%s2960 + $0xf8] sm:$0xff]
                  %3025 = vst [vmem:[%s2961 + $0xf8] sm:$0xff] %v3024
                  %v3026 = vld [vmem:[%s2960 + $0x100] sm:$0xff]
                  %3027 = vst [vmem:[%s2961 + $0x100] sm:$0xff] %v3026
                  %v3028 = vld [vmem:[%s2960 + $0x108] sm:$0xff]
                  %3029 = vst [vmem:[%s2961 + $0x108] sm:$0xff] %v3028
                  %v3030 = vld [vmem:[%s2960 + $0x110] sm:$0xff]
                  %3031 = vst [vmem:[%s2961 + $0x110] sm:$0xff] %v3030
                  %v3032 = vld [vmem:[%s2960 + $0x118] sm:$0xff]
                  %3033 = vst [vmem:[%s2961 + $0x118] sm:$0xff] %v3032
                  %v3034 = vld [vmem:[%s2960 + $0x120] sm:$0xff]
                  %3035 = vst [vmem:[%s2961 + $0x120] sm:$0xff] %v3034
                  %v3036 = vld [vmem:[%s2960 + $0x128] sm:$0xff]
                  %3037 = vst [vmem:[%s2961 + $0x128] sm:$0xff] %v3036
                  %v3038 = vld [vmem:[%s2960 + $0x130] sm:$0xff]
                  %3039 = vst [vmem:[%s2961 + $0x130] sm:$0xff] %v3038
                  %v3040 = vld [vmem:[%s2960 + $0x138] sm:$0xff]
                  %3041 = vst [vmem:[%s2961 + $0x138] sm:$0xff] %v3040
                  %v3042 = vld [vmem:[%s2960 + $0x140] sm:$0xff]
                  %3043 = vst [vmem:[%s2961 + $0x140] sm:$0xff] %v3042
                  %v3044 = vld [vmem:[%s2960 + $0x148] sm:$0xff]
                  %3045 = vst [vmem:[%s2961 + $0x148] sm:$0xff] %v3044
                  %v3046 = vld [vmem:[%s2960 + $0x150] sm:$0xff]
                  %3047 = vst [vmem:[%s2961 + $0x150] sm:$0xff] %v3046
                  %v3048 = vld [vmem:[%s2960 + $0x158] sm:$0xff]
                  %3049 = vst [vmem:[%s2961 + $0x158] sm:$0xff] %v3048
                  %v3050 = vld [vmem:[%s2960 + $0x160] sm:$0xff]
                  %3051 = vst [vmem:[%s2961 + $0x160] sm:$0xff] %v3050
                  %v3052 = vld [vmem:[%s2960 + $0x168] sm:$0xff]
                  %3053 = vst [vmem:[%s2961 + $0x168] sm:$0xff] %v3052
                  %v3054 = vld [vmem:[%s2960 + $0x170] sm:$0xff]
                  %3055 = vst [vmem:[%s2961 + $0x170] sm:$0xff] %v3054
                  %v3056 = vld [vmem:[%s2960 + $0x178] sm:$0xff]
                  %3057 = vst [vmem:[%s2961 + $0x178] sm:$0xff] %v3056
                  %v3058 = vld [vmem:[%s2960 + $0x180] sm:$0xff]
                  %3059 = vst [vmem:[%s2961 + $0x180] sm:$0xff] %v3058
                  %v3060 = vld [vmem:[%s2960 + $0x188] sm:$0xff]
                  %3061 = vst [vmem:[%s2961 + $0x188] sm:$0xff] %v3060
                  %v3062 = vld [vmem:[%s2960 + $0x190] sm:$0xff]
                  %3063 = vst [vmem:[%s2961 + $0x190] sm:$0xff] %v3062
                  %v3064 = vld [vmem:[%s2960 + $0x198] sm:$0xff]
                  %3065 = vst [vmem:[%s2961 + $0x198] sm:$0xff] %v3064
                  %v3066 = vld [vmem:[%s2960 + $0x1a0] sm:$0xff]
                  %3067 = vst [vmem:[%s2961 + $0x1a0] sm:$0xff] %v3066
                  %v3068 = vld [vmem:[%s2960 + $0x1a8] sm:$0xff]
                  %3069 = vst [vmem:[%s2961 + $0x1a8] sm:$0xff] %v3068
                  %v3070 = vld [vmem:[%s2960 + $0x1b0] sm:$0xff]
                  %3071 = vst [vmem:[%s2961 + $0x1b0] sm:$0xff] %v3070
                  %v3072 = vld [vmem:[%s2960 + $0x1b8] sm:$0xff]
                  %3073 = vst [vmem:[%s2961 + $0x1b8] sm:$0xff] %v3072
                  %v3074 = vld [vmem:[%s2960 + $0x1c0] sm:$0xff]
                  %3075 = vst [vmem:[%s2961 + $0x1c0] sm:$0xff] %v3074
                  %v3076 = vld [vmem:[%s2960 + $0x1c8] sm:$0xff]
                  %3077 = vst [vmem:[%s2961 + $0x1c8] sm:$0xff] %v3076
                  %v3078 = vld [vmem:[%s2960 + $0x1d0] sm:$0xff]
                  %3079 = vst [vmem:[%s2961 + $0x1d0] sm:$0xff] %v3078
                  %v3080 = vld [vmem:[%s2960 + $0x1d8] sm:$0xff]
                  %3081 = vst [vmem:[%s2961 + $0x1d8] sm:$0xff] %v3080
                  %v3082 = vld [vmem:[%s2960 + $0x1e0] sm:$0xff]
                  %3083 = vst [vmem:[%s2961 + $0x1e0] sm:$0xff] %v3082
                  %v3084 = vld [vmem:[%s2960 + $0x1e8] sm:$0xff]
                  %3085 = vst [vmem:[%s2961 + $0x1e8] sm:$0xff] %v3084
                  %v3086 = vld [vmem:[%s2960 + $0x1f0] sm:$0xff]
                  %3087 = vst [vmem:[%s2961 + $0x1f0] sm:$0xff] %v3086
                  %v3088 = vld [vmem:[%s2960 + $0x1f8] sm:$0xff]
                  %3089 = vst [vmem:[%s2961 + $0x1f8] sm:$0xff] %v3088
                  %s3090 = sadd.s32 1, %s2959
                  %p3091 = scmp.ge.s32.totalorder %s3090, %s2950
                  %s3092 = scalar_select %p3091, 0, %s3090
                  %s3093 = smul.u32 %s3092, 512
                  %s3094 = smul.u32 %s3092, 512
                  %s3095 = scalar_lea.vmem %s2910, %s3093 [#allocation4]
                  %s3096 = scalar_lea.vmem %s2921, %s3094
                $region88: #{region_reconstruction.1} parent=82 // loop_footer
                  %s2956 = sadd.s32 %s2954, 1
                $region89: #{region_reconstruction.1} parent=82 // loop_footer_branch
                  %2953 = sbr.rel target = $region85
                $region90: #{region_reconstruction.1} parent=82 // loop_exit
                  _
                %s3097 = sshrl.u32 %s2949, 6
                %s3098 = sand.u32 %s2949, 63
                %s3099 = smul.u32 %s3097, 64
                %s3100 = smul.u32 128, %s3099
                %s3101 = sshra.s32 %s3100, 4
                %s3102 = scalar_lea.vmem %s2910, %s3101 [#allocation4]
                %s3103 = smul.u32 128, %s3099
                %s3104 = sshra.s32 %s3103, 4
                %s3105 = scalar_lea.vmem %s2921, %s3104
                // While loop
                $region91: #{region_reconstruction.1} parent=82 // loop_pre_header
                  _
                $region92: #{region_reconstruction.1} parent=82 // loop_header
                  %s3109 = sphi 0, %s3111
                  %p3110 = scmp.ge.s32.totalorder %s3109, %s3098
                  %s3114 = sphi 0, %s3121
                  %s3115 = sphi %s3102, %s3124
                  %s3116 = sphi %s3105, %s3125
                $region93: #{region_reconstruction.1} parent=82 // loop_header_branch
                  %3113 = sbr.rel (%p3110) target = $region97
                $region94: #{region_reconstruction.1} parent=82 // loop_body
                  %v3117 = vld [vmem:[%s3115] sm:$0xff]
                  %3118 = vst [vmem:[%s3116] sm:$0xff] %v3117
                  %s3119 = sadd.s32 1, %s3114
                  %p3120 = scmp.ge.s32.totalorder %s3119, %s3098
                  %s3121 = scalar_select %p3120, 0, %s3119
                  %s3122 = smul.u32 %s3121, 8
                  %s3123 = smul.u32 %s3121, 8
                  %s3124 = scalar_lea.vmem %s3102, %s3122 [#allocation4]
                  %s3125 = scalar_lea.vmem %s3105, %s3123
                $region95: #{region_reconstruction.1} parent=82 // loop_footer
                  %s3111 = sadd.s32 %s3109, 1
                $region96: #{region_reconstruction.1} parent=82 // loop_footer_branch
                  %3108 = sbr.rel target = $region92
                $region97: #{region_reconstruction.1} parent=82 // loop_exit
                  _
              $region83: #{region_reconstruction.1} parent=67 // pred_fallthru
                _
              %p3126 = pneg %p2945
              // Predicated region
              $region98: #{region_reconstruction.1} parent=67 // pred_check
                _
              $region99: #{region_reconstruction.1} parent=67 // pred_check_branch
                %3128 = sbr.rel (%p2945) target = $region101
              $region100: #{region_reconstruction.1} parent=67 // pred_region
                %s3129 = sand.u32 %s2922, 7
                %s3130 = ssub.s32 %s2922, %s3129
                %s3131 = scalar_lea.vmem %s2910, %s3130 [#allocation4]
                %s3132 = ssub.s32 %s2922, %s3129
                %s3133 = scalar_lea.vmem %s2921, %s3132
                %s3134 = sshrl.u32 %s2922, 3
                %s3135 = sshrl.u32 %s3134, 6
                // While loop
                $region102: #{region_reconstruction.1} parent=100 // loop_pre_header
                  _
                $region103: #{region_reconstruction.1} parent=100 // loop_header
                  %s3139 = sphi 0, %s3141
                  %p3140 = scmp.ge.s32.totalorder %s3139, %s3135
                  %s3144 = sphi 0, %s3277
                  %s3145 = sphi %s2910, %s3280
                  %s3146 = sphi %s2921, %s3281
                $region104: #{region_reconstruction.1} parent=100 // loop_header_branch
                  %3143 = sbr.rel (%p3140) target = $region108
                $region105: #{region_reconstruction.1} parent=100 // loop_body
                  %v3147 = vld [vmem:[%s3145] sm:$0xff]
                  %3148 = vst [vmem:[%s3146] sm:$0xff] %v3147
                  %v3149 = vld [vmem:[%s3145 + $0x8] sm:$0xff]
                  %3150 = vst [vmem:[%s3146 + $0x8] sm:$0xff] %v3149
                  %v3151 = vld [vmem:[%s3145 + $0x10] sm:$0xff]
                  %3152 = vst [vmem:[%s3146 + $0x10] sm:$0xff] %v3151
                  %v3153 = vld [vmem:[%s3145 + $0x18] sm:$0xff]
                  %3154 = vst [vmem:[%s3146 + $0x18] sm:$0xff] %v3153
                  %v3155 = vld [vmem:[%s3145 + $0x20] sm:$0xff]
                  %3156 = vst [vmem:[%s3146 + $0x20] sm:$0xff] %v3155
                  %v3157 = vld [vmem:[%s3145 + $0x28] sm:$0xff]
                  %3158 = vst [vmem:[%s3146 + $0x28] sm:$0xff] %v3157
                  %v3159 = vld [vmem:[%s3145 + $0x30] sm:$0xff]
                  %3160 = vst [vmem:[%s3146 + $0x30] sm:$0xff] %v3159
                  %v3161 = vld [vmem:[%s3145 + $0x38] sm:$0xff]
                  %3162 = vst [vmem:[%s3146 + $0x38] sm:$0xff] %v3161
                  %v3163 = vld [vmem:[%s3145 + $0x40] sm:$0xff]
                  %3164 = vst [vmem:[%s3146 + $0x40] sm:$0xff] %v3163
                  %v3165 = vld [vmem:[%s3145 + $0x48] sm:$0xff]
                  %3166 = vst [vmem:[%s3146 + $0x48] sm:$0xff] %v3165
                  %v3167 = vld [vmem:[%s3145 + $0x50] sm:$0xff]
                  %3168 = vst [vmem:[%s3146 + $0x50] sm:$0xff] %v3167
                  %v3169 = vld [vmem:[%s3145 + $0x58] sm:$0xff]
                  %3170 = vst [vmem:[%s3146 + $0x58] sm:$0xff] %v3169
                  %v3171 = vld [vmem:[%s3145 + $0x60] sm:$0xff]
                  %3172 = vst [vmem:[%s3146 + $0x60] sm:$0xff] %v3171
                  %v3173 = vld [vmem:[%s3145 + $0x68] sm:$0xff]
                  %3174 = vst [vmem:[%s3146 + $0x68] sm:$0xff] %v3173
                  %v3175 = vld [vmem:[%s3145 + $0x70] sm:$0xff]
                  %3176 = vst [vmem:[%s3146 + $0x70] sm:$0xff] %v3175
                  %v3177 = vld [vmem:[%s3145 + $0x78] sm:$0xff]
                  %3178 = vst [vmem:[%s3146 + $0x78] sm:$0xff] %v3177
                  %v3179 = vld [vmem:[%s3145 + $0x80] sm:$0xff]
                  %3180 = vst [vmem:[%s3146 + $0x80] sm:$0xff] %v3179
                  %v3181 = vld [vmem:[%s3145 + $0x88] sm:$0xff]
                  %3182 = vst [vmem:[%s3146 + $0x88] sm:$0xff] %v3181
                  %v3183 = vld [vmem:[%s3145 + $0x90] sm:$0xff]
                  %3184 = vst [vmem:[%s3146 + $0x90] sm:$0xff] %v3183
                  %v3185 = vld [vmem:[%s3145 + $0x98] sm:$0xff]
                  %3186 = vst [vmem:[%s3146 + $0x98] sm:$0xff] %v3185
                  %v3187 = vld [vmem:[%s3145 + $0xa0] sm:$0xff]
                  %3188 = vst [vmem:[%s3146 + $0xa0] sm:$0xff] %v3187
                  %v3189 = vld [vmem:[%s3145 + $0xa8] sm:$0xff]
                  %3190 = vst [vmem:[%s3146 + $0xa8] sm:$0xff] %v3189
                  %v3191 = vld [vmem:[%s3145 + $0xb0] sm:$0xff]
                  %3192 = vst [vmem:[%s3146 + $0xb0] sm:$0xff] %v3191
                  %v3193 = vld [vmem:[%s3145 + $0xb8] sm:$0xff]
                  %3194 = vst [vmem:[%s3146 + $0xb8] sm:$0xff] %v3193
                  %v3195 = vld [vmem:[%s3145 + $0xc0] sm:$0xff]
                  %3196 = vst [vmem:[%s3146 + $0xc0] sm:$0xff] %v3195
                  %v3197 = vld [vmem:[%s3145 + $0xc8] sm:$0xff]
                  %3198 = vst [vmem:[%s3146 + $0xc8] sm:$0xff] %v3197
                  %v3199 = vld [vmem:[%s3145 + $0xd0] sm:$0xff]
                  %3200 = vst [vmem:[%s3146 + $0xd0] sm:$0xff] %v3199
                  %v3201 = vld [vmem:[%s3145 + $0xd8] sm:$0xff]
                  %3202 = vst [vmem:[%s3146 + $0xd8] sm:$0xff] %v3201
                  %v3203 = vld [vmem:[%s3145 + $0xe0] sm:$0xff]
                  %3204 = vst [vmem:[%s3146 + $0xe0] sm:$0xff] %v3203
                  %v3205 = vld [vmem:[%s3145 + $0xe8] sm:$0xff]
                  %3206 = vst [vmem:[%s3146 + $0xe8] sm:$0xff] %v3205
                  %v3207 = vld [vmem:[%s3145 + $0xf0] sm:$0xff]
                  %3208 = vst [vmem:[%s3146 + $0xf0] sm:$0xff] %v3207
                  %v3209 = vld [vmem:[%s3145 + $0xf8] sm:$0xff]
                  %3210 = vst [vmem:[%s3146 + $0xf8] sm:$0xff] %v3209
                  %v3211 = vld [vmem:[%s3145 + $0x100] sm:$0xff]
                  %3212 = vst [vmem:[%s3146 + $0x100] sm:$0xff] %v3211
                  %v3213 = vld [vmem:[%s3145 + $0x108] sm:$0xff]
                  %3214 = vst [vmem:[%s3146 + $0x108] sm:$0xff] %v3213
                  %v3215 = vld [vmem:[%s3145 + $0x110] sm:$0xff]
                  %3216 = vst [vmem:[%s3146 + $0x110] sm:$0xff] %v3215
                  %v3217 = vld [vmem:[%s3145 + $0x118] sm:$0xff]
                  %3218 = vst [vmem:[%s3146 + $0x118] sm:$0xff] %v3217
                  %v3219 = vld [vmem:[%s3145 + $0x120] sm:$0xff]
                  %3220 = vst [vmem:[%s3146 + $0x120] sm:$0xff] %v3219
                  %v3221 = vld [vmem:[%s3145 + $0x128] sm:$0xff]
                  %3222 = vst [vmem:[%s3146 + $0x128] sm:$0xff] %v3221
                  %v3223 = vld [vmem:[%s3145 + $0x130] sm:$0xff]
                  %3224 = vst [vmem:[%s3146 + $0x130] sm:$0xff] %v3223
                  %v3225 = vld [vmem:[%s3145 + $0x138] sm:$0xff]
                  %3226 = vst [vmem:[%s3146 + $0x138] sm:$0xff] %v3225
                  %v3227 = vld [vmem:[%s3145 + $0x140] sm:$0xff]
                  %3228 = vst [vmem:[%s3146 + $0x140] sm:$0xff] %v3227
                  %v3229 = vld [vmem:[%s3145 + $0x148] sm:$0xff]
                  %3230 = vst [vmem:[%s3146 + $0x148] sm:$0xff] %v3229
                  %v3231 = vld [vmem:[%s3145 + $0x150] sm:$0xff]
                  %3232 = vst [vmem:[%s3146 + $0x150] sm:$0xff] %v3231
                  %v3233 = vld [vmem:[%s3145 + $0x158] sm:$0xff]
                  %3234 = vst [vmem:[%s3146 + $0x158] sm:$0xff] %v3233
                  %v3235 = vld [vmem:[%s3145 + $0x160] sm:$0xff]
                  %3236 = vst [vmem:[%s3146 + $0x160] sm:$0xff] %v3235
                  %v3237 = vld [vmem:[%s3145 + $0x168] sm:$0xff]
                  %3238 = vst [vmem:[%s3146 + $0x168] sm:$0xff] %v3237
                  %v3239 = vld [vmem:[%s3145 + $0x170] sm:$0xff]
                  %3240 = vst [vmem:[%s3146 + $0x170] sm:$0xff] %v3239
                  %v3241 = vld [vmem:[%s3145 + $0x178] sm:$0xff]
                  %3242 = vst [vmem:[%s3146 + $0x178] sm:$0xff] %v3241
                  %v3243 = vld [vmem:[%s3145 + $0x180] sm:$0xff]
                  %3244 = vst [vmem:[%s3146 + $0x180] sm:$0xff] %v3243
                  %v3245 = vld [vmem:[%s3145 + $0x188] sm:$0xff]
                  %3246 = vst [vmem:[%s3146 + $0x188] sm:$0xff] %v3245
                  %v3247 = vld [vmem:[%s3145 + $0x190] sm:$0xff]
                  %3248 = vst [vmem:[%s3146 + $0x190] sm:$0xff] %v3247
                  %v3249 = vld [vmem:[%s3145 + $0x198] sm:$0xff]
                  %3250 = vst [vmem:[%s3146 + $0x198] sm:$0xff] %v3249
                  %v3251 = vld [vmem:[%s3145 + $0x1a0] sm:$0xff]
                  %3252 = vst [vmem:[%s3146 + $0x1a0] sm:$0xff] %v3251
                  %v3253 = vld [vmem:[%s3145 + $0x1a8] sm:$0xff]
                  %3254 = vst [vmem:[%s3146 + $0x1a8] sm:$0xff] %v3253
                  %v3255 = vld [vmem:[%s3145 + $0x1b0] sm:$0xff]
                  %3256 = vst [vmem:[%s3146 + $0x1b0] sm:$0xff] %v3255
                  %v3257 = vld [vmem:[%s3145 + $0x1b8] sm:$0xff]
                  %3258 = vst [vmem:[%s3146 + $0x1b8] sm:$0xff] %v3257
                  %v3259 = vld [vmem:[%s3145 + $0x1c0] sm:$0xff]
                  %3260 = vst [vmem:[%s3146 + $0x1c0] sm:$0xff] %v3259
                  %v3261 = vld [vmem:[%s3145 + $0x1c8] sm:$0xff]
                  %3262 = vst [vmem:[%s3146 + $0x1c8] sm:$0xff] %v3261
                  %v3263 = vld [vmem:[%s3145 + $0x1d0] sm:$0xff]
                  %3264 = vst [vmem:[%s3146 + $0x1d0] sm:$0xff] %v3263
                  %v3265 = vld [vmem:[%s3145 + $0x1d8] sm:$0xff]
                  %3266 = vst [vmem:[%s3146 + $0x1d8] sm:$0xff] %v3265
                  %v3267 = vld [vmem:[%s3145 + $0x1e0] sm:$0xff]
                  %3268 = vst [vmem:[%s3146 + $0x1e0] sm:$0xff] %v3267
                  %v3269 = vld [vmem:[%s3145 + $0x1e8] sm:$0xff]
                  %3270 = vst [vmem:[%s3146 + $0x1e8] sm:$0xff] %v3269
                  %v3271 = vld [vmem:[%s3145 + $0x1f0] sm:$0xff]
                  %3272 = vst [vmem:[%s3146 + $0x1f0] sm:$0xff] %v3271
                  %v3273 = vld [vmem:[%s3145 + $0x1f8] sm:$0xff]
                  %3274 = vst [vmem:[%s3146 + $0x1f8] sm:$0xff] %v3273
                  %s3275 = sadd.s32 1, %s3144
                  %p3276 = scmp.ge.s32.totalorder %s3275, %s3135
                  %s3277 = scalar_select %p3276, 0, %s3275
                  %s3278 = smul.u32 %s3277, 512
                  %s3279 = smul.u32 %s3277, 512
                  %s3280 = scalar_lea.vmem %s2910, %s3278 [#allocation4]
                  %s3281 = scalar_lea.vmem %s2921, %s3279
                $region106: #{region_reconstruction.1} parent=100 // loop_footer
                  %s3141 = sadd.s32 %s3139, 1
                $region107: #{region_reconstruction.1} parent=100 // loop_footer_branch
                  %3138 = sbr.rel target = $region103
                $region108: #{region_reconstruction.1} parent=100 // loop_exit
                  _
                %s3282 = sshrl.u32 %s3134, 6
                %s3283 = sand.u32 %s3134, 63
                %s3284 = smul.u32 %s3282, 64
                %s3285 = smul.u32 128, %s3284
                %s3286 = sshra.s32 %s3285, 4
                %s3287 = scalar_lea.vmem %s2910, %s3286 [#allocation4]
                %s3288 = smul.u32 128, %s3284
                %s3289 = sshra.s32 %s3288, 4
                %s3290 = scalar_lea.vmem %s2921, %s3289
                // While loop
                $region109: #{region_reconstruction.1} parent=100 // loop_pre_header
                  _
                $region110: #{region_reconstruction.1} parent=100 // loop_header
                  %s3294 = sphi 0, %s3296
                  %p3295 = scmp.ge.s32.totalorder %s3294, %s3283
                  %s3299 = sphi 0, %s3306
                  %s3300 = sphi %s3287, %s3309
                  %s3301 = sphi %s3290, %s3310
                $region111: #{region_reconstruction.1} parent=100 // loop_header_branch
                  %3298 = sbr.rel (%p3295) target = $region115
                $region112: #{region_reconstruction.1} parent=100 // loop_body
                  %v3302 = vld [vmem:[%s3300] sm:$0xff]
                  %3303 = vst [vmem:[%s3301] sm:$0xff] %v3302
                  %s3304 = sadd.s32 1, %s3299
                  %p3305 = scmp.ge.s32.totalorder %s3304, %s3283
                  %s3306 = scalar_select %p3305, 0, %s3304
                  %s3307 = smul.u32 %s3306, 8
                  %s3308 = smul.u32 %s3306, 8
                  %s3309 = scalar_lea.vmem %s3287, %s3307 [#allocation4]
                  %s3310 = scalar_lea.vmem %s3290, %s3308
                $region113: #{region_reconstruction.1} parent=100 // loop_footer
                  %s3296 = sadd.s32 %s3294, 1
                $region114: #{region_reconstruction.1} parent=100 // loop_footer_branch
                  %3293 = sbr.rel target = $region110
                $region115: #{region_reconstruction.1} parent=100 // loop_exit
                  _
                %s3311 = sshllo.u32 0, %s3129
                loop: start=0, step=1, limit=1
                $region116: #{region_reconstruction.1} parent=100 // loop_pre_header
                  _
                $region117: #{region_reconstruction.1} parent=100 // loop_header
                  %s3313 = sphi 0, %s3317
                  %p3314 = scmp.ge.s32.totalorder %s3313, 1
                  %s3318 = sphi %s3131, %s3131
                  %s3319 = sphi %s3133, %s3133
                $region118: #{region_reconstruction.1} parent=100 // loop_header_branch
                  %3316 = sbr.rel (%p3314) target = $region122
                $region119: #{region_reconstruction.1} parent=100 // loop_body
                  %v3320 = vld [vmem:[%s3318] sm:%s3311]
                  %3321 = vst [vmem:[%s3319] sm:%s3311] %v3320
                $region120: #{region_reconstruction.1} parent=100 // loop_footer
                  %s3317 = sadd.s32 1, %s3313
                $region121: #{region_reconstruction.1} parent=100 // loop_footer_branch
                  %3312 = sbr.rel target = $region117
                $region122: #{region_reconstruction.1} parent=100 // loop_exit
                  _
              $region101: #{region_reconstruction.1} parent=67 // pred_fallthru
                _
            $region68: #{region_reconstruction.1} parent=63 // pred_fallthru
              _
            // Predicated region
            $region69: #{region_reconstruction.1} parent=63 // pred_check
              %p2930 = pneg %p2926
            $region70: #{region_reconstruction.1} parent=63 // pred_check_branch
              %2932 = sbr.rel (%p2930) target = $region72
            $region71: #{region_reconstruction.1} parent=63 // pred_region
              %s2933 = sshllo.u32 0, %s2922
              loop: start=0, step=1, limit=1
              $region73: #{region_reconstruction.1} parent=71 // loop_pre_header
                _
              $region74: #{region_reconstruction.1} parent=71 // loop_header
                %s2935 = sphi 0, %s2939
                %p2936 = scmp.ge.s32.totalorder %s2935, 1
                %s2940 = sphi %s2910, %s2910
                %s2941 = sphi %s2921, %s2921
              $region75: #{region_reconstruction.1} parent=71 // loop_header_branch
                %2938 = sbr.rel (%p2936) target = $region79
              $region76: #{region_reconstruction.1} parent=71 // loop_body
                %v2942 = vld [vmem:[%s2940] sm:%s2933]
                %2943 = vst [vmem:[%s2941] sm:%s2933] %v2942
              $region77: #{region_reconstruction.1} parent=71 // loop_footer
                %s2939 = sadd.s32 1, %s2935
              $region78: #{region_reconstruction.1} parent=71 // loop_footer_branch
                %2934 = sbr.rel target = $region74
              $region79: #{region_reconstruction.1} parent=71 // loop_exit
                _
            $region72: #{region_reconstruction.1} parent=63 // pred_fallthru
              _
          $region64: #{region_reconstruction.1} parent=59 // pred_fallthru
            _
          %3322 = vnop
        $region60: #{region_reconstruction.1} parent=51 // pred_fallthru
          _
      $region52: #{region_reconstruction.1} parent=5 // pred_fallthru
        _
      %p3323 = scmp.le.s32.totalorder 2, %s17
      // Predicated region
      $region123: #{region_reconstruction.1} parent=5 // pred_check
        %p3324 = pneg %p3323
      $region124: #{region_reconstruction.1} parent=5 // pred_check_branch
        %3326 = sbr.rel (%p3324) target = $region126
      $region125: #{region_reconstruction.1} parent=5 // pred_region
        %s3327 = ssub.s32 %s17, 2
        // Predicated region
        $region127: #{region_reconstruction.1} parent=125 // pred_check
          %p3328 = pneg %p235
        $region128: #{region_reconstruction.1} parent=125 // pred_check_branch
          %3330 = sbr.rel (%p3328) target = $region130
        $region129: #{region_reconstruction.1} parent=125 // pred_region
          %s3331 = sand.u32 %s220, 1
          %s3332 = sand.u32 %s220, 1
          %s3333 = smul.addr %s3332, 32
          %s3334 = scalar_lea.vmem [#allocation4], %s3333
        $region130: #{region_reconstruction.1} parent=125 // pred_fallthru
          _
      $region126: #{region_reconstruction.1} parent=5 // pred_fallthru
        _
    $region6: #{region_reconstruction.1} parent=1 // loop_footer
      %s21 = sadd.s32 1, %s17
    $region7: #{region_reconstruction.1} parent=1 // loop_footer_branch
      %16 = sbr.rel target = $region3
    $region8: #{region_reconstruction.1} parent=1 // loop_exit
      _
    %3335 = vsyncpa [#allocation3], 1
    %s3336 = scalar_lea.sflag [#allocation3], 1
    %3337 = vsyncpa %s3336, 1

</llo_original>
